<compile_context>
chip_gen: v5e
topology: v5e:2x2
jax: 0.10.0
libtpu: 0.0.40
codegen_flags: <defaults>
</compile_context>

<pallas_src>
import numpy as np
import jax
import jax.numpy as jnp
from jax.experimental import pallas as pl
from jax.experimental.pallas import tpu as pltpu

EPS = 1e-5  # nn.BatchNorm2d default eps


# ----------------------------------------------------------------------------
# Fused ConvBlock kernel: one (batch, row-tile) per grid step.
# ----------------------------------------------------------------------------
def _conv_block_kernel(xm_ref, xt_ref, xb_ref,
                       s1_ref, c1_ref, w1_ref, b1_ref,
                       w2_ref, b2_ref, w3_ref, b3_ref,
                       o_ref):
    TH = xm_ref.shape[1]
    W = xm_ref.shape[2]
    Cin = xm_ref.shape[3]
    Cmid = w1_ref.shape[1]
    Cout = w3_ref.shape[1]
    cdt = w1_ref.dtype                      # MXU operand dtype (f32 or bf16)

    t = pl.program_id(1)
    nt = pl.num_programs(1)

    # ---- stage 1: BN1 + ReLU + 1x1 conv (bn2 pre-folded into w1/b1) --------
    # Run separately on the main tile and the two 1-row halos so only the
    # Cmid-wide activation (not the Cin input) gets concatenated.
    def bn_relu_conv1(xp):                  # (R, W, Cin) -> (R*W, Cmid)
        r = xp.shape[0]
        a = jnp.maximum(xp.astype(jnp.float32) * s1_ref[...] + c1_ref[...], 0.0)
        y = jnp.dot(a.reshape(r * W, Cin).astype(cdt), w1_ref[...],
                    preferred_element_type=jnp.float32) + b1_ref[...]
        return jnp.maximum(y, 0.0).astype(cdt)        # = relu(bn2(conv1(...)))

    a2_mid = bn_relu_conv1(xm_ref[0])                               # (TH*W, Cmid)
    # Halo rows implement the 3x3 conv's H zero-padding, which applies AFTER
    # relu(bn2(.)) -> zero them at the true image borders.
    a2_top = bn_relu_conv1(xt_ref[0]) * (t > 0).astype(cdt)         # (W, Cmid)
    a2_bot = bn_relu_conv1(xb_ref[0]) * (t < nt - 1).astype(cdt)    # (W, Cmid)
    a2 = jnp.concatenate([a2_top, a2_mid, a2_bot], axis=0)          # ((TH+2)*W, Cmid)

    # ---- stage 2: 3x3 conv, stride 1, pad 1 (bn3 pre-folded into w2/b2) ----
    # Column (W) shifts via XLU sublane rolls on the flattened slab; the one
    # wrapped column is zeroed with a select (this also kills the cross-row
    # leakage at w==0 / w==W-1).  Taps packed along channels -> each dy is a
    # single wide-K matmul.
    R2 = (TH + 2) * W
    colw = jax.lax.broadcasted_iota(jnp.int32, (R2, 1), 0) % W
    zero = jnp.zeros((), cdt)
    left = jnp.where(colw == 0, zero, pltpu.roll(a2, shift=1, axis=0))
    right = jnp.where(colw == W - 1, zero, pltpu.roll(a2, shift=R2 - 1, axis=0))
    taps = jnp.concatenate([left, a2, right], axis=-1)              # (R2, 3*Cmid)

    acc = jnp.zeros((TH * W, Cmid), jnp.float32)
    for dy in range(3):                                             # static unroll
        acc = acc + jnp.dot(taps[dy * W:(dy + TH) * W], w2_ref[dy],
                            preferred_element_type=jnp.float32)
    a3 = jnp.maximum(acc + b2_ref[...], 0.0).astype(cdt)            # relu(bn3(.))

    # ---- stage 3: 1x1 conv --------------------------------------------------
    out = jnp.dot(a3, w3_ref[...], preferred_element_type=jnp.float32) + b3_ref[...]
    o_ref[0] = out.reshape(TH, W, Cout).astype(o_ref.dtype)


# ----------------------------------------------------------------------------
# Host-side wrappers (BN folding + BlockSpecs).
# ----------------------------------------------------------------------------
def _fold_bn(gamma, beta, mean, var):
    scale = gamma / jnp.sqrt(var + EPS)
    bias = beta - mean * scale
    return scale.reshape(1, -1), bias.reshape(1, -1)


def _pick_row_tile(H, th_tile):
    # Largest divisor of H that is <= th_tile: never falls back to a
    # whole-image tile for large H (v7x has only 64 MiB of VMEM).
    # TODO(synk): a pl.cdiv grid + masked last tile would allow a fixed TH
    #             even when H has no convenient divisor.
    th = max(1, min(th_tile, H))
    while H % th != 0:
        th -= 1
    return th


def conv_block_nhwc(x_nhwc, params, *, th_tile=32, compute_dtype=jnp.float32):
    """Fused ConvBlock on NHWC input (no layout transposes)."""
    N, H, W, Cin = x_nhwc.shape
    p1, p2, p3 = params["cbr1"], params["cbr2"], params["cbr3"]
    Cmid = p1["w"].shape[1]
    Cout = p3["w"].shape[1]

    TH = _pick_row_tile(H, th_tile)
    nt = H // TH

    # Eval-mode BN folded to per-channel scale/bias; bn2 and bn3 further folded
    # into the preceding conv's weights/bias (the ReLU prevents folding bn1).
    s1, c1 = _fold_bn(*p1["bn"])
    s2, c2 = _fold_bn(*p2["bn"])
    s3, c3 = _fold_bn(*p3["bn"])
    w1f = (p1["w"] * s2).astype(compute_dtype)                 # (Cin, Cmid)
    b1f = p1["b"].reshape(1, -1) * s2 + c2                     # (1, Cmid)
    w2f = p2["w"] * s3.reshape(1, 1, 1, -1)                    # (3,3,Cmid,Cmid) HWIO
    # Per-dy wide-K weight: K rows ordered [dx=0 | dx=1 | dx=2] x Cmid,
    # matching the in-kernel [left | center | right] channel-packed taps.
    w2w = w2f.reshape(3, 3 * Cmid, Cmid).astype(compute_dtype)
    b2f = p2["b"].reshape(1, -1) * s3 + c3                     # (1, Cmid)
    w3f = p3["w"].astype(compute_dtype)                        # (Cmid, Cout)
    b3f = p3["b"].reshape(1, -1)                               # (1, Cout)

    const = lambda n, t: (0, 0)

    out = pl.pallas_call(
        _conv_block_kernel,
        out_shape=jax.ShapeDtypeStruct((N, H, W, Cout), jnp.float32),
        grid_spec=pltpu.PrefetchScalarGridSpec(
            num_scalar_prefetch=0,
            grid=(N, nt),
            in_specs=[
                # main row tile
                pl.BlockSpec((1, TH, W, Cin), lambda n, t: (n, t, 0, 0)),
                # 1-row halo above (clamped at the image top; zeroed in-kernel)
                pl.BlockSpec((1, 1, W, Cin),
                             lambda n, t: (n, jnp.maximum(t * TH - 1, 0), 0, 0)),
                # 1-row halo below (clamped at the image bottom)
                pl.BlockSpec((1, 1, W, Cin),
                             lambda n, t: (n, jnp.minimum(t * TH + TH, H - 1), 0, 0)),
                pl.BlockSpec((1, Cin), const),                     # s1
                pl.BlockSpec((1, Cin), const),                     # c1
                pl.BlockSpec((Cin, Cmid), const),                  # w1f
                pl.BlockSpec((1, Cmid), const),                    # b1f
                pl.BlockSpec((3, 3 * Cmid, Cmid),
                             lambda n, t: (0, 0, 0)),              # w2w (wide-K)
                pl.BlockSpec((1, Cmid), const),                    # b2f
                pl.BlockSpec((Cmid, Cout), const),                 # w3
                pl.BlockSpec((1, Cout), const),                    # b3
            ],
            out_specs=pl.BlockSpec((1, TH, W, Cout), lambda n, t: (n, t, 0, 0)),
        ),
        compiler_params=pltpu.CompilerParams(
            dimension_semantics=("parallel", "parallel"),
            vmem_limit_bytes=64 * 1024 * 1024),
    )(x_nhwc, x_nhwc, x_nhwc, s1, c1, w1f, b1f, w2w, b2f, w3f, b3f)
    return out


def conv_block(x_nchw, params, *, th_tile=32, compute_dtype=jnp.float32):
    """PyTorch-layout (NCHW) entry point; transposes only at the boundary."""
    x = jnp.transpose(x_nchw, (0, 2, 3, 1))                # NCHW -> NHWC
    y = conv_block_nhwc(x, params, th_tile=th_tile, compute_dtype=compute_dtype)
    return jnp.transpose(y, (0, 3, 1, 2))                  # NHWC -> NCHW


# ----------------------------------------------------------------------------
# pure-JAX reference (eval-mode BN), used only for the correctness check
# ----------------------------------------------------------------------------
def _bn_relu_conv_ref(x, bn, w_oihw, b, padding):
    gamma, beta, mean, var = bn
    xn = (x - mean[None, :, None, None]) * jax.lax.rsqrt(var + EPS)[None, :, None, None]
    xn = gamma[None, :, None, None] * xn + beta[None, :, None, None]
    xn = jnp.maximum(xn, 0.0)
    y = jax.lax.conv_general_dilated(
        xn, w_oihw, window_strides=(1, 1),
        padding=[(padding, padding), (padding, padding)],
        dimension_numbers=("NCHW", "OIHW", "NCHW"))
    return y + b[None, :, None, None]


if __name__ == "__main__":
    key = jax.random.PRNGKey(0)
    N, Cin, H, W = 2, 4, 16, 16
    Cout = 8
    Cmid = Cout // 2

    ks = jax.random.split(key, 10)

    def bn_params(k, c):
        k1, k2, k3, k4 = jax.random.split(k, 4)
        gamma = 1.0 + 0.1 * jax.random.normal(k1, (c,), jnp.float32)
        beta = 0.1 * jax.random.normal(k2, (c,), jnp.float32)
        mean = 0.1 * jax.random.normal(k3, (c,), jnp.float32)
        var = jax.random.uniform(k4, (c,), jnp.float32, minval=0.5, maxval=1.5)
        return (gamma, beta, mean, var)

    bn1 = bn_params(ks[0], Cin)
    w1_oihw = 0.3 * jax.random.normal(ks[1], (Cmid, Cin, 1, 1), jnp.float32)
    b1 = 0.1 * jax.random.normal(ks[2], (Cmid,), jnp.float32)

    bn2 = bn_params(ks[3], Cmid)
    w2_oihw = 0.3 * jax.random.normal(ks[4], (Cmid, Cmid, 3, 3), jnp.float32)
    b2 = 0.1 * jax.random.normal(ks[5], (Cmid,), jnp.float32)

    bn3 = bn_params(ks[6], Cmid)
    w3_oihw = 0.3 * jax.random.normal(ks[7], (Cout, Cmid, 1, 1), jnp.float32)
    b3 = 0.1 * jax.random.normal(ks[8], (Cout,), jnp.float32)

    x = jax.random.normal(ks[9], (N, Cin, H, W), jnp.float32)

    params = {
        "cbr1": {"bn": bn1,
                 "w": jnp.transpose(w1_oihw[:, :, 0, 0], (1, 0)),   # (Cin, Cmid)
                 "b": b1},
        "cbr2": {"bn": bn2,
                 "w": jnp.transpose(w2_oihw, (2, 3, 1, 0)),         # (3,3,Cmid,Cmid) HWIO
                 "b": b2},
        "cbr3": {"bn": bn3,
                 "w": jnp.transpose(w3_oihw[:, :, 0, 0], (1, 0)),   # (Cmid, Cout)
                 "b": b3},
    }

    out = jax.jit(conv_block)(x, params)
    out = jax.block_until_ready(out)
    assert out.shape == (N, Cout, H, W)

    ref = _bn_relu_conv_ref(x, bn1, w1_oihw, b1, 0)
    ref = _bn_relu_conv_ref(ref, bn2, w2_oihw, b2, 1)
    ref = _bn_relu_conv_ref(ref, bn3, w3_oihw, b3, 0)
    np.testing.assert_allclose(np.asarray(out), np.asarray(ref),
                               rtol=2e-4, atol=2e-4)

    print("KERNEL_OK")
</pallas_src>

<mosaic_0001>
module attributes {stable_mosaic.version = 11 : i64} {
  func.func @_conv_block_kernel(%arg0: i32, %arg1: i32, %arg2: memref<1x16x16x4xf32, #tpu.memory_space<vmem>>, %arg3: memref<1x1x16x4xf32, #tpu.memory_space<vmem>>, %arg4: memref<1x1x16x4xf32, #tpu.memory_space<vmem>>, %arg5: memref<1x4xf32, #tpu.memory_space<vmem>>, %arg6: memref<1x4xf32, #tpu.memory_space<vmem>>, %arg7: memref<4x4xf32, #tpu.memory_space<vmem>>, %arg8: memref<1x4xf32, #tpu.memory_space<vmem>>, %arg9: memref<3x12x4xf32, #tpu.memory_space<vmem>>, %arg10: memref<1x4xf32, #tpu.memory_space<vmem>>, %arg11: memref<4x8xf32, #tpu.memory_space<vmem>>, %arg12: memref<1x8xf32, #tpu.memory_space<vmem>>, %arg13: memref<1x16x16x8xf32, #tpu.memory_space<vmem>>) attributes {dimension_semantics = [#tpu.dimension_semantics<parallel>, #tpu.dimension_semantics<parallel>], iteration_bounds = array<i64: 2, 1>, scalar_prefetch = 0 : i64, scratch_operands = 0 : i64, tpu.core_type = #tpu.core_type<tc>, window_params = [{transform_indices = @transform_0, window_bounds = array<i64: 1, 16, 16, 4>}, {transform_indices = @transform_1, window_bounds = array<i64: 1, 1, 16, 4>}, {transform_indices = @transform_2, window_bounds = array<i64: 1, 1, 16, 4>}, {pipeline_mode = #tpu.pipeline_mode<synchronous>, transform_indices = @transform_3, window_bounds = array<i64: 1, 4>}, {pipeline_mode = #tpu.pipeline_mode<synchronous>, transform_indices = @transform_4, window_bounds = array<i64: 1, 4>}, {pipeline_mode = #tpu.pipeline_mode<synchronous>, transform_indices = @transform_5, window_bounds = array<i64: 4, 4>}, {pipeline_mode = #tpu.pipeline_mode<synchronous>, transform_indices = @transform_6, window_bounds = array<i64: 1, 4>}, {pipeline_mode = #tpu.pipeline_mode<synchronous>, transform_indices = @transform_7, window_bounds = array<i64: 3, 12, 4>}, {pipeline_mode = #tpu.pipeline_mode<synchronous>, transform_indices = @transform_8, window_bounds = array<i64: 1, 4>}, {pipeline_mode = #tpu.pipeline_mode<synchronous>, transform_indices = @transform_9, window_bounds = array<i64: 4, 8>}, {pipeline_mode = #tpu.pipeline_mode<synchronous>, transform_indices = @transform_10, window_bounds = array<i64: 1, 8>}, {transform_indices = @transform_11, window_bounds = array<i64: 1, 16, 16, 8>}]} {
    %c0 = arith.constant 0 : index
    %c0_0 = arith.constant 0 : index
    %c0_1 = arith.constant 0 : index
    %c0_2 = arith.constant 0 : index
    %0 = vector.load %arg2[%c0, %c0_0, %c0_1, %c0_2] : memref<1x16x16x4xf32, #tpu.memory_space<vmem>>, vector<1x16x16x4xf32>
    %1 = vector.shape_cast %0 : vector<1x16x16x4xf32> to vector<16x16x4xf32>
    %c0_3 = arith.constant 0 : index
    %c0_4 = arith.constant 0 : index
    %2 = vector.load %arg5[%c0_3, %c0_4] : memref<1x4xf32, #tpu.memory_space<vmem>>, vector<1x4xf32>
    %3 = vector.shape_cast %2 : vector<1x4xf32> to vector<1x1x4xf32>
    %4 = vector.broadcast %3 : vector<1x1x4xf32> to vector<16x16x4xf32>
    %5 = arith.mulf %1, %4 : vector<16x16x4xf32>
    %c0_5 = arith.constant 0 : index
    %c0_6 = arith.constant 0 : index
    %6 = vector.load %arg6[%c0_5, %c0_6] : memref<1x4xf32, #tpu.memory_space<vmem>>, vector<1x4xf32>
    %7 = vector.shape_cast %6 : vector<1x4xf32> to vector<1x1x4xf32>
    %8 = vector.broadcast %7 : vector<1x1x4xf32> to vector<16x16x4xf32>
    %9 = arith.addf %5, %8 : vector<16x16x4xf32>
    %cst = arith.constant 0.000000e+00 : f32
    %10 = vector.broadcast %cst : f32 to vector<16x16x4xf32>
    %11 = arith.maximumf %9, %10 : vector<16x16x4xf32>
    %12 = vector.shape_cast %11 : vector<16x16x4xf32> to vector<256x4xf32>
    %c0_7 = arith.constant 0 : index
    %c0_8 = arith.constant 0 : index
    %13 = vector.load %arg7[%c0_7, %c0_8] : memref<4x4xf32, #tpu.memory_space<vmem>>, vector<4x4xf32>
    %cst_9 = arith.constant dense<0.000000e+00> : vector<256x4xf32>
    %14 = tpu.matmul %12, %13, %cst_9 {dimension_numbers = #tpu.dot_dimension_numbers<[1], [0], [0], [1], [0, 0, 1, 1], [], []>} : vector<256x4xf32>, vector<4x4xf32>, vector<256x4xf32> -> vector<256x4xf32>
    %c0_10 = arith.constant 0 : index
    %c0_11 = arith.constant 0 : index
    %15 = vector.load %arg8[%c0_10, %c0_11] : memref<1x4xf32, #tpu.memory_space<vmem>>, vector<1x4xf32>
    %16 = vector.broadcast %15 : vector<1x4xf32> to vector<256x4xf32>
    %17 = arith.addf %14, %16 : vector<256x4xf32>
    %cst_12 = arith.constant 0.000000e+00 : f32
    %18 = vector.broadcast %cst_12 : f32 to vector<256x4xf32>
    %19 = arith.maximumf %17, %18 : vector<256x4xf32>
    %c0_13 = arith.constant 0 : index
    %c0_14 = arith.constant 0 : index
    %c0_15 = arith.constant 0 : index
    %c0_16 = arith.constant 0 : index
    %20 = vector.load %arg3[%c0_13, %c0_14, %c0_15, %c0_16] : memref<1x1x16x4xf32, #tpu.memory_space<vmem>>, vector<1x1x16x4xf32>
    %21 = vector.shape_cast %20 : vector<1x1x16x4xf32> to vector<1x16x4xf32>
    %c0_17 = arith.constant 0 : index
    %c0_18 = arith.constant 0 : index
    %22 = vector.load %arg5[%c0_17, %c0_18] : memref<1x4xf32, #tpu.memory_space<vmem>>, vector<1x4xf32>
    %23 = vector.shape_cast %22 : vector<1x4xf32> to vector<1x1x4xf32>
    %24 = vector.broadcast %23 : vector<1x1x4xf32> to vector<1x16x4xf32>
    %25 = arith.mulf %21, %24 : vector<1x16x4xf32>
    %c0_19 = arith.constant 0 : index
    %c0_20 = arith.constant 0 : index
    %26 = vector.load %arg6[%c0_19, %c0_20] : memref<1x4xf32, #tpu.memory_space<vmem>>, vector<1x4xf32>
    %27 = vector.shape_cast %26 : vector<1x4xf32> to vector<1x1x4xf32>
    %28 = vector.broadcast %27 : vector<1x1x4xf32> to vector<1x16x4xf32>
    %29 = arith.addf %25, %28 : vector<1x16x4xf32>
    %cst_21 = arith.constant 0.000000e+00 : f32
    %30 = vector.broadcast %cst_21 : f32 to vector<1x16x4xf32>
    %31 = arith.maximumf %29, %30 : vector<1x16x4xf32>
    %32 = vector.shape_cast %31 : vector<1x16x4xf32> to vector<16x4xf32>
    %c0_22 = arith.constant 0 : index
    %c0_23 = arith.constant 0 : index
    %33 = vector.load %arg7[%c0_22, %c0_23] : memref<4x4xf32, #tpu.memory_space<vmem>>, vector<4x4xf32>
    %cst_24 = arith.constant dense<0.000000e+00> : vector<16x4xf32>
    %34 = tpu.matmul %32, %33, %cst_24 {dimension_numbers = #tpu.dot_dimension_numbers<[1], [0], [0], [1], [0, 0, 1, 1], [], []>} : vector<16x4xf32>, vector<4x4xf32>, vector<16x4xf32> -> vector<16x4xf32>
    %c0_25 = arith.constant 0 : index
    %c0_26 = arith.constant 0 : index
    %35 = vector.load %arg8[%c0_25, %c0_26] : memref<1x4xf32, #tpu.memory_space<vmem>>, vector<1x4xf32>
    %36 = vector.broadcast %35 : vector<1x4xf32> to vector<16x4xf32>
    %37 = arith.addf %34, %36 : vector<16x4xf32>
    %cst_27 = arith.constant 0.000000e+00 : f32
    %38 = vector.broadcast %cst_27 : f32 to vector<16x4xf32>
    %39 = arith.maximumf %37, %38 : vector<16x4xf32>
    %c0_i32 = arith.constant 0 : i32
    %40 = arith.cmpi sgt, %arg1, %c0_i32 : i32
    %41 = arith.extui %40 : i1 to i32
    %42 = arith.sitofp %41 : i32 to f32
    %43 = vector.broadcast %42 : f32 to vector<16x4xf32>
    %44 = arith.mulf %39, %43 : vector<16x4xf32>
    %c0_28 = arith.constant 0 : index
    %c0_29 = arith.constant 0 : index
    %c0_30 = arith.constant 0 : index
    %c0_31 = arith.constant 0 : index
    %45 = vector.load %arg4[%c0_28, %c0_29, %c0_30, %c0_31] : memref<1x1x16x4xf32, #tpu.memory_space<vmem>>, vector<1x1x16x4xf32>
    %46 = vector.shape_cast %45 : vector<1x1x16x4xf32> to vector<1x16x4xf32>
    %c0_32 = arith.constant 0 : index
    %c0_33 = arith.constant 0 : index
    %47 = vector.load %arg5[%c0_32, %c0_33] : memref<1x4xf32, #tpu.memory_space<vmem>>, vector<1x4xf32>
    %48 = vector.shape_cast %47 : vector<1x4xf32> to vector<1x1x4xf32>
    %49 = vector.broadcast %48 : vector<1x1x4xf32> to vector<1x16x4xf32>
    %50 = arith.mulf %46, %49 : vector<1x16x4xf32>
    %c0_34 = arith.constant 0 : index
    %c0_35 = arith.constant 0 : index
    %51 = vector.load %arg6[%c0_34, %c0_35] : memref<1x4xf32, #tpu.memory_space<vmem>>, vector<1x4xf32>
    %52 = vector.shape_cast %51 : vector<1x4xf32> to vector<1x1x4xf32>
    %53 = vector.broadcast %52 : vector<1x1x4xf32> to vector<1x16x4xf32>
    %54 = arith.addf %50, %53 : vector<1x16x4xf32>
    %cst_36 = arith.constant 0.000000e+00 : f32
    %55 = vector.broadcast %cst_36 : f32 to vector<1x16x4xf32>
    %56 = arith.maximumf %54, %55 : vector<1x16x4xf32>
    %57 = vector.shape_cast %56 : vector<1x16x4xf32> to vector<16x4xf32>
    %c0_37 = arith.constant 0 : index
    %c0_38 = arith.constant 0 : index
    %58 = vector.load %arg7[%c0_37, %c0_38] : memref<4x4xf32, #tpu.memory_space<vmem>>, vector<4x4xf32>
    %cst_39 = arith.constant dense<0.000000e+00> : vector<16x4xf32>
    %59 = tpu.matmul %57, %58, %cst_39 {dimension_numbers = #tpu.dot_dimension_numbers<[1], [0], [0], [1], [0, 0, 1, 1], [], []>} : vector<16x4xf32>, vector<4x4xf32>, vector<16x4xf32> -> vector<16x4xf32>
    %c0_40 = arith.constant 0 : index
    %c0_41 = arith.constant 0 : index
    %60 = vector.load %arg8[%c0_40, %c0_41] : memref<1x4xf32, #tpu.memory_space<vmem>>, vector<1x4xf32>
    %61 = vector.broadcast %60 : vector<1x4xf32> to vector<16x4xf32>
    %62 = arith.addf %59, %61 : vector<16x4xf32>
    %cst_42 = arith.constant 0.000000e+00 : f32
    %63 = vector.broadcast %cst_42 : f32 to vector<16x4xf32>
    %64 = arith.maximumf %62, %63 : vector<16x4xf32>
    %c0_i32_43 = arith.constant 0 : i32
    %65 = arith.cmpi slt, %arg1, %c0_i32_43 : i32
    %66 = arith.extui %65 : i1 to i32
    %67 = arith.sitofp %66 : i32 to f32
    %68 = vector.broadcast %67 : f32 to vector<16x4xf32>
    %69 = arith.mulf %64, %68 : vector<16x4xf32>
    %70 = tpu.concatenate %44, %19, %69 in 0 : vector<16x4xf32>, vector<256x4xf32>, vector<16x4xf32> -> vector<288x4xf32>
    %71 = tpu.iota {dimensions = array<i32: 0>} : vector<288x1xi32>
    %c16_i32 = arith.constant 16 : i32
    %c0_i32_44 = arith.constant 0 : i32
    %72 = arith.cmpi eq, %c16_i32, %c0_i32_44 : i32
    %c1_i32 = arith.constant 1 : i32
    %73 = arith.select %72, %c1_i32, %c16_i32 : i32
    %74 = vector.broadcast %73 : i32 to vector<288x1xi32>
    %75 = arith.remsi %71, %74 : vector<288x1xi32>
    %c0_i32_45 = arith.constant 0 : i32
    %76 = vector.broadcast %c0_i32_45 : i32 to vector<288x1xi32>
    %77 = arith.cmpi ne, %75, %76 : vector<288x1xi32>
    %c0_i32_46 = arith.constant 0 : i32
    %78 = vector.broadcast %c0_i32_46 : i32 to vector<288x1xi32>
    %79 = arith.cmpi slt, %75, %78 : vector<288x1xi32>
    %c0_i32_47 = arith.constant 0 : i32
    %80 = arith.cmpi slt, %73, %c0_i32_47 : i32
    %81 = vector.broadcast %80 : i1 to vector<288x1xi1>
    %82 = vector.broadcast %81 : vector<288x1xi1> to vector<288x1xi1>
    %83 = arith.xori %79, %82 : vector<288x1xi1>
    %84 = arith.andi %83, %77 : vector<288x1xi1>
    %85 = vector.broadcast %73 : i32 to vector<288x1xi32>
    %86 = arith.addi %75, %85 : vector<288x1xi32>
    %87 = arith.select %84, %86, %75 : vector<288x1xi1>, vector<288x1xi32>
    %c0_i32_48 = arith.constant 0 : i32
    %88 = vector.broadcast %c0_i32_48 : i32 to vector<288x1xi32>
    %89 = arith.cmpi eq, %87, %88 : vector<288x1xi32>
    %c1_i32_49 = arith.constant 1 : i32
    %90 = tpu.dynamic_rotate %70 by %c1_i32_49 dim 0 : vector<288x4xf32>, i32 -> vector<288x4xf32>
    %cst_50 = arith.constant 0.000000e+00 : f32
    %91 = vector.shape_cast %89 : vector<288x1xi1> to vector<288x1xi1>
    %92 = vector.broadcast %91 : vector<288x1xi1> to vector<288x4xi1>
    %93 = vector.broadcast %cst_50 : f32 to vector<288x4xf32>
    %94 = arith.select %92, %93, %90 : vector<288x4xi1>, vector<288x4xf32>
    %c15_i32 = arith.constant 15 : i32
    %95 = vector.broadcast %c15_i32 : i32 to vector<288x1xi32>
    %96 = arith.cmpi eq, %87, %95 : vector<288x1xi32>
    %c287_i32 = arith.constant 287 : i32
    %97 = tpu.dynamic_rotate %70 by %c287_i32 dim 0 : vector<288x4xf32>, i32 -> vector<288x4xf32>
    %cst_51 = arith.constant 0.000000e+00 : f32
    %98 = vector.shape_cast %96 : vector<288x1xi1> to vector<288x1xi1>
    %99 = vector.broadcast %98 : vector<288x1xi1> to vector<288x4xi1>
    %100 = vector.broadcast %cst_51 : f32 to vector<288x4xf32>
    %101 = arith.select %99, %100, %97 : vector<288x4xi1>, vector<288x4xf32>
    %102 = tpu.concatenate %94, %70, %101 in 1 : vector<288x4xf32>, vector<288x4xf32>, vector<288x4xf32> -> vector<288x12xf32>
    %cst_52 = arith.constant 0.000000e+00 : f32
    %103 = vector.broadcast %cst_52 : f32 to vector<256x4xf32>
    %104 = vector.extract_strided_slice %102 {offsets = [0, 0], sizes = [256, 12], strides = [1, 1]} : vector<288x12xf32> to vector<256x12xf32>
    %c0_53 = arith.constant 0 : index
    %c0_54 = arith.constant 0 : index
    %c0_55 = arith.constant 0 : index
    %105 = vector.load %arg9[%c0_53, %c0_54, %c0_55] : memref<3x12x4xf32, #tpu.memory_space<vmem>>, vector<1x12x4xf32>
    %106 = vector.shape_cast %105 : vector<1x12x4xf32> to vector<12x4xf32>
    %cst_56 = arith.constant dense<0.000000e+00> : vector<256x4xf32>
    %107 = tpu.matmul %104, %106, %cst_56 {dimension_numbers = #tpu.dot_dimension_numbers<[1], [0], [0], [1], [0, 0, 1, 1], [], []>} : vector<256x12xf32>, vector<12x4xf32>, vector<256x4xf32> -> vector<256x4xf32>
    %108 = arith.addf %103, %107 : vector<256x4xf32>
    %109 = vector.extract_strided_slice %102 {offsets = [16, 0], sizes = [256, 12], strides = [1, 1]} : vector<288x12xf32> to vector<256x12xf32>
    %c1 = arith.constant 1 : index
    %c0_57 = arith.constant 0 : index
    %c0_58 = arith.constant 0 : index
    %110 = vector.load %arg9[%c1, %c0_57, %c0_58] : memref<3x12x4xf32, #tpu.memory_space<vmem>>, vector<1x12x4xf32>
    %111 = vector.shape_cast %110 : vector<1x12x4xf32> to vector<12x4xf32>
    %cst_59 = arith.constant dense<0.000000e+00> : vector<256x4xf32>
    %112 = tpu.matmul %109, %111, %cst_59 {dimension_numbers = #tpu.dot_dimension_numbers<[1], [0], [0], [1], [0, 0, 1, 1], [], []>} : vector<256x12xf32>, vector<12x4xf32>, vector<256x4xf32> -> vector<256x4xf32>
    %113 = arith.addf %108, %112 : vector<256x4xf32>
    %114 = vector.extract_strided_slice %102 {offsets = [32, 0], sizes = [256, 12], strides = [1, 1]} : vector<288x12xf32> to vector<256x12xf32>
    %c2 = arith.constant 2 : index
    %c0_60 = arith.constant 0 : index
    %c0_61 = arith.constant 0 : index
    %115 = vector.load %arg9[%c2, %c0_60, %c0_61] : memref<3x12x4xf32, #tpu.memory_space<vmem>>, vector<1x12x4xf32>
    %116 = vector.shape_cast %115 : vector<1x12x4xf32> to vector<12x4xf32>
    %cst_62 = arith.constant dense<0.000000e+00> : vector<256x4xf32>
    %117 = tpu.matmul %114, %116, %cst_62 {dimension_numbers = #tpu.dot_dimension_numbers<[1], [0], [0], [1], [0, 0, 1, 1], [], []>} : vector<256x12xf32>, vector<12x4xf32>, vector<256x4xf32> -> vector<256x4xf32>
    %118 = arith.addf %113, %117 : vector<256x4xf32>
    %c0_63 = arith.constant 0 : index
    %c0_64 = arith.constant 0 : index
    %119 = vector.load %arg10[%c0_63, %c0_64] : memref<1x4xf32, #tpu.memory_space<vmem>>, vector<1x4xf32>
    %120 = vector.broadcast %119 : vector<1x4xf32> to vector<256x4xf32>
    %121 = arith.addf %118, %120 : vector<256x4xf32>
    %cst_65 = arith.constant 0.000000e+00 : f32
    %122 = vector.broadcast %cst_65 : f32 to vector<256x4xf32>
    %123 = arith.maximumf %121, %122 : vector<256x4xf32>
    %c0_66 = arith.constant 0 : index
    %c0_67 = arith.constant 0 : index
    %124 = vector.load %arg11[%c0_66, %c0_67] : memref<4x8xf32, #tpu.memory_space<vmem>>, vector<4x8xf32>
    %cst_68 = arith.constant dense<0.000000e+00> : vector<256x8xf32>
    %125 = tpu.matmul %123, %124, %cst_68 {dimension_numbers = #tpu.dot_dimension_numbers<[1], [0], [0], [1], [0, 0, 1, 1], [], []>} : vector<256x4xf32>, vector<4x8xf32>, vector<256x8xf32> -> vector<256x8xf32>
    %c0_69 = arith.constant 0 : index
    %c0_70 = arith.constant 0 : index
    %126 = vector.load %arg12[%c0_69, %c0_70] : memref<1x8xf32, #tpu.memory_space<vmem>>, vector<1x8xf32>
    %127 = vector.broadcast %126 : vector<1x8xf32> to vector<256x8xf32>
    %128 = arith.addf %125, %127 : vector<256x8xf32>
    %129 = vector.shape_cast %128 : vector<256x8xf32> to vector<16x16x8xf32>
    %c0_71 = arith.constant 0 : index
    %c0_72 = arith.constant 0 : index
    %c0_73 = arith.constant 0 : index
    %c0_74 = arith.constant 0 : index
    %130 = vector.load %arg13[%c0_71, %c0_72, %c0_73, %c0_74] : memref<1x16x16x8xf32, #tpu.memory_space<vmem>>, vector<1x16x16x8xf32>
    %131 = vector.shape_cast %130 : vector<1x16x16x8xf32> to vector<16x16x8xf32>
    %132 = vector.shape_cast %129 : vector<16x16x8xf32> to vector<1x16x16x8xf32>
    tpu.vector_store %arg13[%c0_71, %c0_72, %c0_73, %c0_74], %132 {strides = array<i32>} : memref<1x16x16x8xf32, #tpu.memory_space<vmem>>, vector<1x16x16x8xf32>,
    return
  }
  func.func @transform_0(%arg0: i32, %arg1: i32) -> (i32, i32, i32, i32) {
    %c0_i32 = arith.constant 0 : i32
    %c0_i32_0 = arith.constant 0 : i32
    %c0_i32_1 = arith.constant 0 : i32
    return %arg0, %arg1, %c0_i32, %c0_i32_0 : i32, i32, i32, i32
  }
  func.func @transform_1(%arg0: i32, %arg1: i32) -> (i32, i32, i32, i32) {
    %c16_i32 = arith.constant 16 : i32
    %0 = arith.muli %arg1, %c16_i32 : i32
    %c1_i32 = arith.constant 1 : i32
    %1 = arith.subi %0, %c1_i32 : i32
    %c0_i32 = arith.constant 0 : i32
    %2 = arith.maxsi %1, %c0_i32 : i32
    %c0_i32_0 = arith.constant 0 : i32
    %c0_i32_1 = arith.constant 0 : i32
    %c0_i32_2 = arith.constant 0 : i32
    return %arg0, %2, %c0_i32_0, %c0_i32_1 : i32, i32, i32, i32
  }
  func.func @transform_2(%arg0: i32, %arg1: i32) -> (i32, i32, i32, i32) {
    %c16_i32 = arith.constant 16 : i32
    %0 = arith.muli %arg1, %c16_i32 : i32
    %c16_i32_0 = arith.constant 16 : i32
    %1 = arith.addi %0, %c16_i32_0 : i32
    %c15_i32 = arith.constant 15 : i32
    %2 = arith.minsi %1, %c15_i32 : i32
    %c0_i32 = arith.constant 0 : i32
    %c0_i32_1 = arith.constant 0 : i32
    %c0_i32_2 = arith.constant 0 : i32
    return %arg0, %2, %c0_i32, %c0_i32_1 : i32, i32, i32, i32
  }
  func.func @transform_3(%arg0: i32, %arg1: i32) -> (i32, i32) {
    %c0_i32 = arith.constant 0 : i32
    %c0_i32_0 = arith.constant 0 : i32
    %c0_i32_1 = arith.constant 0 : i32
    return %c0_i32, %c0_i32_0 : i32, i32
  }
  func.func @transform_4(%arg0: i32, %arg1: i32) -> (i32, i32) {
    %c0_i32 = arith.constant 0 : i32
    %c0_i32_0 = arith.constant 0 : i32
    %c0_i32_1 = arith.constant 0 : i32
    return %c0_i32, %c0_i32_0 : i32, i32
  }
  func.func @transform_5(%arg0: i32, %arg1: i32) -> (i32, i32) {
    %c0_i32 = arith.constant 0 : i32
    %c0_i32_0 = arith.constant 0 : i32
    %c0_i32_1 = arith.constant 0 : i32
    return %c0_i32, %c0_i32_0 : i32, i32
  }
  func.func @transform_6(%arg0: i32, %arg1: i32) -> (i32, i32) {
    %c0_i32 = arith.constant 0 : i32
    %c0_i32_0 = arith.constant 0 : i32
    %c0_i32_1 = arith.constant 0 : i32
    return %c0_i32, %c0_i32_0 : i32, i32
  }
  func.func @transform_7(%arg0: i32, %arg1: i32) -> (i32, i32, i32) {
    %c0_i32 = arith.constant 0 : i32
    %c0_i32_0 = arith.constant 0 : i32
    %c0_i32_1 = arith.constant 0 : i32
    %c0_i32_2 = arith.constant 0 : i32
    return %c0_i32, %c0_i32_0, %c0_i32_1 : i32, i32, i32
  }
  func.func @transform_8(%arg0: i32, %arg1: i32) -> (i32, i32) {
    %c0_i32 = arith.constant 0 : i32
    %c0_i32_0 = arith.constant 0 : i32
    %c0_i32_1 = arith.constant 0 : i32
    return %c0_i32, %c0_i32_0 : i32, i32
  }
  func.func @transform_9(%arg0: i32, %arg1: i32) -> (i32, i32) {
    %c0_i32 = arith.constant 0 : i32
    %c0_i32_0 = arith.constant 0 : i32
    %c0_i32_1 = arith.constant 0 : i32
    return %c0_i32, %c0_i32_0 : i32, i32
  }
  func.func @transform_10(%arg0: i32, %arg1: i32) -> (i32, i32) {
    %c0_i32 = arith.constant 0 : i32
    %c0_i32_0 = arith.constant 0 : i32
    %c0_i32_1 = arith.constant 0 : i32
    return %c0_i32, %c0_i32_0 : i32, i32
  }
  func.func @transform_11(%arg0: i32, %arg1: i32) -> (i32, i32, i32, i32) {
    %c0_i32 = arith.constant 0 : i32
    %c0_i32_0 = arith.constant 0 : i32
    %c0_i32_1 = arith.constant 0 : i32
    return %arg0, %arg1, %c0_i32, %c0_i32_0 : i32, i32, i32, i32
  }
}

</mosaic_0001>

<llo_original>
// kernel: conv_block.1
$region0: #{conv_block.1}
  #allocation0 [shape = 'u32[]', space=smem, size = 0x4, offset = 0x4, fixed_abs, tag = 'smem constant byte address 0x4 - core index']
  #allocation1 [shape = 'u32[72,128]{1,0:T(1,128)}', space=vmem, size = 0x9000, scoped, tag = 'internal scratch']
  %s0 = inlined_call_operand.vmem [shape: f32[2,16,16,4], index: 0, kind: input, shape index: {}, may-alias: {0,1,2}]
  %s1 = inlined_call_operand.vmem [shape: f32[2,16,16,4], index: 1, kind: input, shape index: {}, may-alias: {0,1,2}]
  %s2 = inlined_call_operand.vmem [shape: f32[2,16,16,4], index: 2, kind: input, shape index: {}, may-alias: {0,1,2}]
  %s3 = inlined_call_operand.vmem [shape: f32[1,4], index: 3, kind: input, shape index: {}]
  %s4 = inlined_call_operand.vmem [shape: f32[1,4], index: 4, kind: input, shape index: {}]
  %s5 = inlined_call_operand.vmem [shape: f32[4,4], index: 5, kind: input, shape index: {}]
  %s6 = inlined_call_operand.vmem [shape: f32[1,4], index: 6, kind: input, shape index: {}]
  %s7 = inlined_call_operand.vmem [shape: f32[3,12,4], index: 7, kind: input, shape index: {}]
  %s8 = inlined_call_operand.vmem [shape: f32[1,4], index: 8, kind: input, shape index: {}]
  %s9 = inlined_call_operand.vmem [shape: f32[4,8], index: 9, kind: input, shape index: {}]
  %s10 = inlined_call_operand.vmem [shape: f32[1,8], index: 10, kind: input, shape index: {}]
  %s11 = inlined_call_operand.vmem [shape: f32[2,16,16,8], index: 11, kind: output, shape index: {}]
  %s12 = sld [smem:[#allocation0]]
  $region77: #{conv_block.1} parent=0
    _
  %s14 = ssub.s32 1, %s12
  %s15 = scalar_select 0, %s14, %s12
  loop: start=0, step=1, limit=4
  $region2: #{conv_block.1} parent=0 // loop_pre_header
    _
  $region3: #{conv_block.1} parent=0 // loop_header
    %s17 = sphi 0, %s21
    %p18 = scmp.ge.s32.totalorder %s17, 4
    %s24 = sphi 0, %s36
    %s25 = sphi 0, %s32
    %s26 = sphi 0, %s24
    %s27 = sphi 0, %s25
    %s28 = sphi 0, %s26
    %s29 = sphi 0, %s27
    %s41 = sphi 0, %s43
    %s44 = sphi 0, %s41
    %s45 = sphi 0, %s44
    %s61 = sphi 0, %s45
    %s77 = sphi 0, %s79
    %s80 = sphi 0, %s77
    %s81 = sphi 0, %s80
    %s97 = sphi 0, %s81
    %s113 = sphi 0, %s115
    %s116 = sphi 0, %s113
    %s117 = sphi 0, %s116
    %s133 = sphi 0, %s117
    %s137 = sphi 0, %s137
    %s139 = sphi 0, %s137
    %s140 = sphi 0, %s139
    %s154 = sphi 0, %s140
    %s158 = sphi 0, %s158
    %s160 = sphi 0, %s158
    %s161 = sphi 0, %s160
    %s175 = sphi 0, %s161
    %s179 = sphi 0, %s179
    %s181 = sphi 0, %s179
    %s182 = sphi 0, %s181
    %s196 = sphi 0, %s182
    %s200 = sphi 0, %s200
    %s202 = sphi 0, %s200
    %s203 = sphi 0, %s202
    %s217 = sphi 0, %s203
    %s221 = sphi 0, %s221
    %s223 = sphi 0, %s221
    %s224 = sphi 0, %s223
    %s238 = sphi 0, %s224
    %s242 = sphi 0, %s242
    %s244 = sphi 0, %s242
    %s245 = sphi 0, %s244
    %s259 = sphi 0, %s245
    %s263 = sphi 0, %s263
    %s265 = sphi 0, %s263
    %s266 = sphi 0, %s265
    %s280 = sphi 0, %s266
    %s284 = sphi 0, %s284
    %s286 = sphi 0, %s284
    %s287 = sphi 0, %s286
    %s301 = sphi 0, %s287
    %s309 = sphi 0, %s311
    %s312 = sphi 0, %s309
    %s313 = sphi 0, %s312
    %s329 = sphi 0, %s313
  $region4: #{conv_block.1} parent=0 // loop_header_branch
    %20 = sbr.rel (%p18) target = $region8
  $region5: #{conv_block.1} parent=0 // loop_body
    %s22 = ssub.s32 %s17, 1
    %s23 = ssub.s32 %s17, 2
    %s30 = sadd.s32 1, %s25
    %p31 = scmp.ge.s32.totalorder %s30, 1
    %s32 = scalar_select %p31, 0, %s30
    %s33 = sadd.s32 1, %s24
    %s34 = scalar_select %p31, %s33, %s24
    %p35 = scmp.ge.s32.totalorder %s34, 2
    %s36 = scalar_select %p35, 0, %s34
    %s37 = ssub.s32 %s24, %s36
    %s38 = ssub.s32 %s25, %s32
    %s39 = sor.u32 %s37, %s38
    %p40 = scmp.eq.s32.totalorder %s39, 0
    %s42 = sadd.s32 %s41, 1
    %s43 = scalar_select %p40, %s41, %s42
    %p46 = pneg %p40
    %p47 = scmp.eq.s32.totalorder %s17, 1
    %p48 = por %p46, %p47
    %p49 = scmp.ne.s32.totalorder %s41, %s44
    %p50 = scmp.eq.s32.totalorder %s17, 0
    %p51 = por %p49, %p50
    %p52 = scmp.ne.s32.totalorder %s41, %s44
    %p53 = scmp.eq.s32.totalorder %s22, 1
    %p54 = por %p52, %p53
    %p55 = scmp.ne.s32.totalorder %s44, %s45
    %p56 = scmp.eq.s32.totalorder %s22, 0
    %p57 = por %p55, %p56
    %p58 = scmp.ne.s32.totalorder %s44, %s45
    %p59 = scmp.eq.s32.totalorder %s23, 1
    %p60 = por %p58, %p59
    %p62 = scmp.ne.s32.totalorder %s45, %s61
    %p63 = scmp.eq.s32.totalorder %s23, 0
    %p64 = por %p62, %p63
    %s65 = smul.u32 %s25, 16
    %s66 = ssub.s32 %s65, 1
    %p67 = scmp.gt.s32.totalorder %s66, 0
    %s68 = scalar_select %p67, %s66, 0
    %s69 = smul.u32 %s32, 16
    %s70 = ssub.s32 %s69, 1
    %p71 = scmp.gt.s32.totalorder %s70, 0
    %s72 = scalar_select %p71, %s70, 0
    %s73 = ssub.s32 %s24, %s36
    %s74 = ssub.s32 %s68, %s72
    %s75 = sor.u32 %s73, %s74
    %p76 = scmp.eq.s32.totalorder %s75, 0
    %s78 = sadd.s32 %s77, 1
    %s79 = scalar_select %p76, %s77, %s78
    %p82 = pneg %p76
    %p83 = scmp.eq.s32.totalorder %s17, 1
    %p84 = por %p82, %p83
    %p85 = scmp.ne.s32.totalorder %s77, %s80
    %p86 = scmp.eq.s32.totalorder %s17, 0
    %p87 = por %p85, %p86
    %p88 = scmp.ne.s32.totalorder %s77, %s80
    %p89 = scmp.eq.s32.totalorder %s22, 1
    %p90 = por %p88, %p89
    %p91 = scmp.ne.s32.totalorder %s80, %s81
    %p92 = scmp.eq.s32.totalorder %s22, 0
    %p93 = por %p91, %p92
    %p94 = scmp.ne.s32.totalorder %s80, %s81
    %p95 = scmp.eq.s32.totalorder %s23, 1
    %p96 = por %p94, %p95
    %p98 = scmp.ne.s32.totalorder %s81, %s97
    %p99 = scmp.eq.s32.totalorder %s23, 0
    %p100 = por %p98, %p99
    %s101 = smul.u32 %s25, 16
    %s102 = sadd.s32 %s101, 16
    %p103 = scmp.lt.s32.totalorder %s102, 15
    %s104 = scalar_select %p103, %s102, 15
    %s105 = smul.u32 %s32, 16
    %s106 = sadd.s32 %s105, 16
    %p107 = scmp.lt.s32.totalorder %s106, 15
    %s108 = scalar_select %p107, %s106, 15
    %s109 = ssub.s32 %s24, %s36
    %s110 = ssub.s32 %s104, %s108
    %s111 = sor.u32 %s109, %s110
    %p112 = scmp.eq.s32.totalorder %s111, 0
    %s114 = sadd.s32 %s113, 1
    %s115 = scalar_select %p112, %s113, %s114
    %p118 = pneg %p112
    %p119 = scmp.eq.s32.totalorder %s17, 1
    %p120 = por %p118, %p119
    %p121 = scmp.ne.s32.totalorder %s113, %s116
    %p122 = scmp.eq.s32.totalorder %s17, 0
    %p123 = por %p121, %p122
    %p124 = scmp.ne.s32.totalorder %s113, %s116
    %p125 = scmp.eq.s32.totalorder %s22, 1
    %p126 = por %p124, %p125
    %p127 = scmp.ne.s32.totalorder %s116, %s117
    %p128 = scmp.eq.s32.totalorder %s22, 0
    %p129 = por %p127, %p128
    %p130 = scmp.ne.s32.totalorder %s116, %s117
    %p131 = scmp.eq.s32.totalorder %s23, 1
    %p132 = por %p130, %p131
    %p134 = scmp.ne.s32.totalorder %s117, %s133
    %p135 = scmp.eq.s32.totalorder %s23, 0
    %p136 = por %p134, %p135
    %s138 = sadd.s32 %s137, 1
    %p141 = scmp.eq.s32.totalorder %s17, 1
    %p142 = scmp.ne.s32.totalorder %s137, %s139
    %p143 = scmp.eq.s32.totalorder %s17, 0
    %p144 = por %p142, %p143
    %p145 = scmp.ne.s32.totalorder %s137, %s139
    %p146 = scmp.eq.s32.totalorder %s22, 1
    %p147 = por %p145, %p146
    %p148 = scmp.ne.s32.totalorder %s139, %s140
    %p149 = scmp.eq.s32.totalorder %s22, 0
    %p150 = por %p148, %p149
    %p151 = scmp.ne.s32.totalorder %s139, %s140
    %p152 = scmp.eq.s32.totalorder %s23, 1
    %p153 = por %p151, %p152
    %p155 = scmp.ne.s32.totalorder %s140, %s154
    %p156 = scmp.eq.s32.totalorder %s23, 0
    %p157 = por %p155, %p156
    %s159 = sadd.s32 %s158, 1
    %p162 = scmp.eq.s32.totalorder %s17, 1
    %p163 = scmp.ne.s32.totalorder %s158, %s160
    %p164 = scmp.eq.s32.totalorder %s17, 0
    %p165 = por %p163, %p164
    %p166 = scmp.ne.s32.totalorder %s158, %s160
    %p167 = scmp.eq.s32.totalorder %s22, 1
    %p168 = por %p166, %p167
    %p169 = scmp.ne.s32.totalorder %s160, %s161
    %p170 = scmp.eq.s32.totalorder %s22, 0
    %p171 = por %p169, %p170
    %p172 = scmp.ne.s32.totalorder %s160, %s161
    %p173 = scmp.eq.s32.totalorder %s23, 1
    %p174 = por %p172, %p173
    %p176 = scmp.ne.s32.totalorder %s161, %s175
    %p177 = scmp.eq.s32.totalorder %s23, 0
    %p178 = por %p176, %p177
    %s180 = sadd.s32 %s179, 1
    %p183 = scmp.eq.s32.totalorder %s17, 1
    %p184 = scmp.ne.s32.totalorder %s179, %s181
    %p185 = scmp.eq.s32.totalorder %s17, 0
    %p186 = por %p184, %p185
    %p187 = scmp.ne.s32.totalorder %s179, %s181
    %p188 = scmp.eq.s32.totalorder %s22, 1
    %p189 = por %p187, %p188
    %p190 = scmp.ne.s32.totalorder %s181, %s182
    %p191 = scmp.eq.s32.totalorder %s22, 0
    %p192 = por %p190, %p191
    %p193 = scmp.ne.s32.totalorder %s181, %s182
    %p194 = scmp.eq.s32.totalorder %s23, 1
    %p195 = por %p193, %p194
    %p197 = scmp.ne.s32.totalorder %s182, %s196
    %p198 = scmp.eq.s32.totalorder %s23, 0
    %p199 = por %p197, %p198
    %s201 = sadd.s32 %s200, 1
    %p204 = scmp.eq.s32.totalorder %s17, 1
    %p205 = scmp.ne.s32.totalorder %s200, %s202
    %p206 = scmp.eq.s32.totalorder %s17, 0
    %p207 = por %p205, %p206
    %p208 = scmp.ne.s32.totalorder %s200, %s202
    %p209 = scmp.eq.s32.totalorder %s22, 1
    %p210 = por %p208, %p209
    %p211 = scmp.ne.s32.totalorder %s202, %s203
    %p212 = scmp.eq.s32.totalorder %s22, 0
    %p213 = por %p211, %p212
    %p214 = scmp.ne.s32.totalorder %s202, %s203
    %p215 = scmp.eq.s32.totalorder %s23, 1
    %p216 = por %p214, %p215
    %p218 = scmp.ne.s32.totalorder %s203, %s217
    %p219 = scmp.eq.s32.totalorder %s23, 0
    %p220 = por %p218, %p219
    %s222 = sadd.s32 %s221, 1
    %p225 = scmp.eq.s32.totalorder %s17, 1
    %p226 = scmp.ne.s32.totalorder %s221, %s223
    %p227 = scmp.eq.s32.totalorder %s17, 0
    %p228 = por %p226, %p227
    %p229 = scmp.ne.s32.totalorder %s221, %s223
    %p230 = scmp.eq.s32.totalorder %s22, 1
    %p231 = por %p229, %p230
    %p232 = scmp.ne.s32.totalorder %s223, %s224
    %p233 = scmp.eq.s32.totalorder %s22, 0
    %p234 = por %p232, %p233
    %p235 = scmp.ne.s32.totalorder %s223, %s224
    %p236 = scmp.eq.s32.totalorder %s23, 1
    %p237 = por %p235, %p236
    %p239 = scmp.ne.s32.totalorder %s224, %s238
    %p240 = scmp.eq.s32.totalorder %s23, 0
    %p241 = por %p239, %p240
    %s243 = sadd.s32 %s242, 1
    %p246 = scmp.eq.s32.totalorder %s17, 1
    %p247 = scmp.ne.s32.totalorder %s242, %s244
    %p248 = scmp.eq.s32.totalorder %s17, 0
    %p249 = por %p247, %p248
    %p250 = scmp.ne.s32.totalorder %s242, %s244
    %p251 = scmp.eq.s32.totalorder %s22, 1
    %p252 = por %p250, %p251
    %p253 = scmp.ne.s32.totalorder %s244, %s245
    %p254 = scmp.eq.s32.totalorder %s22, 0
    %p255 = por %p253, %p254
    %p256 = scmp.ne.s32.totalorder %s244, %s245
    %p257 = scmp.eq.s32.totalorder %s23, 1
    %p258 = por %p256, %p257
    %p260 = scmp.ne.s32.totalorder %s245, %s259
    %p261 = scmp.eq.s32.totalorder %s23, 0
    %p262 = por %p260, %p261
    %s264 = sadd.s32 %s263, 1
    %p267 = scmp.eq.s32.totalorder %s17, 1
    %p268 = scmp.ne.s32.totalorder %s263, %s265
    %p269 = scmp.eq.s32.totalorder %s17, 0
    %p270 = por %p268, %p269
    %p271 = scmp.ne.s32.totalorder %s263, %s265
    %p272 = scmp.eq.s32.totalorder %s22, 1
    %p273 = por %p271, %p272
    %p274 = scmp.ne.s32.totalorder %s265, %s266
    %p275 = scmp.eq.s32.totalorder %s22, 0
    %p276 = por %p274, %p275
    %p277 = scmp.ne.s32.totalorder %s265, %s266
    %p278 = scmp.eq.s32.totalorder %s23, 1
    %p279 = por %p277, %p278
    %p281 = scmp.ne.s32.totalorder %s266, %s280
    %p282 = scmp.eq.s32.totalorder %s23, 0
    %p283 = por %p281, %p282
    %s285 = sadd.s32 %s284, 1
    %p288 = scmp.eq.s32.totalorder %s17, 1
    %p289 = scmp.ne.s32.totalorder %s284, %s286
    %p290 = scmp.eq.s32.totalorder %s17, 0
    %p291 = por %p289, %p290
    %p292 = scmp.ne.s32.totalorder %s284, %s286
    %p293 = scmp.eq.s32.totalorder %s22, 1
    %p294 = por %p292, %p293
    %p295 = scmp.ne.s32.totalorder %s286, %s287
    %p296 = scmp.eq.s32.totalorder %s22, 0
    %p297 = por %p295, %p296
    %p298 = scmp.ne.s32.totalorder %s286, %s287
    %p299 = scmp.eq.s32.totalorder %s23, 1
    %p300 = por %p298, %p299
    %p302 = scmp.ne.s32.totalorder %s287, %s301
    %p303 = scmp.eq.s32.totalorder %s23, 0
    %p304 = por %p302, %p303
    %s305 = ssub.s32 %s24, %s36
    %s306 = ssub.s32 %s25, %s32
    %s307 = sor.u32 %s305, %s306
    %p308 = scmp.eq.s32.totalorder %s307, 0
    %s310 = sadd.s32 %s309, 1
    %s311 = scalar_select %p308, %s309, %s310
    %p314 = pneg %p308
    %p315 = scmp.eq.s32.totalorder %s17, 1
    %p316 = por %p314, %p315
    %p317 = scmp.ne.s32.totalorder %s309, %s312
    %p318 = scmp.eq.s32.totalorder %s17, 0
    %p319 = por %p317, %p318
    %p320 = scmp.ne.s32.totalorder %s309, %s312
    %p321 = scmp.eq.s32.totalorder %s22, 1
    %p322 = por %p320, %p321
    %p323 = scmp.ne.s32.totalorder %s312, %s313
    %p324 = scmp.eq.s32.totalorder %s22, 0
    %p325 = por %p323, %p324
    %p326 = scmp.ne.s32.totalorder %s312, %s313
    %p327 = scmp.eq.s32.totalorder %s23, 1
    %p328 = por %p326, %p327
    %p330 = scmp.ne.s32.totalorder %s313, %s329
    %p331 = scmp.eq.s32.totalorder %s23, 0
    %p332 = por %p330, %p331
    %p333 = scmp.le.s32.totalorder 1, %s17
    %p334 = scmp.lt.s32.totalorder %s17, 3
    %p335 = pnand %p333, %p334
    %p336 = pneg %p335
    // Predicated region
    $region9: #{conv_block.1} parent=5 // pred_check
      _
    $region10: #{conv_block.1} parent=5 // pred_check_branch
      %338 = sbr.rel (%p335) target = $region12
    $region11: #{conv_block.1} parent=5 // pred_region
      %s339 = ssub.s32 %s17, 1
      // Predicated region
      $region13: #{conv_block.1} parent=11 // pred_check
        %p340 = pneg %p150
      $region14: #{conv_block.1} parent=11 // pred_check_branch
        %342 = sbr.rel (%p340) target = $region16
      $region15: #{conv_block.1} parent=11 // pred_region
        _
      $region16: #{conv_block.1} parent=11 // pred_fallthru
        _
      // Predicated region
      $region17: #{conv_block.1} parent=11 // pred_check
        %p343 = pneg %p171
      $region18: #{conv_block.1} parent=11 // pred_check_branch
        %345 = sbr.rel (%p343) target = $region20
      $region19: #{conv_block.1} parent=11 // pred_region
        _
      $region20: #{conv_block.1} parent=11 // pred_fallthru
        _
      // Predicated region
      $region21: #{conv_block.1} parent=11 // pred_check
        %p346 = pneg %p192
      $region22: #{conv_block.1} parent=11 // pred_check_branch
        %348 = sbr.rel (%p346) target = $region24
      $region23: #{conv_block.1} parent=11 // pred_region
        _
      $region24: #{conv_block.1} parent=11 // pred_fallthru
        _
      // Predicated region
      $region25: #{conv_block.1} parent=11 // pred_check
        %p349 = pneg %p213
      $region26: #{conv_block.1} parent=11 // pred_check_branch
        %351 = sbr.rel (%p349) target = $region28
      $region27: #{conv_block.1} parent=11 // pred_region
        _
      $region28: #{conv_block.1} parent=11 // pred_fallthru
        _
      // Predicated region
      $region29: #{conv_block.1} parent=11 // pred_check
        %p352 = pneg %p234
      $region30: #{conv_block.1} parent=11 // pred_check_branch
        %354 = sbr.rel (%p352) target = $region32
      $region31: #{conv_block.1} parent=11 // pred_region
        _
      $region32: #{conv_block.1} parent=11 // pred_fallthru
        _
      // Predicated region
      $region33: #{conv_block.1} parent=11 // pred_check
        %p355 = pneg %p255
      $region34: #{conv_block.1} parent=11 // pred_check_branch
        %357 = sbr.rel (%p355) target = $region36
      $region35: #{conv_block.1} parent=11 // pred_region
        _
      $region36: #{conv_block.1} parent=11 // pred_fallthru
        _
      // Predicated region
      $region37: #{conv_block.1} parent=11 // pred_check
        %p358 = pneg %p276
      $region38: #{conv_block.1} parent=11 // pred_check_branch
        %360 = sbr.rel (%p358) target = $region40
      $region39: #{conv_block.1} parent=11 // pred_region
        _
      $region40: #{conv_block.1} parent=11 // pred_fallthru
        _
      // Predicated region
      $region41: #{conv_block.1} parent=11 // pred_check
        %p361 = pneg %p297
      $region42: #{conv_block.1} parent=11 // pred_check_branch
        %363 = sbr.rel (%p361) target = $region44
      $region43: #{conv_block.1} parent=11 // pred_region
        _
      $region44: #{conv_block.1} parent=11 // pred_fallthru
        _
    $region12: #{conv_block.1} parent=5 // pred_fallthru
      _
    %p364 = scmp.lt.s32.totalorder %s17, 2
    // Predicated region
    $region45: #{conv_block.1} parent=5 // pred_check
      %p365 = pneg %p364
    $region46: #{conv_block.1} parent=5 // pred_check_branch
      %367 = sbr.rel (%p365) target = $region48
    $region47: #{conv_block.1} parent=5 // pred_region
      // Predicated region
      $region49: #{conv_block.1} parent=47 // pred_check
        %p368 = pneg %p51
      $region50: #{conv_block.1} parent=47 // pred_check_branch
        %370 = sbr.rel (%p368) target = $region52
      $region51: #{conv_block.1} parent=47 // pred_region
        %s371 = smul.u32 16, %s25
        %p372 = scmp.lt.s32.totalorder %s24, 1
        %s373 = scalar_select %p372, %s24, 1
        %p374 = scmp.lt.s32.totalorder %s371, 15
        %s375 = scalar_select %p374, %s371, 15
        %s376 = smul.addr %s375, 2
        %s377 = smul.addr %s373, 32
        %s378 = sadd.s32 %s376, %s377
        %s379 = smul.addr %s378, 8
        %s380 = scalar_lea.vmem %s0, %s379
        %s381 = smul.u32 16, %s25
      $region52: #{conv_block.1} parent=47 // pred_fallthru
        _
      // Predicated region
      $region53: #{conv_block.1} parent=47 // pred_check
        %p382 = pneg %p87
      $region54: #{conv_block.1} parent=47 // pred_check_branch
        %384 = sbr.rel (%p382) target = $region56
      $region55: #{conv_block.1} parent=47 // pred_region
        %s385 = smul.u32 %s25, 16
        %s386 = ssub.s32 %s385, 1
        %p387 = scmp.gt.s32.totalorder %s386, 0
        %s388 = scalar_select %p387, %s386, 0
        %p389 = scmp.lt.s32.totalorder %s24, 1
        %s390 = scalar_select %p389, %s24, 1
        %p391 = scmp.lt.s32.totalorder %s388, 15
        %s392 = scalar_select %p391, %s388, 15
        %s393 = smul.addr %s392, 2
        %s394 = smul.addr %s390, 32
        %s395 = sadd.s32 %s393, %s394
        %s396 = smul.addr %s395, 8
        %s397 = scalar_lea.vmem %s1, %s396
        %s398 = smul.u32 %s25, 16
        %s399 = ssub.s32 %s398, 1
        %p400 = scmp.gt.s32.totalorder %s399, 0
        %s401 = scalar_select %p400, %s399, 0
      $region56: #{conv_block.1} parent=47 // pred_fallthru
        _
      // Predicated region
      $region57: #{conv_block.1} parent=47 // pred_check
        %p402 = pneg %p123
      $region58: #{conv_block.1} parent=47 // pred_check_branch
        %404 = sbr.rel (%p402) target = $region60
      $region59: #{conv_block.1} parent=47 // pred_region
        %s405 = smul.u32 %s25, 16
        %s406 = sadd.s32 %s405, 16
        %p407 = scmp.lt.s32.totalorder %s406, 15
        %s408 = scalar_select %p407, %s406, 15
        %p409 = scmp.lt.s32.totalorder %s24, 1
        %s410 = scalar_select %p409, %s24, 1
        %p411 = scmp.lt.s32.totalorder %s408, 15
        %s412 = scalar_select %p411, %s408, 15
        %s413 = smul.addr %s412, 2
        %s414 = smul.addr %s410, 32
        %s415 = sadd.s32 %s413, %s414
        %s416 = smul.addr %s415, 8
        %s417 = scalar_lea.vmem %s2, %s416
        %s418 = smul.u32 %s25, 16
        %s419 = sadd.s32 %s418, 16
        %p420 = scmp.lt.s32.totalorder %s419, 15
        %s421 = scalar_select %p420, %s419, 15
      $region60: #{conv_block.1} parent=47 // pred_fallthru
        _
    $region48: #{conv_block.1} parent=5 // pred_fallthru
      _
    %p422 = scmp.le.s32.totalorder 1, %s17
    %p423 = scmp.lt.s32.totalorder %s17, 3
    %p424 = pnand %p422, %p423
    %p425 = pneg %p424
    // Predicated region
    $region61: #{conv_block.1} parent=5 // pred_check
      _
    $region62: #{conv_block.1} parent=5 // pred_check_branch
      %427 = sbr.rel (%p424) target = $region64
    $region63: #{conv_block.1} parent=5 // pred_region
      %s428 = ssub.s32 %s17, 1
      %s429 = smul.u32 16, %s27
      %p430 = scmp.lt.s32.totalorder %s26, 1
      %s431 = scalar_select %p430, %s26, 1
      %p432 = scmp.lt.s32.totalorder %s429, 15
      %s433 = scalar_select %p432, %s429, 15
      %s434 = smul.addr %s433, 2
      %s435 = smul.addr %s431, 32
      %s436 = sadd.s32 %s434, %s435
      %s437 = smul.addr %s436, 8
      %s438 = scalar_lea.vmem %s0, %s437
      %p439 = pneg %p57
      %p440 = pneg %p54
      %s441 = smul.u32 %s27, 16
      %s442 = ssub.s32 %s441, 1
      %p443 = scmp.gt.s32.totalorder %s442, 0
      %s444 = scalar_select %p443, %s442, 0
      %p445 = scmp.lt.s32.totalorder %s26, 1
      %s446 = scalar_select %p445, %s26, 1
      %p447 = scmp.lt.s32.totalorder %s444, 15
      %s448 = scalar_select %p447, %s444, 15
      %s449 = smul.addr %s448, 2
      %s450 = smul.addr %s446, 32
      %s451 = sadd.s32 %s449, %s450
      %s452 = smul.addr %s451, 8
      %s453 = scalar_lea.vmem %s1, %s452
      %p454 = pneg %p93
      %p455 = pneg %p90
      %s456 = smul.u32 %s27, 16
      %s457 = sadd.s32 %s456, 16
      %p458 = scmp.lt.s32.totalorder %s457, 15
      %s459 = scalar_select %p458, %s457, 15
      %p460 = scmp.lt.s32.totalorder %s26, 1
      %s461 = scalar_select %p460, %s26, 1
      %p462 = scmp.lt.s32.totalorder %s459, 15
      %s463 = scalar_select %p462, %s459, 15
      %s464 = smul.addr %s463, 2
      %s465 = smul.addr %s461, 32
      %s466 = sadd.s32 %s464, %s465
      %s467 = smul.addr %s466, 8
      %s468 = scalar_lea.vmem %s2, %s467
      %p469 = pneg %p129
      %p470 = pneg %p126
      %p471 = pneg %p150
      %p472 = pneg %p147
      %p473 = pneg %p171
      %p474 = pneg %p168
      %p475 = pneg %p192
      %p476 = pneg %p189
      %p477 = pneg %p213
      %p478 = pneg %p210
      %p479 = pneg %p234
      %p480 = pneg %p231
      %p481 = pneg %p255
      %p482 = pneg %p252
      %p483 = pneg %p276
      %p484 = pneg %p273
      %p485 = pneg %p297
      %p486 = pneg %p294
      %p487 = pneg %p325
      %p488 = pneg %p322
      %s489 = smul.u32 16, %s27
      %p490 = scmp.lt.s32.totalorder %s26, 1
      %s491 = scalar_select %p490, %s26, 1
      %p492 = scmp.lt.s32.totalorder %s489, 15
      %s493 = scalar_select %p492, %s489, 15
      %s494 = smul.addr %s493, 2
      %s495 = smul.addr %s491, 32
      %s496 = sadd.s32 %s494, %s495
      %s497 = smul.addr %s496, 8
      %s498 = scalar_lea.vmem %s11, %s497
      %s499 = smul.u32 16, %s27
      %p500 = scmp.lt.s32.totalorder %s26, 1
      %s501 = scalar_select %p500, %s26, 1
      %p502 = scmp.lt.s32.totalorder %s499, 15
      %s503 = scalar_select %p502, %s499, 15
      %s504 = smul.addr %s503, 2
      %s505 = smul.addr %s501, 32
      %s506 = sadd.s32 %s504, %s505
      %s507 = smul.addr %s506, 8
      %s508 = scalar_lea.vmem %s0, %s507
      %s509 = smul.u32 16, %s27
      %s510 = smul.u32 %s27, 16
      %s511 = ssub.s32 %s510, 1
      %p512 = scmp.gt.s32.totalorder %s511, 0
      %s513 = scalar_select %p512, %s511, 0
      %p514 = scmp.lt.s32.totalorder %s26, 1
      %s515 = scalar_select %p514, %s26, 1
      %p516 = scmp.lt.s32.totalorder %s513, 15
      %s517 = scalar_select %p516, %s513, 15
      %s518 = smul.addr %s517, 2
      %s519 = smul.addr %s515, 32
      %s520 = sadd.s32 %s518, %s519
      %s521 = smul.addr %s520, 8
      %s522 = scalar_lea.vmem %s1, %s521
      %s523 = smul.u32 %s27, 16
      %s524 = ssub.s32 %s523, 1
      %p525 = scmp.gt.s32.totalorder %s524, 0
      %s526 = scalar_select %p525, %s524, 0
      %s527 = smul.u32 %s27, 16
      %s528 = sadd.s32 %s527, 16
      %p529 = scmp.lt.s32.totalorder %s528, 15
      %s530 = scalar_select %p529, %s528, 15
      %p531 = scmp.lt.s32.totalorder %s26, 1
      %s532 = scalar_select %p531, %s26, 1
      %p533 = scmp.lt.s32.totalorder %s530, 15
      %s534 = scalar_select %p533, %s530, 15
      %s535 = smul.addr %s534, 2
      %s536 = smul.addr %s532, 32
      %s537 = sadd.s32 %s535, %s536
      %s538 = smul.addr %s537, 8
      %s539 = scalar_lea.vmem %s2, %s538
      %s540 = smul.u32 %s27, 16
      %s541 = sadd.s32 %s540, 16
      %p542 = scmp.lt.s32.totalorder %s541, 15
      %s543 = scalar_select %p542, %s541, 15
      %s544 = smul.u32 16, %s27
      %p545 = scmp.lt.s32.totalorder %s26, 1
      %s546 = scalar_select %p545, %s26, 1
      %p547 = scmp.lt.s32.totalorder %s544, 15
      %s548 = scalar_select %p547, %s544, 15
      %s549 = smul.addr %s548, 2
      %s550 = smul.addr %s546, 32
      %s551 = sadd.s32 %s549, %s550
      %s552 = smul.addr %s551, 8
      %s553 = scalar_lea.vmem %s11, %s552
      %s554 = smul.u32 16, %s27
      %v555 = vld [vmem:[%s508] sm:$0xff]
      %v556 = vld [vmem:[%s508 + $0x8] sm:$0xff]
      %v557 = vld [vmem:[%s508 + $0x10] sm:$0xff]
      %v558 = vld [vmem:[%s508 + $0x18] sm:$0xff]
      %v559 = vld [vmem:[%s508 + $0x20] sm:$0xff]
      %v560 = vld [vmem:[%s508 + $0x28] sm:$0xff]
      %v561 = vld [vmem:[%s508 + $0x30] sm:$0xff]
      %v562 = vld [vmem:[%s508 + $0x38] sm:$0xff]
      %v563 = vld [vmem:[%s508 + $0x40] sm:$0xff]
      %v564 = vld [vmem:[%s508 + $0x48] sm:$0xff]
      %v565 = vld [vmem:[%s508 + $0x50] sm:$0xff]
      %v566 = vld [vmem:[%s508 + $0x58] sm:$0xff]
      %v567 = vld [vmem:[%s508 + $0x60] sm:$0xff]
      %v568 = vld [vmem:[%s508 + $0x68] sm:$0xff]
      %v569 = vld [vmem:[%s508 + $0x70] sm:$0xff]
      %v570 = vld [vmem:[%s508 + $0x78] sm:$0xff]
      %v571 = vld [vmem:[%s508 + $0x80] sm:$0xff]
      %v572 = vld [vmem:[%s508 + $0x88] sm:$0xff]
      %v573 = vld [vmem:[%s508 + $0x90] sm:$0xff]
      %v574 = vld [vmem:[%s508 + $0x98] sm:$0xff]
      %v575 = vld [vmem:[%s508 + $0xa0] sm:$0xff]
      %v576 = vld [vmem:[%s508 + $0xa8] sm:$0xff]
      %v577 = vld [vmem:[%s508 + $0xb0] sm:$0xff]
      %v578 = vld [vmem:[%s508 + $0xb8] sm:$0xff]
      %v579 = vld [vmem:[%s508 + $0xc0] sm:$0xff]
      %v580 = vld [vmem:[%s508 + $0xc8] sm:$0xff]
      %v581 = vld [vmem:[%s508 + $0xd0] sm:$0xff]
      %v582 = vld [vmem:[%s508 + $0xd8] sm:$0xff]
      %v583 = vld [vmem:[%s508 + $0xe0] sm:$0xff]
      %v584 = vld [vmem:[%s508 + $0xe8] sm:$0xff]
      %v585 = vld [vmem:[%s508 + $0xf0] sm:$0xff]
      %v586 = vld [vmem:[%s508 + $0xf8] sm:$0xff]
      %v587 = vld [vmem:[%s3] sm:$0x1]
      %v589 = vperm.slane %v587, 0
      %v591 = vmul.f32 %v555, %v589
      %v592 = vmul.f32 %v556, %v589
      %v593 = vmul.f32 %v557, %v589
      %v594 = vmul.f32 %v558, %v589
      %v595 = vmul.f32 %v559, %v589
      %v596 = vmul.f32 %v560, %v589
      %v597 = vmul.f32 %v561, %v589
      %v598 = vmul.f32 %v562, %v589
      %v599 = vmul.f32 %v563, %v589
      %v600 = vmul.f32 %v564, %v589
      %v601 = vmul.f32 %v565, %v589
      %v602 = vmul.f32 %v566, %v589
      %v603 = vmul.f32 %v567, %v589
      %v604 = vmul.f32 %v568, %v589
      %v605 = vmul.f32 %v569, %v589
      %v606 = vmul.f32 %v570, %v589
      %v607 = vmul.f32 %v571, %v589
      %v608 = vmul.f32 %v572, %v589
      %v609 = vmul.f32 %v573, %v589
      %v610 = vmul.f32 %v574, %v589
      %v611 = vmul.f32 %v575, %v589
      %v612 = vmul.f32 %v576, %v589
      %v613 = vmul.f32 %v577, %v589
      %v614 = vmul.f32 %v578, %v589
      %v615 = vmul.f32 %v579, %v589
      %v616 = vmul.f32 %v580, %v589
      %v617 = vmul.f32 %v581, %v589
      %v618 = vmul.f32 %v582, %v589
      %v619 = vmul.f32 %v583, %v589
      %v620 = vmul.f32 %v584, %v589
      %v621 = vmul.f32 %v585, %v589
      %v622 = vmul.f32 %v586, %v589
      %v623 = vld [vmem:[%s4] sm:$0x1]
      %v625 = vperm.slane %v623, 0
      %v627 = vadd.f32 %v591, %v625
      %v628 = vadd.f32 %v592, %v625
      %v629 = vadd.f32 %v593, %v625
      %v630 = vadd.f32 %v594, %v625
      %v631 = vadd.f32 %v595, %v625
      %v632 = vadd.f32 %v596, %v625
      %v633 = vadd.f32 %v597, %v625
      %v634 = vadd.f32 %v598, %v625
      %v635 = vadd.f32 %v599, %v625
      %v636 = vadd.f32 %v600, %v625
      %v637 = vadd.f32 %v601, %v625
      %v638 = vadd.f32 %v602, %v625
      %v639 = vadd.f32 %v603, %v625
      %v640 = vadd.f32 %v604, %v625
      %v641 = vadd.f32 %v605, %v625
      %v642 = vadd.f32 %v606, %v625
      %v643 = vadd.f32 %v607, %v625
      %v644 = vadd.f32 %v608, %v625
      %v645 = vadd.f32 %v609, %v625
      %v646 = vadd.f32 %v610, %v625
      %v647 = vadd.f32 %v611, %v625
      %v648 = vadd.f32 %v612, %v625
      %v649 = vadd.f32 %v613, %v625
      %v650 = vadd.f32 %v614, %v625
      %v651 = vadd.f32 %v615, %v625
      %v652 = vadd.f32 %v616, %v625
      %v653 = vadd.f32 %v617, %v625
      %v654 = vadd.f32 %v618, %v625
      %v655 = vadd.f32 %v619, %v625
      %v656 = vadd.f32 %v620, %v625
      %v657 = vadd.f32 %v621, %v625
      %v658 = vadd.f32 %v622, %v625
      %v659 = vmax.f32 %v627, 0.0
      %v660 = vmax.f32 %v628, 0.0
      %v661 = vmax.f32 %v629, 0.0
      %v662 = vmax.f32 %v630, 0.0
      %v663 = vmax.f32 %v631, 0.0
      %v664 = vmax.f32 %v632, 0.0
      %v665 = vmax.f32 %v633, 0.0
      %v666 = vmax.f32 %v634, 0.0
      %v667 = vmax.f32 %v635, 0.0
      %v668 = vmax.f32 %v636, 0.0
      %v669 = vmax.f32 %v637, 0.0
      %v670 = vmax.f32 %v638, 0.0
      %v671 = vmax.f32 %v639, 0.0
      %v672 = vmax.f32 %v640, 0.0
      %v673 = vmax.f32 %v641, 0.0
      %v674 = vmax.f32 %v642, 0.0
      %v675 = vmax.f32 %v643, 0.0
      %v676 = vmax.f32 %v644, 0.0
      %v677 = vmax.f32 %v645, 0.0
      %v678 = vmax.f32 %v646, 0.0
      %v679 = vmax.f32 %v647, 0.0
      %v680 = vmax.f32 %v648, 0.0
      %v681 = vmax.f32 %v649, 0.0
      %v682 = vmax.f32 %v650, 0.0
      %v683 = vmax.f32 %v651, 0.0
      %v684 = vmax.f32 %v652, 0.0
      %v685 = vmax.f32 %v653, 0.0
      %v686 = vmax.f32 %v654, 0.0
      %v687 = vmax.f32 %v655, 0.0
      %v688 = vmax.f32 %v656, 0.0
      %v689 = vmax.f32 %v657, 0.0
      %v690 = vmax.f32 %v658, 0.0
      %v691 = vld [vmem:[%s5] sm:$0xf]
      %v692 = vld [vmem:[%s6] sm:$0x1]
      %v694 = vperm.slane %v692, 0
      %vm696 = vcmask 31744
      %v698 = vsel %vm696, %v659, 0
      %v701 = vsel %vm696, %v660, 0
      %v704 = vsel %vm696, %v661, 0
      %v707 = vsel %vm696, %v662, 0
      %v710 = vsel %vm696, %v663, 0
      %v713 = vsel %vm696, %v664, 0
      %v716 = vsel %vm696, %v665, 0
      %v719 = vsel %vm696, %v666, 0
      %v722 = vsel %vm696, %v667, 0
      %v725 = vsel %vm696, %v668, 0
      %v728 = vsel %vm696, %v669, 0
      %v731 = vsel %vm696, %v670, 0
      %v734 = vsel %vm696, %v671, 0
      %v737 = vsel %vm696, %v672, 0
      %v740 = vsel %vm696, %v673, 0
      %v743 = vsel %vm696, %v674, 0
      %v746 = vsel %vm696, %v675, 0
      %v749 = vsel %vm696, %v676, 0
      %v752 = vsel %vm696, %v677, 0
      %v755 = vsel %vm696, %v678, 0
      %v758 = vsel %vm696, %v679, 0
      %v761 = vsel %vm696, %v680, 0
      %v764 = vsel %vm696, %v681, 0
      %v767 = vsel %vm696, %v682, 0
      %v770 = vsel %vm696, %v683, 0
      %v773 = vsel %vm696, %v684, 0
      %v776 = vsel %vm696, %v685, 0
      %v779 = vsel %vm696, %v686, 0
      %v782 = vsel %vm696, %v687, 0
      %v785 = vsel %vm696, %v688, 0
      %v788 = vsel %vm696, %v689, 0
      %v791 = vsel %vm696, %v690, 0
      %vm793 = vcmask 1043456
      %v795 = vsel %vm793, %v691, 0
      %797 = vmatpush.msra.mxu0 0.0
      %798 = vmatpush.msra.mxu0 0.0
      %799 = vmatpush.msra.mxu0 0.0
      %800 = vmatpush.msra.mxu0 0.0
      %801 = vmatpush.msra.mxu0 0.0
      %802 = vmatpush.msra.mxu0 0.0
      %803 = vmatpush.msra.mxu0 0.0
      %804 = vmatpush.msra.mxu0 0.0
      %805 = vmatpush.msra.mxu0 0.0
      %806 = vmatpush.msra.mxu0 0.0
      %807 = vmatpush.msra.mxu0 0.0
      %808 = vmatpush.msra.mxu0 0.0
      %809 = vmatpush.msra.mxu0 0.0
      %810 = vmatpush.msra.mxu0 0.0
      %811 = vmatpush.msra.mxu0 0.0
      %812 = vmatpush.msra.mxu0 %v795
      %813 = vmatmul.f32.gmra.mxu0 %v698
      %v814 = vpop.f32.mrf.mxu0
      %v815 = vadd.f32 %v694, %v814
      %816 = vmatmul.f32.gmra.mxu0 %v701
      %v817 = vpop.f32.mrf.mxu0
      %v818 = vadd.f32 %v694, %v817
      %819 = vmatmul.f32.gmra.mxu0 %v704
      %v820 = vpop.f32.mrf.mxu0
      %v821 = vadd.f32 %v694, %v820
      %822 = vmatmul.f32.gmra.mxu0 %v707
      %v823 = vpop.f32.mrf.mxu0
      %v824 = vadd.f32 %v694, %v823
      %825 = vmatmul.f32.gmra.mxu0 %v710
      %v826 = vpop.f32.mrf.mxu0
      %v827 = vadd.f32 %v694, %v826
      %828 = vmatmul.f32.gmra.mxu0 %v713
      %v829 = vpop.f32.mrf.mxu0
      %v830 = vadd.f32 %v694, %v829
      %831 = vmatmul.f32.gmra.mxu0 %v716
      %v832 = vpop.f32.mrf.mxu0
      %v833 = vadd.f32 %v694, %v832
      %834 = vmatmul.f32.gmra.mxu0 %v719
      %v835 = vpop.f32.mrf.mxu0
      %v836 = vadd.f32 %v694, %v835
      %837 = vmatmul.f32.gmra.mxu0 %v722
      %v838 = vpop.f32.mrf.mxu0
      %v839 = vadd.f32 %v694, %v838
      %840 = vmatmul.f32.gmra.mxu0 %v725
      %v841 = vpop.f32.mrf.mxu0
      %v842 = vadd.f32 %v694, %v841
      %843 = vmatmul.f32.gmra.mxu0 %v728
      %v844 = vpop.f32.mrf.mxu0
      %v845 = vadd.f32 %v694, %v844
      %846 = vmatmul.f32.gmra.mxu0 %v731
      %v847 = vpop.f32.mrf.mxu0
      %v848 = vadd.f32 %v694, %v847
      %849 = vmatmul.f32.gmra.mxu0 %v734
      %v850 = vpop.f32.mrf.mxu0
      %v851 = vadd.f32 %v694, %v850
      %852 = vmatmul.f32.gmra.mxu0 %v737
      %v853 = vpop.f32.mrf.mxu0
      %v854 = vadd.f32 %v694, %v853
      %855 = vmatmul.f32.gmra.mxu0 %v740
      %v856 = vpop.f32.mrf.mxu0
      %v857 = vadd.f32 %v694, %v856
      %858 = vmatmul.f32.gmra.mxu0 %v743
      %v859 = vpop.f32.mrf.mxu0
      %v860 = vadd.f32 %v694, %v859
      %861 = vmatmul.f32.gmra.mxu0 %v746
      %v862 = vpop.f32.mrf.mxu0
      %v863 = vadd.f32 %v694, %v862
      %864 = vmatmul.f32.gmra.mxu0 %v749
      %v865 = vpop.f32.mrf.mxu0
      %v866 = vadd.f32 %v694, %v865
      %867 = vmatmul.f32.gmra.mxu0 %v752
      %v868 = vpop.f32.mrf.mxu0
      %v869 = vadd.f32 %v694, %v868
      %870 = vmatmul.f32.gmra.mxu0 %v755
      %v871 = vpop.f32.mrf.mxu0
      %v872 = vadd.f32 %v694, %v871
      %873 = vmatmul.f32.gmra.mxu0 %v758
      %v874 = vpop.f32.mrf.mxu0
      %v875 = vadd.f32 %v694, %v874
      %876 = vmatmul.f32.gmra.mxu0 %v761
      %v877 = vpop.f32.mrf.mxu0
      %v878 = vadd.f32 %v694, %v877
      %879 = vmatmul.f32.gmra.mxu0 %v764
      %v880 = vpop.f32.mrf.mxu0
      %v881 = vadd.f32 %v694, %v880
      %882 = vmatmul.f32.gmra.mxu0 %v767
      %v883 = vpop.f32.mrf.mxu0
      %v884 = vadd.f32 %v694, %v883
      %885 = vmatmul.f32.gmra.mxu0 %v770
      %v886 = vpop.f32.mrf.mxu0
      %v887 = vadd.f32 %v694, %v886
      %888 = vmatmul.f32.gmra.mxu0 %v773
      %v889 = vpop.f32.mrf.mxu0
      %v890 = vadd.f32 %v694, %v889
      %891 = vmatmul.f32.gmra.mxu0 %v776
      %v892 = vpop.f32.mrf.mxu0
      %v893 = vadd.f32 %v694, %v892
      %894 = vmatmul.f32.gmra.mxu0 %v779
      %v895 = vpop.f32.mrf.mxu0
      %v896 = vadd.f32 %v694, %v895
      %897 = vmatmul.f32.gmra.mxu0 %v782
      %v898 = vpop.f32.mrf.mxu0
      %v899 = vadd.f32 %v694, %v898
      %900 = vmatmul.f32.gmra.mxu0 %v785
      %v901 = vpop.f32.mrf.mxu0
      %v902 = vadd.f32 %v694, %v901
      %903 = vmatmul.f32.gmra.mxu0 %v788
      %v904 = vpop.f32.mrf.mxu0
      %v905 = vadd.f32 %v694, %v904
      %906 = vmatmul.f32.gmra.mxu0 %v791
      %v907 = vpop.f32.mrf.mxu0
      %v908 = vadd.f32 %v694, %v907
      %909 = vdwg.mxu0
      %v910 = vmax.f32 %v815, 0.0
      %v911 = vmax.f32 %v818, 0.0
      %v912 = vmax.f32 %v821, 0.0
      %v913 = vmax.f32 %v824, 0.0
      %v914 = vmax.f32 %v827, 0.0
      %v915 = vmax.f32 %v830, 0.0
      %v916 = vmax.f32 %v833, 0.0
      %v917 = vmax.f32 %v836, 0.0
      %v918 = vmax.f32 %v839, 0.0
      %v919 = vmax.f32 %v842, 0.0
      %v920 = vmax.f32 %v845, 0.0
      %v921 = vmax.f32 %v848, 0.0
      %v922 = vmax.f32 %v851, 0.0
      %v923 = vmax.f32 %v854, 0.0
      %v924 = vmax.f32 %v857, 0.0
      %v925 = vmax.f32 %v860, 0.0
      %v926 = vmax.f32 %v863, 0.0
      %v927 = vmax.f32 %v866, 0.0
      %v928 = vmax.f32 %v869, 0.0
      %v929 = vmax.f32 %v872, 0.0
      %v930 = vmax.f32 %v875, 0.0
      %v931 = vmax.f32 %v878, 0.0
      %v932 = vmax.f32 %v881, 0.0
      %v933 = vmax.f32 %v884, 0.0
      %v934 = vmax.f32 %v887, 0.0
      %v935 = vmax.f32 %v890, 0.0
      %v936 = vmax.f32 %v893, 0.0
      %v937 = vmax.f32 %v896, 0.0
      %v938 = vmax.f32 %v899, 0.0
      %v939 = vmax.f32 %v902, 0.0
      %v940 = vmax.f32 %v905, 0.0
      %v941 = vmax.f32 %v908, 0.0
      %v942 = vld [vmem:[%s522] sm:$0xff]
      %v943 = vld [vmem:[%s522 + $0x8] sm:$0xff]
      %v944 = vmul.f32 %v942, %v589
      %v945 = vmul.f32 %v943, %v589
      %v946 = vadd.f32 %v944, %v625
      %v947 = vadd.f32 %v945, %v625
      %v948 = vmax.f32 %v946, 0.0
      %v949 = vmax.f32 %v947, 0.0
      %v951 = vsel %vm696, %v948, 0
      %v954 = vsel %vm696, %v949, 0
      %956 = vmatpush.msra.mxu0 0.0
      %957 = vmatpush.msra.mxu0 0.0
      %958 = vmatpush.msra.mxu0 0.0
      %959 = vmatpush.msra.mxu0 0.0
      %960 = vmatpush.msra.mxu0 0.0
      %961 = vmatpush.msra.mxu0 0.0
      %962 = vmatpush.msra.mxu0 0.0
      %963 = vmatpush.msra.mxu0 0.0
      %964 = vmatpush.msra.mxu0 0.0
      %965 = vmatpush.msra.mxu0 0.0
      %966 = vmatpush.msra.mxu0 0.0
      %967 = vmatpush.msra.mxu0 0.0
      %968 = vmatpush.msra.mxu0 0.0
      %969 = vmatpush.msra.mxu0 0.0
      %970 = vmatpush.msra.mxu0 0.0
      %971 = vmatpush.msra.mxu0 %v795
      %972 = vmatmul.f32.gmra.mxu0 %v951
      %v973 = vpop.f32.mrf.mxu0
      %v974 = vadd.f32 %v694, %v973
      %975 = vmatmul.f32.gmra.mxu0 %v954
      %v976 = vpop.f32.mrf.mxu0
      %v977 = vadd.f32 %v694, %v976
      %978 = vdwg.mxu0
      %v979 = vmax.f32 %v974, 0.0
      %v980 = vmax.f32 %v977, 0.0
      %p981 = scmp.gt.s32.totalorder %s27, 0
      %s982 = scalar_select %p981, 1, 0
      %s983 = scvt.s32.f32 %s982
      %v984 = vstv %s983
      %v985 = vmul.f32 %v979, %v984
      %v986 = vmul.f32 %v980, %v984
      %v987 = vld [vmem:[%s539] sm:$0xff]
      %v988 = vld [vmem:[%s539 + $0x8] sm:$0xff]
      %v989 = vmul.f32 %v987, %v589
      %v990 = vmul.f32 %v988, %v589
      %v991 = vadd.f32 %v989, %v625
      %v992 = vadd.f32 %v990, %v625
      %v993 = vmax.f32 %v991, 0.0
      %v994 = vmax.f32 %v992, 0.0
      %v996 = vsel %vm696, %v993, 0
      %v999 = vsel %vm696, %v994, 0
      %1001 = vmatpush.msra.mxu0 0.0
      %1002 = vmatpush.msra.mxu0 0.0
      %1003 = vmatpush.msra.mxu0 0.0
      %1004 = vmatpush.msra.mxu0 0.0
      %1005 = vmatpush.msra.mxu0 0.0
      %1006 = vmatpush.msra.mxu0 0.0
      %1007 = vmatpush.msra.mxu0 0.0
      %1008 = vmatpush.msra.mxu0 0.0
      %1009 = vmatpush.msra.mxu0 0.0
      %1010 = vmatpush.msra.mxu0 0.0
      %1011 = vmatpush.msra.mxu0 0.0
      %1012 = vmatpush.msra.mxu0 0.0
      %1013 = vmatpush.msra.mxu0 0.0
      %1014 = vmatpush.msra.mxu0 0.0
      %1015 = vmatpush.msra.mxu0 0.0
      %1016 = vmatpush.msra.mxu0 %v795
      %1017 = vmatmul.f32.gmra.mxu0 %v996
      %v1018 = vpop.f32.mrf.mxu0
      %v1019 = vadd.f32 %v694, %v1018
      %1020 = vmatmul.f32.gmra.mxu0 %v999
      %v1021 = vpop.f32.mrf.mxu0
      %v1022 = vadd.f32 %v694, %v1021
      %1023 = vdwg.mxu0
      %v1024 = vmax.f32 %v1019, 0.0
      %v1025 = vmax.f32 %v1022, 0.0
      %p1026 = scmp.lt.s32.totalorder %s27, 0
      %s1027 = scalar_select %p1026, 1, 0
      %s1028 = scvt.s32.f32 %s1027
      %v1029 = vstv %s1028
      %v1030 = vmul.f32 %v1024, %v1029
      %v1031 = vmul.f32 %v1025, %v1029
      %v1032 = vlaneseq
      %v1033 = vshrl.u32 %v1032, 7
      %v1034 = vadd.s32 %v1033, 8
      %v1035 = vadd.s32 %v1033, 16
      %v1036 = vadd.s32 %v1033, 24
      %v1037 = vadd.s32 %v1033, 32
      %v1038 = vadd.s32 %v1033, 40
      %v1039 = vadd.s32 %v1033, 48
      %v1040 = vadd.s32 %v1033, 56
      %v1041 = vadd.s32 %v1033, 64
      %v1042 = vadd.s32 %v1033, 72
      %v1043 = vadd.s32 %v1033, 80
      %v1044 = vadd.s32 %v1033, 88
      %v1045 = vadd.s32 %v1033, 96
      %v1046 = vadd.s32 %v1033, 104
      %v1047 = vadd.s32 %v1033, 112
      %v1048 = vadd.s32 %v1033, 120
      %v1049 = vadd.s32 %v1033, 128
      %v1050 = vadd.s32 %v1033, 136
      %v1051 = vadd.s32 %v1033, 144
      %v1052 = vadd.s32 %v1033, 152
      %v1053 = vadd.s32 %v1033, 160
      %v1054 = vadd.s32 %v1033, 168
      %v1055 = vadd.s32 %v1033, 176
      %v1056 = vadd.s32 %v1033, 184
      %v1057 = vadd.s32 %v1033, 192
      %v1058 = vadd.s32 %v1033, 200
      %v1059 = vadd.s32 %v1033, 208
      %v1060 = vadd.s32 %v1033, 216
      %v1061 = vadd.s32 %v1033, 224
      %v1062 = vadd.s32 %v1033, 232
      %v1063 = vadd.s32 %v1033, 240
      %v1064 = vadd.s32 %v1033, 248
      %v1065 = vadd.s32 %v1033, 256
      %v1066 = vadd.s32 %v1033, 264
      %v1067 = vadd.s32 %v1033, 272
      %v1068 = vadd.s32 %v1033, 280
      %vm1069 = vcmp.lt.s32.totalorder %v1033, 0
      %v1070 = vsub.s32 0, %v1033
      %v1071 = vsel %vm1069, %v1070, %v1033
      %v1072 = vshrl.u32 %v1071, 4
      %v1073 = vand.u32 %v1071, 15
      %v1074 = vsub.s32 0, %v1073
      %v1075 = vsel %vm1069, %v1074, %v1073
      %vm1076 = vcmp.lt.s32.totalorder %v1034, 0
      %v1077 = vsub.s32 0, %v1034
      %v1078 = vsel %vm1076, %v1077, %v1034
      %v1079 = vshrl.u32 %v1078, 4
      %v1080 = vand.u32 %v1078, 15
      %v1081 = vsub.s32 0, %v1080
      %v1082 = vsel %vm1076, %v1081, %v1080
      %vm1083 = vcmp.lt.s32.totalorder %v1035, 0
      %v1084 = vsub.s32 0, %v1035
      %v1085 = vsel %vm1083, %v1084, %v1035
      %v1086 = vshrl.u32 %v1085, 4
      %v1087 = vand.u32 %v1085, 15
      %v1088 = vsub.s32 0, %v1087
      %v1089 = vsel %vm1083, %v1088, %v1087
      %vm1090 = vcmp.lt.s32.totalorder %v1036, 0
      %v1091 = vsub.s32 0, %v1036
      %v1092 = vsel %vm1090, %v1091, %v1036
      %v1093 = vshrl.u32 %v1092, 4
      %v1094 = vand.u32 %v1092, 15
      %v1095 = vsub.s32 0, %v1094
      %v1096 = vsel %vm1090, %v1095, %v1094
      %vm1097 = vcmp.lt.s32.totalorder %v1037, 0
      %v1098 = vsub.s32 0, %v1037
      %v1099 = vsel %vm1097, %v1098, %v1037
      %v1100 = vshrl.u32 %v1099, 4
      %v1101 = vand.u32 %v1099, 15
      %v1102 = vsub.s32 0, %v1101
      %v1103 = vsel %vm1097, %v1102, %v1101
      %vm1104 = vcmp.lt.s32.totalorder %v1038, 0
      %v1105 = vsub.s32 0, %v1038
      %v1106 = vsel %vm1104, %v1105, %v1038
      %v1107 = vshrl.u32 %v1106, 4
      %v1108 = vand.u32 %v1106, 15
      %v1109 = vsub.s32 0, %v1108
      %v1110 = vsel %vm1104, %v1109, %v1108
      %vm1111 = vcmp.lt.s32.totalorder %v1039, 0
      %v1112 = vsub.s32 0, %v1039
      %v1113 = vsel %vm1111, %v1112, %v1039
      %v1114 = vshrl.u32 %v1113, 4
      %v1115 = vand.u32 %v1113, 15
      %v1116 = vsub.s32 0, %v1115
      %v1117 = vsel %vm1111, %v1116, %v1115
      %vm1118 = vcmp.lt.s32.totalorder %v1040, 0
      %v1119 = vsub.s32 0, %v1040
      %v1120 = vsel %vm1118, %v1119, %v1040
      %v1121 = vshrl.u32 %v1120, 4
      %v1122 = vand.u32 %v1120, 15
      %v1123 = vsub.s32 0, %v1122
      %v1124 = vsel %vm1118, %v1123, %v1122
      %vm1125 = vcmp.lt.s32.totalorder %v1041, 0
      %v1126 = vsub.s32 0, %v1041
      %v1127 = vsel %vm1125, %v1126, %v1041
      %v1128 = vshrl.u32 %v1127, 4
      %v1129 = vand.u32 %v1127, 15
      %v1130 = vsub.s32 0, %v1129
      %v1131 = vsel %vm1125, %v1130, %v1129
      %vm1132 = vcmp.lt.s32.totalorder %v1042, 0
      %v1133 = vsub.s32 0, %v1042
      %v1134 = vsel %vm1132, %v1133, %v1042
      %v1135 = vshrl.u32 %v1134, 4
      %v1136 = vand.u32 %v1134, 15
      %v1137 = vsub.s32 0, %v1136
      %v1138 = vsel %vm1132, %v1137, %v1136
      %vm1139 = vcmp.lt.s32.totalorder %v1043, 0
      %v1140 = vsub.s32 0, %v1043
      %v1141 = vsel %vm1139, %v1140, %v1043
      %v1142 = vshrl.u32 %v1141, 4
      %v1143 = vand.u32 %v1141, 15
      %v1144 = vsub.s32 0, %v1143
      %v1145 = vsel %vm1139, %v1144, %v1143
      %vm1146 = vcmp.lt.s32.totalorder %v1044, 0
      %v1147 = vsub.s32 0, %v1044
      %v1148 = vsel %vm1146, %v1147, %v1044
      %v1149 = vshrl.u32 %v1148, 4
      %v1150 = vand.u32 %v1148, 15
      %v1151 = vsub.s32 0, %v1150
      %v1152 = vsel %vm1146, %v1151, %v1150
      %vm1153 = vcmp.lt.s32.totalorder %v1045, 0
      %v1154 = vsub.s32 0, %v1045
      %v1155 = vsel %vm1153, %v1154, %v1045
      %v1156 = vshrl.u32 %v1155, 4
      %v1157 = vand.u32 %v1155, 15
      %v1158 = vsub.s32 0, %v1157
      %v1159 = vsel %vm1153, %v1158, %v1157
      %vm1160 = vcmp.lt.s32.totalorder %v1046, 0
      %v1161 = vsub.s32 0, %v1046
      %v1162 = vsel %vm1160, %v1161, %v1046
      %v1163 = vshrl.u32 %v1162, 4
      %v1164 = vand.u32 %v1162, 15
      %v1165 = vsub.s32 0, %v1164
      %v1166 = vsel %vm1160, %v1165, %v1164
      %vm1167 = vcmp.lt.s32.totalorder %v1047, 0
      %v1168 = vsub.s32 0, %v1047
      %v1169 = vsel %vm1167, %v1168, %v1047
      %v1170 = vshrl.u32 %v1169, 4
      %v1171 = vand.u32 %v1169, 15
      %v1172 = vsub.s32 0, %v1171
      %v1173 = vsel %vm1167, %v1172, %v1171
      %vm1174 = vcmp.lt.s32.totalorder %v1048, 0
      %v1175 = vsub.s32 0, %v1048
      %v1176 = vsel %vm1174, %v1175, %v1048
      %v1177 = vshrl.u32 %v1176, 4
      %v1178 = vand.u32 %v1176, 15
      %v1179 = vsub.s32 0, %v1178
      %v1180 = vsel %vm1174, %v1179, %v1178
      %vm1181 = vcmp.lt.s32.totalorder %v1049, 0
      %v1182 = vsub.s32 0, %v1049
      %v1183 = vsel %vm1181, %v1182, %v1049
      %v1184 = vshrl.u32 %v1183, 4
      %v1185 = vand.u32 %v1183, 15
      %v1186 = vsub.s32 0, %v1185
      %v1187 = vsel %vm1181, %v1186, %v1185
      %vm1188 = vcmp.lt.s32.totalorder %v1050, 0
      %v1189 = vsub.s32 0, %v1050
      %v1190 = vsel %vm1188, %v1189, %v1050
      %v1191 = vshrl.u32 %v1190, 4
      %v1192 = vand.u32 %v1190, 15
      %v1193 = vsub.s32 0, %v1192
      %v1194 = vsel %vm1188, %v1193, %v1192
      %vm1195 = vcmp.lt.s32.totalorder %v1051, 0
      %v1196 = vsub.s32 0, %v1051
      %v1197 = vsel %vm1195, %v1196, %v1051
      %v1198 = vshrl.u32 %v1197, 4
      %v1199 = vand.u32 %v1197, 15
      %v1200 = vsub.s32 0, %v1199
      %v1201 = vsel %vm1195, %v1200, %v1199
      %vm1202 = vcmp.lt.s32.totalorder %v1052, 0
      %v1203 = vsub.s32 0, %v1052
      %v1204 = vsel %vm1202, %v1203, %v1052
      %v1205 = vshrl.u32 %v1204, 4
      %v1206 = vand.u32 %v1204, 15
      %v1207 = vsub.s32 0, %v1206
      %v1208 = vsel %vm1202, %v1207, %v1206
      %vm1209 = vcmp.lt.s32.totalorder %v1053, 0
      %v1210 = vsub.s32 0, %v1053
      %v1211 = vsel %vm1209, %v1210, %v1053
      %v1212 = vshrl.u32 %v1211, 4
      %v1213 = vand.u32 %v1211, 15
      %v1214 = vsub.s32 0, %v1213
      %v1215 = vsel %vm1209, %v1214, %v1213
      %vm1216 = vcmp.lt.s32.totalorder %v1054, 0
      %v1217 = vsub.s32 0, %v1054
      %v1218 = vsel %vm1216, %v1217, %v1054
      %v1219 = vshrl.u32 %v1218, 4
      %v1220 = vand.u32 %v1218, 15
      %v1221 = vsub.s32 0, %v1220
      %v1222 = vsel %vm1216, %v1221, %v1220
      %vm1223 = vcmp.lt.s32.totalorder %v1055, 0
      %v1224 = vsub.s32 0, %v1055
      %v1225 = vsel %vm1223, %v1224, %v1055
      %v1226 = vshrl.u32 %v1225, 4
      %v1227 = vand.u32 %v1225, 15
      %v1228 = vsub.s32 0, %v1227
      %v1229 = vsel %vm1223, %v1228, %v1227
      %vm1230 = vcmp.lt.s32.totalorder %v1056, 0
      %v1231 = vsub.s32 0, %v1056
      %v1232 = vsel %vm1230, %v1231, %v1056
      %v1233 = vshrl.u32 %v1232, 4
      %v1234 = vand.u32 %v1232, 15
      %v1235 = vsub.s32 0, %v1234
      %v1236 = vsel %vm1230, %v1235, %v1234
      %vm1237 = vcmp.lt.s32.totalorder %v1057, 0
      %v1238 = vsub.s32 0, %v1057
      %v1239 = vsel %vm1237, %v1238, %v1057
      %v1240 = vshrl.u32 %v1239, 4
      %v1241 = vand.u32 %v1239, 15
      %v1242 = vsub.s32 0, %v1241
      %v1243 = vsel %vm1237, %v1242, %v1241
      %vm1244 = vcmp.lt.s32.totalorder %v1058, 0
      %v1245 = vsub.s32 0, %v1058
      %v1246 = vsel %vm1244, %v1245, %v1058
      %v1247 = vshrl.u32 %v1246, 4
      %v1248 = vand.u32 %v1246, 15
      %v1249 = vsub.s32 0, %v1248
      %v1250 = vsel %vm1244, %v1249, %v1248
      %vm1251 = vcmp.lt.s32.totalorder %v1059, 0
      %v1252 = vsub.s32 0, %v1059
      %v1253 = vsel %vm1251, %v1252, %v1059
      %v1254 = vshrl.u32 %v1253, 4
      %v1255 = vand.u32 %v1253, 15
      %v1256 = vsub.s32 0, %v1255
      %v1257 = vsel %vm1251, %v1256, %v1255
      %vm1258 = vcmp.lt.s32.totalorder %v1060, 0
      %v1259 = vsub.s32 0, %v1060
      %v1260 = vsel %vm1258, %v1259, %v1060
      %v1261 = vshrl.u32 %v1260, 4
      %v1262 = vand.u32 %v1260, 15
      %v1263 = vsub.s32 0, %v1262
      %v1264 = vsel %vm1258, %v1263, %v1262
      %vm1265 = vcmp.lt.s32.totalorder %v1061, 0
      %v1266 = vsub.s32 0, %v1061
      %v1267 = vsel %vm1265, %v1266, %v1061
      %v1268 = vshrl.u32 %v1267, 4
      %v1269 = vand.u32 %v1267, 15
      %v1270 = vsub.s32 0, %v1269
      %v1271 = vsel %vm1265, %v1270, %v1269
      %vm1272 = vcmp.lt.s32.totalorder %v1062, 0
      %v1273 = vsub.s32 0, %v1062
      %v1274 = vsel %vm1272, %v1273, %v1062
      %v1275 = vshrl.u32 %v1274, 4
      %v1276 = vand.u32 %v1274, 15
      %v1277 = vsub.s32 0, %v1276
      %v1278 = vsel %vm1272, %v1277, %v1276
      %vm1279 = vcmp.lt.s32.totalorder %v1063, 0
      %v1280 = vsub.s32 0, %v1063
      %v1281 = vsel %vm1279, %v1280, %v1063
      %v1282 = vshrl.u32 %v1281, 4
      %v1283 = vand.u32 %v1281, 15
      %v1284 = vsub.s32 0, %v1283
      %v1285 = vsel %vm1279, %v1284, %v1283
      %vm1286 = vcmp.lt.s32.totalorder %v1064, 0
      %v1287 = vsub.s32 0, %v1064
      %v1288 = vsel %vm1286, %v1287, %v1064
      %v1289 = vshrl.u32 %v1288, 4
      %v1290 = vand.u32 %v1288, 15
      %v1291 = vsub.s32 0, %v1290
      %v1292 = vsel %vm1286, %v1291, %v1290
      %vm1293 = vcmp.lt.s32.totalorder %v1065, 0
      %v1294 = vsub.s32 0, %v1065
      %v1295 = vsel %vm1293, %v1294, %v1065
      %v1296 = vshrl.u32 %v1295, 4
      %v1297 = vand.u32 %v1295, 15
      %v1298 = vsub.s32 0, %v1297
      %v1299 = vsel %vm1293, %v1298, %v1297
      %vm1300 = vcmp.lt.s32.totalorder %v1066, 0
      %v1301 = vsub.s32 0, %v1066
      %v1302 = vsel %vm1300, %v1301, %v1066
      %v1303 = vshrl.u32 %v1302, 4
      %v1304 = vand.u32 %v1302, 15
      %v1305 = vsub.s32 0, %v1304
      %v1306 = vsel %vm1300, %v1305, %v1304
      %vm1307 = vcmp.lt.s32.totalorder %v1067, 0
      %v1308 = vsub.s32 0, %v1067
      %v1309 = vsel %vm1307, %v1308, %v1067
      %v1310 = vshrl.u32 %v1309, 4
      %v1311 = vand.u32 %v1309, 15
      %v1312 = vsub.s32 0, %v1311
      %v1313 = vsel %vm1307, %v1312, %v1311
      %vm1314 = vcmp.lt.s32.totalorder %v1068, 0
      %v1315 = vsub.s32 0, %v1068
      %v1316 = vsel %vm1314, %v1315, %v1068
      %v1317 = vshrl.u32 %v1316, 4
      %v1318 = vand.u32 %v1316, 15
      %v1319 = vsub.s32 0, %v1318
      %v1320 = vsel %vm1314, %v1319, %v1318
      %vm1321 = vcmp.ne.s32.totalorder %v1075, 0
      %vm1322 = vcmp.ne.s32.totalorder %v1082, 0
      %vm1323 = vcmp.ne.s32.totalorder %v1089, 0
      %vm1324 = vcmp.ne.s32.totalorder %v1096, 0
      %vm1325 = vcmp.ne.s32.totalorder %v1103, 0
      %vm1326 = vcmp.ne.s32.totalorder %v1110, 0
      %vm1327 = vcmp.ne.s32.totalorder %v1117, 0
      %vm1328 = vcmp.ne.s32.totalorder %v1124, 0
      %vm1329 = vcmp.ne.s32.totalorder %v1131, 0
      %vm1330 = vcmp.ne.s32.totalorder %v1138, 0
      %vm1331 = vcmp.ne.s32.totalorder %v1145, 0
      %vm1332 = vcmp.ne.s32.totalorder %v1152, 0
      %vm1333 = vcmp.ne.s32.totalorder %v1159, 0
      %vm1334 = vcmp.ne.s32.totalorder %v1166, 0
      %vm1335 = vcmp.ne.s32.totalorder %v1173, 0
      %vm1336 = vcmp.ne.s32.totalorder %v1180, 0
      %vm1337 = vcmp.ne.s32.totalorder %v1187, 0
      %vm1338 = vcmp.ne.s32.totalorder %v1194, 0
      %vm1339 = vcmp.ne.s32.totalorder %v1201, 0
      %vm1340 = vcmp.ne.s32.totalorder %v1208, 0
      %vm1341 = vcmp.ne.s32.totalorder %v1215, 0
      %vm1342 = vcmp.ne.s32.totalorder %v1222, 0
      %vm1343 = vcmp.ne.s32.totalorder %v1229, 0
      %vm1344 = vcmp.ne.s32.totalorder %v1236, 0
      %vm1345 = vcmp.ne.s32.totalorder %v1243, 0
      %vm1346 = vcmp.ne.s32.totalorder %v1250, 0
      %vm1347 = vcmp.ne.s32.totalorder %v1257, 0
      %vm1348 = vcmp.ne.s32.totalorder %v1264, 0
      %vm1349 = vcmp.ne.s32.totalorder %v1271, 0
      %vm1350 = vcmp.ne.s32.totalorder %v1278, 0
      %vm1351 = vcmp.ne.s32.totalorder %v1285, 0
      %vm1352 = vcmp.ne.s32.totalorder %v1292, 0
      %vm1353 = vcmp.ne.s32.totalorder %v1299, 0
      %vm1354 = vcmp.ne.s32.totalorder %v1306, 0
      %vm1355 = vcmp.ne.s32.totalorder %v1313, 0
      %vm1356 = vcmp.ne.s32.totalorder %v1320, 0
      %vm1357 = vcmp.lt.s32.totalorder %v1075, 0
      %vm1358 = vcmp.lt.s32.totalorder %v1082, 0
      %vm1359 = vcmp.lt.s32.totalorder %v1089, 0
      %vm1360 = vcmp.lt.s32.totalorder %v1096, 0
      %vm1361 = vcmp.lt.s32.totalorder %v1103, 0
      %vm1362 = vcmp.lt.s32.totalorder %v1110, 0
      %vm1363 = vcmp.lt.s32.totalorder %v1117, 0
      %vm1364 = vcmp.lt.s32.totalorder %v1124, 0
      %vm1365 = vcmp.lt.s32.totalorder %v1131, 0
      %vm1366 = vcmp.lt.s32.totalorder %v1138, 0
      %vm1367 = vcmp.lt.s32.totalorder %v1145, 0
      %vm1368 = vcmp.lt.s32.totalorder %v1152, 0
      %vm1369 = vcmp.lt.s32.totalorder %v1159, 0
      %vm1370 = vcmp.lt.s32.totalorder %v1166, 0
      %vm1371 = vcmp.lt.s32.totalorder %v1173, 0
      %vm1372 = vcmp.lt.s32.totalorder %v1180, 0
      %vm1373 = vcmp.lt.s32.totalorder %v1187, 0
      %vm1374 = vcmp.lt.s32.totalorder %v1194, 0
      %vm1375 = vcmp.lt.s32.totalorder %v1201, 0
      %vm1376 = vcmp.lt.s32.totalorder %v1208, 0
      %vm1377 = vcmp.lt.s32.totalorder %v1215, 0
      %vm1378 = vcmp.lt.s32.totalorder %v1222, 0
      %vm1379 = vcmp.lt.s32.totalorder %v1229, 0
      %vm1380 = vcmp.lt.s32.totalorder %v1236, 0
      %vm1381 = vcmp.lt.s32.totalorder %v1243, 0
      %vm1382 = vcmp.lt.s32.totalorder %v1250, 0
      %vm1383 = vcmp.lt.s32.totalorder %v1257, 0
      %vm1384 = vcmp.lt.s32.totalorder %v1264, 0
      %vm1385 = vcmp.lt.s32.totalorder %v1271, 0
      %vm1386 = vcmp.lt.s32.totalorder %v1278, 0
      %vm1387 = vcmp.lt.s32.totalorder %v1285, 0
      %vm1388 = vcmp.lt.s32.totalorder %v1292, 0
      %vm1389 = vcmp.lt.s32.totalorder %v1299, 0
      %vm1390 = vcmp.lt.s32.totalorder %v1306, 0
      %vm1391 = vcmp.lt.s32.totalorder %v1313, 0
      %vm1392 = vcmp.lt.s32.totalorder %v1320, 0
      %vm1393 = vmand %vm1357, %vm1321
      %vm1394 = vmand %vm1358, %vm1322
      %vm1395 = vmand %vm1359, %vm1323
      %vm1396 = vmand %vm1360, %vm1324
      %vm1397 = vmand %vm1361, %vm1325
      %vm1398 = vmand %vm1362, %vm1326
      %vm1399 = vmand %vm1363, %vm1327
      %vm1400 = vmand %vm1364, %vm1328
      %vm1401 = vmand %vm1365, %vm1329
      %vm1402 = vmand %vm1366, %vm1330
      %vm1403 = vmand %vm1367, %vm1331
      %vm1404 = vmand %vm1368, %vm1332
      %vm1405 = vmand %vm1369, %vm1333
      %vm1406 = vmand %vm1370, %vm1334
      %vm1407 = vmand %vm1371, %vm1335
      %vm1408 = vmand %vm1372, %vm1336
      %vm1409 = vmand %vm1373, %vm1337
      %vm1410 = vmand %vm1374, %vm1338
      %vm1411 = vmand %vm1375, %vm1339
      %vm1412 = vmand %vm1376, %vm1340
      %vm1413 = vmand %vm1377, %vm1341
      %vm1414 = vmand %vm1378, %vm1342
      %vm1415 = vmand %vm1379, %vm1343
      %vm1416 = vmand %vm1380, %vm1344
      %vm1417 = vmand %vm1381, %vm1345
      %vm1418 = vmand %vm1382, %vm1346
      %vm1419 = vmand %vm1383, %vm1347
      %vm1420 = vmand %vm1384, %vm1348
      %vm1421 = vmand %vm1385, %vm1349
      %vm1422 = vmand %vm1386, %vm1350
      %vm1423 = vmand %vm1387, %vm1351
      %vm1424 = vmand %vm1388, %vm1352
      %vm1425 = vmand %vm1389, %vm1353
      %vm1426 = vmand %vm1390, %vm1354
      %vm1427 = vmand %vm1391, %vm1355
      %vm1428 = vmand %vm1392, %vm1356
      %v1429 = vadd.s32 %v1075, 16
      %v1430 = vadd.s32 %v1082, 16
      %v1431 = vadd.s32 %v1089, 16
      %v1432 = vadd.s32 %v1096, 16
      %v1433 = vadd.s32 %v1103, 16
      %v1434 = vadd.s32 %v1110, 16
      %v1435 = vadd.s32 %v1117, 16
      %v1436 = vadd.s32 %v1124, 16
      %v1437 = vadd.s32 %v1131, 16
      %v1438 = vadd.s32 %v1138, 16
      %v1439 = vadd.s32 %v1145, 16
      %v1440 = vadd.s32 %v1152, 16
      %v1441 = vadd.s32 %v1159, 16
      %v1442 = vadd.s32 %v1166, 16
      %v1443 = vadd.s32 %v1173, 16
      %v1444 = vadd.s32 %v1180, 16
      %v1445 = vadd.s32 %v1187, 16
      %v1446 = vadd.s32 %v1194, 16
      %v1447 = vadd.s32 %v1201, 16
      %v1448 = vadd.s32 %v1208, 16
      %v1449 = vadd.s32 %v1215, 16
      %v1450 = vadd.s32 %v1222, 16
      %v1451 = vadd.s32 %v1229, 16
      %v1452 = vadd.s32 %v1236, 16
      %v1453 = vadd.s32 %v1243, 16
      %v1454 = vadd.s32 %v1250, 16
      %v1455 = vadd.s32 %v1257, 16
      %v1456 = vadd.s32 %v1264, 16
      %v1457 = vadd.s32 %v1271, 16
      %v1458 = vadd.s32 %v1278, 16
      %v1459 = vadd.s32 %v1285, 16
      %v1460 = vadd.s32 %v1292, 16
      %v1461 = vadd.s32 %v1299, 16
      %v1462 = vadd.s32 %v1306, 16
      %v1463 = vadd.s32 %v1313, 16
      %v1464 = vadd.s32 %v1320, 16
      %v1465 = vsel %vm1393, %v1429, %v1075
      %v1466 = vsel %vm1394, %v1430, %v1082
      %v1467 = vsel %vm1395, %v1431, %v1089
      %v1468 = vsel %vm1396, %v1432, %v1096
      %v1469 = vsel %vm1397, %v1433, %v1103
      %v1470 = vsel %vm1398, %v1434, %v1110
      %v1471 = vsel %vm1399, %v1435, %v1117
      %v1472 = vsel %vm1400, %v1436, %v1124
      %v1473 = vsel %vm1401, %v1437, %v1131
      %v1474 = vsel %vm1402, %v1438, %v1138
      %v1475 = vsel %vm1403, %v1439, %v1145
      %v1476 = vsel %vm1404, %v1440, %v1152
      %v1477 = vsel %vm1405, %v1441, %v1159
      %v1478 = vsel %vm1406, %v1442, %v1166
      %v1479 = vsel %vm1407, %v1443, %v1173
      %v1480 = vsel %vm1408, %v1444, %v1180
      %v1481 = vsel %vm1409, %v1445, %v1187
      %v1482 = vsel %vm1410, %v1446, %v1194
      %v1483 = vsel %vm1411, %v1447, %v1201
      %v1484 = vsel %vm1412, %v1448, %v1208
      %v1485 = vsel %vm1413, %v1449, %v1215
      %v1486 = vsel %vm1414, %v1450, %v1222
      %v1487 = vsel %vm1415, %v1451, %v1229
      %v1488 = vsel %vm1416, %v1452, %v1236
      %v1489 = vsel %vm1417, %v1453, %v1243
      %v1490 = vsel %vm1418, %v1454, %v1250
      %v1491 = vsel %vm1419, %v1455, %v1257
      %v1492 = vsel %vm1420, %v1456, %v1264
      %v1493 = vsel %vm1421, %v1457, %v1271
      %v1494 = vsel %vm1422, %v1458, %v1278
      %v1495 = vsel %vm1423, %v1459, %v1285
      %v1496 = vsel %vm1424, %v1460, %v1292
      %v1497 = vsel %vm1425, %v1461, %v1299
      %v1498 = vsel %vm1426, %v1462, %v1306
      %v1499 = vsel %vm1427, %v1463, %v1313
      %v1500 = vsel %vm1428, %v1464, %v1320
      %vm1501 = vcmp.eq.s32.totalorder %v1465, 0
      %vm1502 = vcmp.eq.s32.totalorder %v1466, 0
      %vm1503 = vcmp.eq.s32.totalorder %v1467, 0
      %vm1504 = vcmp.eq.s32.totalorder %v1468, 0
      %vm1505 = vcmp.eq.s32.totalorder %v1469, 0
      %vm1506 = vcmp.eq.s32.totalorder %v1470, 0
      %vm1507 = vcmp.eq.s32.totalorder %v1471, 0
      %vm1508 = vcmp.eq.s32.totalorder %v1472, 0
      %vm1509 = vcmp.eq.s32.totalorder %v1473, 0
      %vm1510 = vcmp.eq.s32.totalorder %v1474, 0
      %vm1511 = vcmp.eq.s32.totalorder %v1475, 0
      %vm1512 = vcmp.eq.s32.totalorder %v1476, 0
      %vm1513 = vcmp.eq.s32.totalorder %v1477, 0
      %vm1514 = vcmp.eq.s32.totalorder %v1478, 0
      %vm1515 = vcmp.eq.s32.totalorder %v1479, 0
      %vm1516 = vcmp.eq.s32.totalorder %v1480, 0
      %vm1517 = vcmp.eq.s32.totalorder %v1481, 0
      %vm1518 = vcmp.eq.s32.totalorder %v1482, 0
      %vm1519 = vcmp.eq.s32.totalorder %v1483, 0
      %vm1520 = vcmp.eq.s32.totalorder %v1484, 0
      %vm1521 = vcmp.eq.s32.totalorder %v1485, 0
      %vm1522 = vcmp.eq.s32.totalorder %v1486, 0
      %vm1523 = vcmp.eq.s32.totalorder %v1487, 0
      %vm1524 = vcmp.eq.s32.totalorder %v1488, 0
      %vm1525 = vcmp.eq.s32.totalorder %v1489, 0
      %vm1526 = vcmp.eq.s32.totalorder %v1490, 0
      %vm1527 = vcmp.eq.s32.totalorder %v1491, 0
      %vm1528 = vcmp.eq.s32.totalorder %v1492, 0
      %vm1529 = vcmp.eq.s32.totalorder %v1493, 0
      %vm1530 = vcmp.eq.s32.totalorder %v1494, 0
      %vm1531 = vcmp.eq.s32.totalorder %v1495, 0
      %vm1532 = vcmp.eq.s32.totalorder %v1496, 0
      %vm1533 = vcmp.eq.s32.totalorder %v1497, 0
      %vm1534 = vcmp.eq.s32.totalorder %v1498, 0
      %vm1535 = vcmp.eq.s32.totalorder %v1499, 0
      %vm1536 = vcmp.eq.s32.totalorder %v1500, 0
      %v1537 = vrot.slane %v985, 7
      %v1538 = vrot.slane %v986, 7
      %v1539 = vrot.slane %v910, 7
      %v1540 = vrot.slane %v911, 7
      %v1541 = vrot.slane %v912, 7
      %v1542 = vrot.slane %v913, 7
      %v1543 = vrot.slane %v914, 7
      %v1544 = vrot.slane %v915, 7
      %v1545 = vrot.slane %v916, 7
      %v1546 = vrot.slane %v917, 7
      %v1547 = vrot.slane %v918, 7
      %v1548 = vrot.slane %v919, 7
      %v1549 = vrot.slane %v920, 7
      %v1550 = vrot.slane %v921, 7
      %v1551 = vrot.slane %v922, 7
      %v1552 = vrot.slane %v923, 7
      %v1553 = vrot.slane %v924, 7
      %v1554 = vrot.slane %v925, 7
      %v1555 = vrot.slane %v926, 7
      %v1556 = vrot.slane %v927, 7
      %v1557 = vrot.slane %v928, 7
      %v1558 = vrot.slane %v929, 7
      %v1559 = vrot.slane %v930, 7
      %v1560 = vrot.slane %v931, 7
      %v1561 = vrot.slane %v932, 7
      %v1562 = vrot.slane %v933, 7
      %v1563 = vrot.slane %v934, 7
      %v1564 = vrot.slane %v935, 7
      %v1565 = vrot.slane %v936, 7
      %v1566 = vrot.slane %v937, 7
      %v1567 = vrot.slane %v938, 7
      %v1568 = vrot.slane %v939, 7
      %v1569 = vrot.slane %v940, 7
      %v1570 = vrot.slane %v941, 7
      %v1571 = vrot.slane %v1030, 7
      %v1572 = vrot.slane %v1031, 7
      %vm1573 = vcmp.lt.s32.totalorder %v1033, 1
      %v1574 = vsel %vm1573, %v1571, %v1572
      %v1575 = vsel %vm1573, %v1570, %v1571
      %v1576 = vsel %vm1573, %v1569, %v1570
      %v1577 = vsel %vm1573, %v1568, %v1569
      %v1578 = vsel %vm1573, %v1567, %v1568
      %v1579 = vsel %vm1573, %v1566, %v1567
      %v1580 = vsel %vm1573, %v1565, %v1566
      %v1581 = vsel %vm1573, %v1564, %v1565
      %v1582 = vsel %vm1573, %v1563, %v1564
      %v1583 = vsel %vm1573, %v1562, %v1563
      %v1584 = vsel %vm1573, %v1561, %v1562
      %v1585 = vsel %vm1573, %v1560, %v1561
      %v1586 = vsel %vm1573, %v1559, %v1560
      %v1587 = vsel %vm1573, %v1558, %v1559
      %v1588 = vsel %vm1573, %v1557, %v1558
      %v1589 = vsel %vm1573, %v1556, %v1557
      %v1590 = vsel %vm1573, %v1555, %v1556
      %v1591 = vsel %vm1573, %v1554, %v1555
      %v1592 = vsel %vm1573, %v1553, %v1554
      %v1593 = vsel %vm1573, %v1552, %v1553
      %v1594 = vsel %vm1573, %v1551, %v1552
      %v1595 = vsel %vm1573, %v1550, %v1551
      %v1596 = vsel %vm1573, %v1549, %v1550
      %v1597 = vsel %vm1573, %v1548, %v1549
      %v1598 = vsel %vm1573, %v1547, %v1548
      %v1599 = vsel %vm1573, %v1546, %v1547
      %v1600 = vsel %vm1573, %v1545, %v1546
      %v1601 = vsel %vm1573, %v1544, %v1545
      %v1602 = vsel %vm1573, %v1543, %v1544
      %v1603 = vsel %vm1573, %v1542, %v1543
      %v1604 = vsel %vm1573, %v1541, %v1542
      %v1605 = vsel %vm1573, %v1540, %v1541
      %v1606 = vsel %vm1573, %v1539, %v1540
      %v1607 = vsel %vm1573, %v1538, %v1539
      %v1608 = vsel %vm1573, %v1537, %v1538
      %v1609 = vsel %vm1573, %v1572, %v1537
      %v1610 = vsel %vm1501, 1, 0
      %v1611 = vsel %vm1502, 1, 0
      %v1612 = vsel %vm1503, 1, 0
      %v1613 = vsel %vm1504, 1, 0
      %v1614 = vsel %vm1505, 1, 0
      %v1615 = vsel %vm1506, 1, 0
      %v1616 = vsel %vm1507, 1, 0
      %v1617 = vsel %vm1508, 1, 0
      %v1618 = vsel %vm1509, 1, 0
      %v1619 = vsel %vm1510, 1, 0
      %v1620 = vsel %vm1511, 1, 0
      %v1621 = vsel %vm1512, 1, 0
      %v1622 = vsel %vm1513, 1, 0
      %v1623 = vsel %vm1514, 1, 0
      %v1624 = vsel %vm1515, 1, 0
      %v1625 = vsel %vm1516, 1, 0
      %v1626 = vsel %vm1517, 1, 0
      %v1627 = vsel %vm1518, 1, 0
      %v1628 = vsel %vm1519, 1, 0
      %v1629 = vsel %vm1520, 1, 0
      %v1630 = vsel %vm1521, 1, 0
      %v1631 = vsel %vm1522, 1, 0
      %v1632 = vsel %vm1523, 1, 0
      %v1633 = vsel %vm1524, 1, 0
      %v1634 = vsel %vm1525, 1, 0
      %v1635 = vsel %vm1526, 1, 0
      %v1636 = vsel %vm1527, 1, 0
      %v1637 = vsel %vm1528, 1, 0
      %v1638 = vsel %vm1529, 1, 0
      %v1639 = vsel %vm1530, 1, 0
      %v1640 = vsel %vm1531, 1, 0
      %v1641 = vsel %vm1532, 1, 0
      %v1642 = vsel %vm1533, 1, 0
      %v1643 = vsel %vm1534, 1, 0
      %v1644 = vsel %vm1535, 1, 0
      %v1645 = vsel %vm1536, 1, 0
      %vm1646 = vcmp.eq.s32.totalorder %v1610, 1
      %vm1647 = vcmp.eq.s32.totalorder %v1611, 1
      %vm1648 = vcmp.eq.s32.totalorder %v1612, 1
      %vm1649 = vcmp.eq.s32.totalorder %v1613, 1
      %vm1650 = vcmp.eq.s32.totalorder %v1614, 1
      %vm1651 = vcmp.eq.s32.totalorder %v1615, 1
      %vm1652 = vcmp.eq.s32.totalorder %v1616, 1
      %vm1653 = vcmp.eq.s32.totalorder %v1617, 1
      %vm1654 = vcmp.eq.s32.totalorder %v1618, 1
      %vm1655 = vcmp.eq.s32.totalorder %v1619, 1
      %vm1656 = vcmp.eq.s32.totalorder %v1620, 1
      %vm1657 = vcmp.eq.s32.totalorder %v1621, 1
      %vm1658 = vcmp.eq.s32.totalorder %v1622, 1
      %vm1659 = vcmp.eq.s32.totalorder %v1623, 1
      %vm1660 = vcmp.eq.s32.totalorder %v1624, 1
      %vm1661 = vcmp.eq.s32.totalorder %v1625, 1
      %vm1662 = vcmp.eq.s32.totalorder %v1626, 1
      %vm1663 = vcmp.eq.s32.totalorder %v1627, 1
      %vm1664 = vcmp.eq.s32.totalorder %v1628, 1
      %vm1665 = vcmp.eq.s32.totalorder %v1629, 1
      %vm1666 = vcmp.eq.s32.totalorder %v1630, 1
      %vm1667 = vcmp.eq.s32.totalorder %v1631, 1
      %vm1668 = vcmp.eq.s32.totalorder %v1632, 1
      %vm1669 = vcmp.eq.s32.totalorder %v1633, 1
      %vm1670 = vcmp.eq.s32.totalorder %v1634, 1
      %vm1671 = vcmp.eq.s32.totalorder %v1635, 1
      %vm1672 = vcmp.eq.s32.totalorder %v1636, 1
      %vm1673 = vcmp.eq.s32.totalorder %v1637, 1
      %vm1674 = vcmp.eq.s32.totalorder %v1638, 1
      %vm1675 = vcmp.eq.s32.totalorder %v1639, 1
      %vm1676 = vcmp.eq.s32.totalorder %v1640, 1
      %vm1677 = vcmp.eq.s32.totalorder %v1641, 1
      %vm1678 = vcmp.eq.s32.totalorder %v1642, 1
      %vm1679 = vcmp.eq.s32.totalorder %v1643, 1
      %vm1680 = vcmp.eq.s32.totalorder %v1644, 1
      %vm1681 = vcmp.eq.s32.totalorder %v1645, 1
      %v1682 = vsel %vm1646, 0.0, %v1609
      %v1683 = vsel %vm1647, 0.0, %v1608
      %v1684 = vsel %vm1648, 0.0, %v1607
      %v1685 = vsel %vm1649, 0.0, %v1606
      %v1686 = vsel %vm1650, 0.0, %v1605
      %v1687 = vsel %vm1651, 0.0, %v1604
      %v1688 = vsel %vm1652, 0.0, %v1603
      %v1689 = vsel %vm1653, 0.0, %v1602
      %v1690 = vsel %vm1654, 0.0, %v1601
      %v1691 = vsel %vm1655, 0.0, %v1600
      %v1692 = vsel %vm1656, 0.0, %v1599
      %v1693 = vsel %vm1657, 0.0, %v1598
      %v1694 = vsel %vm1658, 0.0, %v1597
      %v1695 = vsel %vm1659, 0.0, %v1596
      %v1696 = vsel %vm1660, 0.0, %v1595
      %v1697 = vsel %vm1661, 0.0, %v1594
      %v1698 = vsel %vm1662, 0.0, %v1593
      %v1699 = vsel %vm1663, 0.0, %v1592
      %v1700 = vsel %vm1664, 0.0, %v1591
      %v1701 = vsel %vm1665, 0.0, %v1590
      %v1702 = vsel %vm1666, 0.0, %v1589
      %v1703 = vsel %vm1667, 0.0, %v1588
      %v1704 = vsel %vm1668, 0.0, %v1587
      %v1705 = vsel %vm1669, 0.0, %v1586
      %v1706 = vsel %vm1670, 0.0, %v1585
      %v1707 = vsel %vm1671, 0.0, %v1584
      %v1708 = vsel %vm1672, 0.0, %v1583
      %v1709 = vsel %vm1673, 0.0, %v1582
      %v1710 = vsel %vm1674, 0.0, %v1581
      %v1711 = vsel %vm1675, 0.0, %v1580
      %v1712 = vsel %vm1676, 0.0, %v1579
      %v1713 = vsel %vm1677, 0.0, %v1578
      %v1714 = vsel %vm1678, 0.0, %v1577
      %v1715 = vsel %vm1679, 0.0, %v1576
      %v1716 = vsel %vm1680, 0.0, %v1575
      %v1717 = vsel %vm1681, 0.0, %v1574
      %vm1718 = vcmp.eq.s32.totalorder %v1465, 15
      %vm1719 = vcmp.eq.s32.totalorder %v1466, 15
      %vm1720 = vcmp.eq.s32.totalorder %v1467, 15
      %vm1721 = vcmp.eq.s32.totalorder %v1468, 15
      %vm1722 = vcmp.eq.s32.totalorder %v1469, 15
      %vm1723 = vcmp.eq.s32.totalorder %v1470, 15
      %vm1724 = vcmp.eq.s32.totalorder %v1471, 15
      %vm1725 = vcmp.eq.s32.totalorder %v1472, 15
      %vm1726 = vcmp.eq.s32.totalorder %v1473, 15
      %vm1727 = vcmp.eq.s32.totalorder %v1474, 15
      %vm1728 = vcmp.eq.s32.totalorder %v1475, 15
      %vm1729 = vcmp.eq.s32.totalorder %v1476, 15
      %vm1730 = vcmp.eq.s32.totalorder %v1477, 15
      %vm1731 = vcmp.eq.s32.totalorder %v1478, 15
      %vm1732 = vcmp.eq.s32.totalorder %v1479, 15
      %vm1733 = vcmp.eq.s32.totalorder %v1480, 15
      %vm1734 = vcmp.eq.s32.totalorder %v1481, 15
      %vm1735 = vcmp.eq.s32.totalorder %v1482, 15
      %vm1736 = vcmp.eq.s32.totalorder %v1483, 15
      %vm1737 = vcmp.eq.s32.totalorder %v1484, 15
      %vm1738 = vcmp.eq.s32.totalorder %v1485, 15
      %vm1739 = vcmp.eq.s32.totalorder %v1486, 15
      %vm1740 = vcmp.eq.s32.totalorder %v1487, 15
      %vm1741 = vcmp.eq.s32.totalorder %v1488, 15
      %vm1742 = vcmp.eq.s32.totalorder %v1489, 15
      %vm1743 = vcmp.eq.s32.totalorder %v1490, 15
      %vm1744 = vcmp.eq.s32.totalorder %v1491, 15
      %vm1745 = vcmp.eq.s32.totalorder %v1492, 15
      %vm1746 = vcmp.eq.s32.totalorder %v1493, 15
      %vm1747 = vcmp.eq.s32.totalorder %v1494, 15
      %vm1748 = vcmp.eq.s32.totalorder %v1495, 15
      %vm1749 = vcmp.eq.s32.totalorder %v1496, 15
      %vm1750 = vcmp.eq.s32.totalorder %v1497, 15
      %vm1751 = vcmp.eq.s32.totalorder %v1498, 15
      %vm1752 = vcmp.eq.s32.totalorder %v1499, 15
      %vm1753 = vcmp.eq.s32.totalorder %v1500, 15
      %v1754 = vrot.slane %v985, 1
      %v1755 = vrot.slane %v986, 1
      %v1756 = vrot.slane %v910, 1
      %v1757 = vrot.slane %v911, 1
      %v1758 = vrot.slane %v912, 1
      %v1759 = vrot.slane %v913, 1
      %v1760 = vrot.slane %v914, 1
      %v1761 = vrot.slane %v915, 1
      %v1762 = vrot.slane %v916, 1
      %v1763 = vrot.slane %v917, 1
      %v1764 = vrot.slane %v918, 1
      %v1765 = vrot.slane %v919, 1
      %v1766 = vrot.slane %v920, 1
      %v1767 = vrot.slane %v921, 1
      %v1768 = vrot.slane %v922, 1
      %v1769 = vrot.slane %v923, 1
      %v1770 = vrot.slane %v924, 1
      %v1771 = vrot.slane %v925, 1
      %v1772 = vrot.slane %v926, 1
      %v1773 = vrot.slane %v927, 1
      %v1774 = vrot.slane %v928, 1
      %v1775 = vrot.slane %v929, 1
      %v1776 = vrot.slane %v930, 1
      %v1777 = vrot.slane %v931, 1
      %v1778 = vrot.slane %v932, 1
      %v1779 = vrot.slane %v933, 1
      %v1780 = vrot.slane %v934, 1
      %v1781 = vrot.slane %v935, 1
      %v1782 = vrot.slane %v936, 1
      %v1783 = vrot.slane %v937, 1
      %v1784 = vrot.slane %v938, 1
      %v1785 = vrot.slane %v939, 1
      %v1786 = vrot.slane %v940, 1
      %v1787 = vrot.slane %v941, 1
      %v1788 = vrot.slane %v1030, 1
      %v1789 = vrot.slane %v1031, 1
      %vm1790 = vcmp.lt.s32.totalorder %v1033, 7
      %v1791 = vsel %vm1790, %v1788, %v1789
      %v1792 = vsel %vm1790, %v1787, %v1788
      %v1793 = vsel %vm1790, %v1786, %v1787
      %v1794 = vsel %vm1790, %v1785, %v1786
      %v1795 = vsel %vm1790, %v1784, %v1785
      %v1796 = vsel %vm1790, %v1783, %v1784
      %v1797 = vsel %vm1790, %v1782, %v1783
      %v1798 = vsel %vm1790, %v1781, %v1782
      %v1799 = vsel %vm1790, %v1780, %v1781
      %v1800 = vsel %vm1790, %v1779, %v1780
      %v1801 = vsel %vm1790, %v1778, %v1779
      %v1802 = vsel %vm1790, %v1777, %v1778
      %v1803 = vsel %vm1790, %v1776, %v1777
      %v1804 = vsel %vm1790, %v1775, %v1776
      %v1805 = vsel %vm1790, %v1774, %v1775
      %v1806 = vsel %vm1790, %v1773, %v1774
      %v1807 = vsel %vm1790, %v1772, %v1773
      %v1808 = vsel %vm1790, %v1771, %v1772
      %v1809 = vsel %vm1790, %v1770, %v1771
      %v1810 = vsel %vm1790, %v1769, %v1770
      %v1811 = vsel %vm1790, %v1768, %v1769
      %v1812 = vsel %vm1790, %v1767, %v1768
      %v1813 = vsel %vm1790, %v1766, %v1767
      %v1814 = vsel %vm1790, %v1765, %v1766
      %v1815 = vsel %vm1790, %v1764, %v1765
      %v1816 = vsel %vm1790, %v1763, %v1764
      %v1817 = vsel %vm1790, %v1762, %v1763
      %v1818 = vsel %vm1790, %v1761, %v1762
      %v1819 = vsel %vm1790, %v1760, %v1761
      %v1820 = vsel %vm1790, %v1759, %v1760
      %v1821 = vsel %vm1790, %v1758, %v1759
      %v1822 = vsel %vm1790, %v1757, %v1758
      %v1823 = vsel %vm1790, %v1756, %v1757
      %v1824 = vsel %vm1790, %v1755, %v1756
      %v1825 = vsel %vm1790, %v1754, %v1755
      %v1826 = vsel %vm1790, %v1789, %v1754
      %v1827 = vsel %vm1718, 1, 0
      %v1828 = vsel %vm1719, 1, 0
      %v1829 = vsel %vm1720, 1, 0
      %v1830 = vsel %vm1721, 1, 0
      %v1831 = vsel %vm1722, 1, 0
      %v1832 = vsel %vm1723, 1, 0
      %v1833 = vsel %vm1724, 1, 0
      %v1834 = vsel %vm1725, 1, 0
      %v1835 = vsel %vm1726, 1, 0
      %v1836 = vsel %vm1727, 1, 0
      %v1837 = vsel %vm1728, 1, 0
      %v1838 = vsel %vm1729, 1, 0
      %v1839 = vsel %vm1730, 1, 0
      %v1840 = vsel %vm1731, 1, 0
      %v1841 = vsel %vm1732, 1, 0
      %v1842 = vsel %vm1733, 1, 0
      %v1843 = vsel %vm1734, 1, 0
      %v1844 = vsel %vm1735, 1, 0
      %v1845 = vsel %vm1736, 1, 0
      %v1846 = vsel %vm1737, 1, 0
      %v1847 = vsel %vm1738, 1, 0
      %v1848 = vsel %vm1739, 1, 0
      %v1849 = vsel %vm1740, 1, 0
      %v1850 = vsel %vm1741, 1, 0
      %v1851 = vsel %vm1742, 1, 0
      %v1852 = vsel %vm1743, 1, 0
      %v1853 = vsel %vm1744, 1, 0
      %v1854 = vsel %vm1745, 1, 0
      %v1855 = vsel %vm1746, 1, 0
      %v1856 = vsel %vm1747, 1, 0
      %v1857 = vsel %vm1748, 1, 0
      %v1858 = vsel %vm1749, 1, 0
      %v1859 = vsel %vm1750, 1, 0
      %v1860 = vsel %vm1751, 1, 0
      %v1861 = vsel %vm1752, 1, 0
      %v1862 = vsel %vm1753, 1, 0
      %vm1863 = vcmp.eq.s32.totalorder %v1827, 1
      %vm1864 = vcmp.eq.s32.totalorder %v1828, 1
      %vm1865 = vcmp.eq.s32.totalorder %v1829, 1
      %vm1866 = vcmp.eq.s32.totalorder %v1830, 1
      %vm1867 = vcmp.eq.s32.totalorder %v1831, 1
      %vm1868 = vcmp.eq.s32.totalorder %v1832, 1
      %vm1869 = vcmp.eq.s32.totalorder %v1833, 1
      %vm1870 = vcmp.eq.s32.totalorder %v1834, 1
      %vm1871 = vcmp.eq.s32.totalorder %v1835, 1
      %vm1872 = vcmp.eq.s32.totalorder %v1836, 1
      %vm1873 = vcmp.eq.s32.totalorder %v1837, 1
      %vm1874 = vcmp.eq.s32.totalorder %v1838, 1
      %vm1875 = vcmp.eq.s32.totalorder %v1839, 1
      %vm1876 = vcmp.eq.s32.totalorder %v1840, 1
      %vm1877 = vcmp.eq.s32.totalorder %v1841, 1
      %vm1878 = vcmp.eq.s32.totalorder %v1842, 1
      %vm1879 = vcmp.eq.s32.totalorder %v1843, 1
      %vm1880 = vcmp.eq.s32.totalorder %v1844, 1
      %vm1881 = vcmp.eq.s32.totalorder %v1845, 1
      %vm1882 = vcmp.eq.s32.totalorder %v1846, 1
      %vm1883 = vcmp.eq.s32.totalorder %v1847, 1
      %vm1884 = vcmp.eq.s32.totalorder %v1848, 1
      %vm1885 = vcmp.eq.s32.totalorder %v1849, 1
      %vm1886 = vcmp.eq.s32.totalorder %v1850, 1
      %vm1887 = vcmp.eq.s32.totalorder %v1851, 1
      %vm1888 = vcmp.eq.s32.totalorder %v1852, 1
      %vm1889 = vcmp.eq.s32.totalorder %v1853, 1
      %vm1890 = vcmp.eq.s32.totalorder %v1854, 1
      %vm1891 = vcmp.eq.s32.totalorder %v1855, 1
      %vm1892 = vcmp.eq.s32.totalorder %v1856, 1
      %vm1893 = vcmp.eq.s32.totalorder %v1857, 1
      %vm1894 = vcmp.eq.s32.totalorder %v1858, 1
      %vm1895 = vcmp.eq.s32.totalorder %v1859, 1
      %vm1896 = vcmp.eq.s32.totalorder %v1860, 1
      %vm1897 = vcmp.eq.s32.totalorder %v1861, 1
      %vm1898 = vcmp.eq.s32.totalorder %v1862, 1
      %v1899 = vsel %vm1863, 0.0, %v1825
      %v1900 = vsel %vm1864, 0.0, %v1824
      %v1901 = vsel %vm1865, 0.0, %v1823
      %v1902 = vsel %vm1866, 0.0, %v1822
      %v1903 = vsel %vm1867, 0.0, %v1821
      %v1904 = vsel %vm1868, 0.0, %v1820
      %v1905 = vsel %vm1869, 0.0, %v1819
      %v1906 = vsel %vm1870, 0.0, %v1818
      %v1907 = vsel %vm1871, 0.0, %v1817
      %v1908 = vsel %vm1872, 0.0, %v1816
      %v1909 = vsel %vm1873, 0.0, %v1815
      %v1910 = vsel %vm1874, 0.0, %v1814
      %v1911 = vsel %vm1875, 0.0, %v1813
      %v1912 = vsel %vm1876, 0.0, %v1812
      %v1913 = vsel %vm1877, 0.0, %v1811
      %v1914 = vsel %vm1878, 0.0, %v1810
      %v1915 = vsel %vm1879, 0.0, %v1809
      %v1916 = vsel %vm1880, 0.0, %v1808
      %v1917 = vsel %vm1881, 0.0, %v1807
      %v1918 = vsel %vm1882, 0.0, %v1806
      %v1919 = vsel %vm1883, 0.0, %v1805
      %v1920 = vsel %vm1884, 0.0, %v1804
      %v1921 = vsel %vm1885, 0.0, %v1803
      %v1922 = vsel %vm1886, 0.0, %v1802
      %v1923 = vsel %vm1887, 0.0, %v1801
      %v1924 = vsel %vm1888, 0.0, %v1800
      %v1925 = vsel %vm1889, 0.0, %v1799
      %v1926 = vsel %vm1890, 0.0, %v1798
      %v1927 = vsel %vm1891, 0.0, %v1797
      %v1928 = vsel %vm1892, 0.0, %v1796
      %v1929 = vsel %vm1893, 0.0, %v1795
      %v1930 = vsel %vm1894, 0.0, %v1794
      %v1931 = vsel %vm1895, 0.0, %v1793
      %v1932 = vsel %vm1896, 0.0, %v1792
      %v1933 = vsel %vm1897, 0.0, %v1791
      %v1934 = vsel %vm1898, 0.0, %v1826
      %1971 = vrot.lane.b32.xlu0 %v985, 4
      %v1972 = vpop.permute.xlu0 %1971
      %1973 = vrot.lane.b32.xlu0 %v986, 4
      %v1974 = vpop.permute.xlu0 %1973
      %1975 = vrot.lane.b32.xlu0 %v910, 4
      %v1976 = vpop.permute.xlu0 %1975
      %1977 = vrot.lane.b32.xlu0 %v911, 4
      %v1978 = vpop.permute.xlu0 %1977
      %1979 = vrot.lane.b32.xlu0 %v912, 4
      %v1980 = vpop.permute.xlu0 %1979
      %1981 = vrot.lane.b32.xlu0 %v913, 4
      %v1982 = vpop.permute.xlu0 %1981
      %1983 = vrot.lane.b32.xlu0 %v914, 4
      %v1984 = vpop.permute.xlu0 %1983
      %1985 = vrot.lane.b32.xlu0 %v915, 4
      %v1986 = vpop.permute.xlu0 %1985
      %1987 = vrot.lane.b32.xlu0 %v916, 4
      %v1988 = vpop.permute.xlu0 %1987
      %1989 = vrot.lane.b32.xlu0 %v917, 4
      %v1990 = vpop.permute.xlu0 %1989
      %1991 = vrot.lane.b32.xlu0 %v918, 4
      %v1992 = vpop.permute.xlu0 %1991
      %1993 = vrot.lane.b32.xlu0 %v919, 4
      %v1994 = vpop.permute.xlu0 %1993
      %1995 = vrot.lane.b32.xlu0 %v920, 4
      %v1996 = vpop.permute.xlu0 %1995
      %1997 = vrot.lane.b32.xlu0 %v921, 4
      %v1998 = vpop.permute.xlu0 %1997
      %1999 = vrot.lane.b32.xlu0 %v922, 4
      %v2000 = vpop.permute.xlu0 %1999
      %2001 = vrot.lane.b32.xlu0 %v923, 4
      %v2002 = vpop.permute.xlu0 %2001
      %2003 = vrot.lane.b32.xlu0 %v924, 4
      %v2004 = vpop.permute.xlu0 %2003
      %2005 = vrot.lane.b32.xlu0 %v925, 4
      %v2006 = vpop.permute.xlu0 %2005
      %2007 = vrot.lane.b32.xlu0 %v926, 4
      %v2008 = vpop.permute.xlu0 %2007
      %2009 = vrot.lane.b32.xlu0 %v927, 4
      %v2010 = vpop.permute.xlu0 %2009
      %2011 = vrot.lane.b32.xlu0 %v928, 4
      %v2012 = vpop.permute.xlu0 %2011
      %2013 = vrot.lane.b32.xlu0 %v929, 4
      %v2014 = vpop.permute.xlu0 %2013
      %2015 = vrot.lane.b32.xlu0 %v930, 4
      %v2016 = vpop.permute.xlu0 %2015
      %2017 = vrot.lane.b32.xlu0 %v931, 4
      %v2018 = vpop.permute.xlu0 %2017
      %2019 = vrot.lane.b32.xlu0 %v932, 4
      %v2020 = vpop.permute.xlu0 %2019
      %2021 = vrot.lane.b32.xlu0 %v933, 4
      %v2022 = vpop.permute.xlu0 %2021
      %2023 = vrot.lane.b32.xlu0 %v934, 4
      %v2024 = vpop.permute.xlu0 %2023
      %2025 = vrot.lane.b32.xlu0 %v935, 4
      %v2026 = vpop.permute.xlu0 %2025
      %2027 = vrot.lane.b32.xlu0 %v936, 4
      %v2028 = vpop.permute.xlu0 %2027
      %2029 = vrot.lane.b32.xlu0 %v937, 4
      %v2030 = vpop.permute.xlu0 %2029
      %2031 = vrot.lane.b32.xlu0 %v938, 4
      %v2032 = vpop.permute.xlu0 %2031
      %2033 = vrot.lane.b32.xlu0 %v939, 4
      %v2034 = vpop.permute.xlu0 %2033
      %2035 = vrot.lane.b32.xlu0 %v940, 4
      %v2036 = vpop.permute.xlu0 %2035
      %2037 = vrot.lane.b32.xlu0 %v941, 4
      %v2038 = vpop.permute.xlu0 %2037
      %2039 = vrot.lane.b32.xlu0 %v1030, 4
      %v2040 = vpop.permute.xlu0 %2039
      %2041 = vrot.lane.b32.xlu0 %v1031, 4
      %v2042 = vpop.permute.xlu0 %2041
      %2115 = vrot.lane.b32.xlu0 %v1899, 8
      %v2116 = vpop.permute.xlu0 %2115
      %2117 = vrot.lane.b32.xlu0 %v1900, 8
      %v2118 = vpop.permute.xlu0 %2117
      %2119 = vrot.lane.b32.xlu0 %v1901, 8
      %v2120 = vpop.permute.xlu0 %2119
      %2121 = vrot.lane.b32.xlu0 %v1902, 8
      %v2122 = vpop.permute.xlu0 %2121
      %2123 = vrot.lane.b32.xlu0 %v1903, 8
      %v2124 = vpop.permute.xlu0 %2123
      %2125 = vrot.lane.b32.xlu0 %v1904, 8
      %v2126 = vpop.permute.xlu0 %2125
      %2127 = vrot.lane.b32.xlu0 %v1905, 8
      %v2128 = vpop.permute.xlu0 %2127
      %2129 = vrot.lane.b32.xlu0 %v1906, 8
      %v2130 = vpop.permute.xlu0 %2129
      %2131 = vrot.lane.b32.xlu0 %v1907, 8
      %v2132 = vpop.permute.xlu0 %2131
      %2133 = vrot.lane.b32.xlu0 %v1908, 8
      %v2134 = vpop.permute.xlu0 %2133
      %2135 = vrot.lane.b32.xlu0 %v1909, 8
      %v2136 = vpop.permute.xlu0 %2135
      %2137 = vrot.lane.b32.xlu0 %v1910, 8
      %v2138 = vpop.permute.xlu0 %2137
      %2139 = vrot.lane.b32.xlu0 %v1911, 8
      %v2140 = vpop.permute.xlu0 %2139
      %2141 = vrot.lane.b32.xlu0 %v1912, 8
      %v2142 = vpop.permute.xlu0 %2141
      %2143 = vrot.lane.b32.xlu0 %v1913, 8
      %v2144 = vpop.permute.xlu0 %2143
      %2145 = vrot.lane.b32.xlu0 %v1914, 8
      %v2146 = vpop.permute.xlu0 %2145
      %2147 = vrot.lane.b32.xlu0 %v1915, 8
      %v2148 = vpop.permute.xlu0 %2147
      %2149 = vrot.lane.b32.xlu0 %v1916, 8
      %v2150 = vpop.permute.xlu0 %2149
      %2151 = vrot.lane.b32.xlu0 %v1917, 8
      %v2152 = vpop.permute.xlu0 %2151
      %2153 = vrot.lane.b32.xlu0 %v1918, 8
      %v2154 = vpop.permute.xlu0 %2153
      %2155 = vrot.lane.b32.xlu0 %v1919, 8
      %v2156 = vpop.permute.xlu0 %2155
      %2157 = vrot.lane.b32.xlu0 %v1920, 8
      %v2158 = vpop.permute.xlu0 %2157
      %2159 = vrot.lane.b32.xlu0 %v1921, 8
      %v2160 = vpop.permute.xlu0 %2159
      %2161 = vrot.lane.b32.xlu0 %v1922, 8
      %v2162 = vpop.permute.xlu0 %2161
      %2163 = vrot.lane.b32.xlu0 %v1923, 8
      %v2164 = vpop.permute.xlu0 %2163
      %2165 = vrot.lane.b32.xlu0 %v1924, 8
      %v2166 = vpop.permute.xlu0 %2165
      %2167 = vrot.lane.b32.xlu0 %v1925, 8
      %v2168 = vpop.permute.xlu0 %2167
      %2169 = vrot.lane.b32.xlu0 %v1926, 8
      %v2170 = vpop.permute.xlu0 %2169
      %2171 = vrot.lane.b32.xlu0 %v1927, 8
      %v2172 = vpop.permute.xlu0 %2171
      %2173 = vrot.lane.b32.xlu0 %v1928, 8
      %v2174 = vpop.permute.xlu0 %2173
      %2175 = vrot.lane.b32.xlu0 %v1929, 8
      %v2176 = vpop.permute.xlu0 %2175
      %2177 = vrot.lane.b32.xlu0 %v1930, 8
      %v2178 = vpop.permute.xlu0 %2177
      %2179 = vrot.lane.b32.xlu0 %v1931, 8
      %v2180 = vpop.permute.xlu0 %2179
      %2181 = vrot.lane.b32.xlu0 %v1932, 8
      %v2182 = vpop.permute.xlu0 %2181
      %2183 = vrot.lane.b32.xlu0 %v1933, 8
      %v2184 = vpop.permute.xlu0 %2183
      %2185 = vrot.lane.b32.xlu0 %v1934, 8
      %v2186 = vpop.permute.xlu0 %2185
      %v2223 = vsel %vm696, %v1682, %v1972
      %v2224 = vsel %vm696, %v1683, %v1974
      %v2225 = vsel %vm696, %v1684, %v1976
      %v2226 = vsel %vm696, %v1685, %v1978
      %v2227 = vsel %vm696, %v1686, %v1980
      %v2228 = vsel %vm696, %v1687, %v1982
      %v2229 = vsel %vm696, %v1688, %v1984
      %v2230 = vsel %vm696, %v1689, %v1986
      %v2231 = vsel %vm696, %v1690, %v1988
      %v2232 = vsel %vm696, %v1691, %v1990
      %v2233 = vsel %vm696, %v1692, %v1992
      %v2234 = vsel %vm696, %v1693, %v1994
      %v2235 = vsel %vm696, %v1694, %v1996
      %v2236 = vsel %vm696, %v1695, %v1998
      %v2237 = vsel %vm696, %v1696, %v2000
      %v2238 = vsel %vm696, %v1697, %v2002
      %v2239 = vsel %vm696, %v1698, %v2004
      %v2240 = vsel %vm696, %v1699, %v2006
      %v2241 = vsel %vm696, %v1700, %v2008
      %v2242 = vsel %vm696, %v1701, %v2010
      %v2243 = vsel %vm696, %v1702, %v2012
      %v2244 = vsel %vm696, %v1703, %v2014
      %v2245 = vsel %vm696, %v1704, %v2016
      %v2246 = vsel %vm696, %v1705, %v2018
      %v2247 = vsel %vm696, %v1706, %v2020
      %v2248 = vsel %vm696, %v1707, %v2022
      %v2249 = vsel %vm696, %v1708, %v2024
      %v2250 = vsel %vm696, %v1709, %v2026
      %v2251 = vsel %vm696, %v1710, %v2028
      %v2252 = vsel %vm696, %v1711, %v2030
      %v2253 = vsel %vm696, %v1712, %v2032
      %v2254 = vsel %vm696, %v1713, %v2034
      %v2255 = vsel %vm696, %v1714, %v2036
      %v2256 = vsel %vm696, %v1715, %v2038
      %v2257 = vsel %vm696, %v1716, %v2040
      %v2258 = vsel %vm696, %v1717, %v2042
      %vm2259 = vcmask 64512
      %v2260 = vsel %vm2259, %v2223, %v2116
      %v2261 = vsel %vm2259, %v2224, %v2118
      %v2262 = vsel %vm2259, %v2225, %v2120
      %v2263 = vsel %vm2259, %v2226, %v2122
      %v2264 = vsel %vm2259, %v2227, %v2124
      %v2265 = vsel %vm2259, %v2228, %v2126
      %v2266 = vsel %vm2259, %v2229, %v2128
      %v2267 = vsel %vm2259, %v2230, %v2130
      %v2268 = vsel %vm2259, %v2231, %v2132
      %v2269 = vsel %vm2259, %v2232, %v2134
      %v2270 = vsel %vm2259, %v2233, %v2136
      %v2271 = vsel %vm2259, %v2234, %v2138
      %v2272 = vsel %vm2259, %v2235, %v2140
      %v2273 = vsel %vm2259, %v2236, %v2142
      %v2274 = vsel %vm2259, %v2237, %v2144
      %v2275 = vsel %vm2259, %v2238, %v2146
      %v2276 = vsel %vm2259, %v2239, %v2148
      %v2277 = vsel %vm2259, %v2240, %v2150
      %v2278 = vsel %vm2259, %v2241, %v2152
      %v2279 = vsel %vm2259, %v2242, %v2154
      %v2280 = vsel %vm2259, %v2243, %v2156
      %v2281 = vsel %vm2259, %v2244, %v2158
      %v2282 = vsel %vm2259, %v2245, %v2160
      %v2283 = vsel %vm2259, %v2246, %v2162
      %v2284 = vsel %vm2259, %v2247, %v2164
      %v2285 = vsel %vm2259, %v2248, %v2166
      %v2286 = vsel %vm2259, %v2249, %v2168
      %v2287 = vsel %vm2259, %v2250, %v2170
      %v2288 = vsel %vm2259, %v2251, %v2172
      %v2289 = vsel %vm2259, %v2252, %v2174
      %v2290 = vsel %vm2259, %v2253, %v2176
      %v2291 = vsel %vm2259, %v2254, %v2178
      %v2292 = vsel %vm2259, %v2255, %v2180
      %v2293 = vsel %vm2259, %v2256, %v2182
      %v2294 = vsel %vm2259, %v2257, %v2184
      %v2295 = vsel %vm2259, %v2258, %v2186
      %v2296 = vld [vmem:[%s7] sm:$0xff]
      %v2297 = vld [vmem:[%s7 + $0x8] sm:$0xf]
      %s2298 = scalar_lea.vmem %s7, 16
      %v2299 = vld [vmem:[%s2298] sm:$0xff]
      %v2300 = vld [vmem:[%s2298 + $0x8] sm:$0xf]
      %vm2301 = vcmask 97280
      %v2303 = vsel %vm2301, %v2262, 0
      %v2306 = vsel %vm2301, %v2263, 0
      %v2309 = vsel %vm2301, %v2264, 0
      %v2312 = vsel %vm2301, %v2265, 0
      %v2315 = vsel %vm2301, %v2266, 0
      %v2318 = vsel %vm2301, %v2267, 0
      %v2321 = vsel %vm2301, %v2268, 0
      %v2324 = vsel %vm2301, %v2269, 0
      %v2327 = vsel %vm2301, %v2270, 0
      %v2330 = vsel %vm2301, %v2271, 0
      %v2333 = vsel %vm2301, %v2272, 0
      %v2336 = vsel %vm2301, %v2273, 0
      %v2339 = vsel %vm2301, %v2274, 0
      %v2342 = vsel %vm2301, %v2275, 0
      %v2345 = vsel %vm2301, %v2276, 0
      %v2348 = vsel %vm2301, %v2277, 0
      %v2351 = vsel %vm2301, %v2278, 0
      %v2354 = vsel %vm2301, %v2279, 0
      %v2357 = vsel %vm2301, %v2280, 0
      %v2360 = vsel %vm2301, %v2281, 0
      %v2363 = vsel %vm2301, %v2282, 0
      %v2366 = vsel %vm2301, %v2283, 0
      %v2369 = vsel %vm2301, %v2284, 0
      %v2372 = vsel %vm2301, %v2285, 0
      %v2375 = vsel %vm2301, %v2286, 0
      %v2378 = vsel %vm2301, %v2287, 0
      %v2381 = vsel %vm2301, %v2288, 0
      %v2384 = vsel %vm2301, %v2289, 0
      %v2387 = vsel %vm2301, %v2290, 0
      %v2390 = vsel %vm2301, %v2291, 0
      %v2393 = vsel %vm2301, %v2292, 0
      %v2396 = vsel %vm2301, %v2293, 0
      %v2399 = vsel %vm793, %v2300, 0
      %2401 = vmatpush.msra.mxu0 0.0
      %2402 = vmatpush.msra.mxu0 0.0
      %2403 = vmatpush.msra.mxu0 0.0
      %2404 = vmatpush.msra.mxu0 0.0
      %2405 = vmatpush.msra.mxu0 0.0
      %2406 = vmatpush.msra.mxu0 0.0
      %2407 = vmatpush.msra.mxu0 0.0
      %2408 = vmatpush.msra.mxu0 0.0
      %2409 = vmatpush.msra.mxu0 0.0
      %2410 = vmatpush.msra.mxu0 0.0
      %2411 = vmatpush.msra.mxu0 0.0
      %2412 = vmatpush.msra.mxu0 0.0
      %2413 = vmatpush.msra.mxu0 0.0
      %2414 = vmatpush.msra.mxu0 0.0
      %2415 = vmatpush.msra.mxu0 %v2399
      %2416 = vmatpush.msra.mxu0 %v2299
      %2417 = vmatmul.f32.gmra.mxu0 %v2303
      %v2418 = vpop.f32.mrf.mxu0
      %v2419 = vadd.f32 0.0, %v2418
      %2420 = vmatmul.f32.gmra.mxu0 %v2306
      %v2421 = vpop.f32.mrf.mxu0
      %v2422 = vadd.f32 0.0, %v2421
      %2423 = vmatmul.f32.gmra.mxu0 %v2309
      %v2424 = vpop.f32.mrf.mxu0
      %v2425 = vadd.f32 0.0, %v2424
      %2426 = vmatmul.f32.gmra.mxu0 %v2312
      %v2427 = vpop.f32.mrf.mxu0
      %v2428 = vadd.f32 0.0, %v2427
      %2429 = vmatmul.f32.gmra.mxu0 %v2315
      %v2430 = vpop.f32.mrf.mxu0
      %v2431 = vadd.f32 0.0, %v2430
      %2432 = vmatmul.f32.gmra.mxu0 %v2318
      %v2433 = vpop.f32.mrf.mxu0
      %v2434 = vadd.f32 0.0, %v2433
      %2435 = vmatmul.f32.gmra.mxu0 %v2321
      %v2436 = vpop.f32.mrf.mxu0
      %v2437 = vadd.f32 0.0, %v2436
      %2438 = vmatmul.f32.gmra.mxu0 %v2324
      %v2439 = vpop.f32.mrf.mxu0
      %v2440 = vadd.f32 0.0, %v2439
      %2441 = vmatmul.f32.gmra.mxu0 %v2327
      %v2442 = vpop.f32.mrf.mxu0
      %v2443 = vadd.f32 0.0, %v2442
      %2444 = vmatmul.f32.gmra.mxu0 %v2330
      %v2445 = vpop.f32.mrf.mxu0
      %v2446 = vadd.f32 0.0, %v2445
      %2447 = vmatmul.f32.gmra.mxu0 %v2333
      %v2448 = vpop.f32.mrf.mxu0
      %v2449 = vadd.f32 0.0, %v2448
      %2450 = vmatmul.f32.gmra.mxu0 %v2336
      %v2451 = vpop.f32.mrf.mxu0
      %v2452 = vadd.f32 0.0, %v2451
      %2453 = vmatmul.f32.gmra.mxu0 %v2339
      %v2454 = vpop.f32.mrf.mxu0
      %v2455 = vadd.f32 0.0, %v2454
      %2456 = vmatmul.f32.gmra.mxu0 %v2342
      %v2457 = vpop.f32.mrf.mxu0
      %v2458 = vadd.f32 0.0, %v2457
      %2459 = vmatmul.f32.gmra.mxu0 %v2345
      %v2460 = vpop.f32.mrf.mxu0
      %v2461 = vadd.f32 0.0, %v2460
      %2462 = vmatmul.f32.gmra.mxu0 %v2348
      %v2463 = vpop.f32.mrf.mxu0
      %v2464 = vadd.f32 0.0, %v2463
      %2465 = vmatmul.f32.gmra.mxu0 %v2351
      %v2466 = vpop.f32.mrf.mxu0
      %v2467 = vadd.f32 0.0, %v2466
      %2468 = vmatmul.f32.gmra.mxu0 %v2354
      %v2469 = vpop.f32.mrf.mxu0
      %v2470 = vadd.f32 0.0, %v2469
      %2471 = vmatmul.f32.gmra.mxu0 %v2357
      %v2472 = vpop.f32.mrf.mxu0
      %v2473 = vadd.f32 0.0, %v2472
      %2474 = vmatmul.f32.gmra.mxu0 %v2360
      %v2475 = vpop.f32.mrf.mxu0
      %v2476 = vadd.f32 0.0, %v2475
      %2477 = vmatmul.f32.gmra.mxu0 %v2363
      %v2478 = vpop.f32.mrf.mxu0
      %v2479 = vadd.f32 0.0, %v2478
      %2480 = vmatmul.f32.gmra.mxu0 %v2366
      %v2481 = vpop.f32.mrf.mxu0
      %v2482 = vadd.f32 0.0, %v2481
      %2483 = vmatmul.f32.gmra.mxu0 %v2369
      %v2484 = vpop.f32.mrf.mxu0
      %v2485 = vadd.f32 0.0, %v2484
      %2486 = vmatmul.f32.gmra.mxu0 %v2372
      %v2487 = vpop.f32.mrf.mxu0
      %v2488 = vadd.f32 0.0, %v2487
      %2489 = vmatmul.f32.gmra.mxu0 %v2375
      %v2490 = vpop.f32.mrf.mxu0
      %v2491 = vadd.f32 0.0, %v2490
      %2492 = vmatmul.f32.gmra.mxu0 %v2378
      %v2493 = vpop.f32.mrf.mxu0
      %v2494 = vadd.f32 0.0, %v2493
      %2495 = vmatmul.f32.gmra.mxu0 %v2381
      %v2496 = vpop.f32.mrf.mxu0
      %v2497 = vadd.f32 0.0, %v2496
      %2498 = vmatmul.f32.gmra.mxu0 %v2384
      %v2499 = vpop.f32.mrf.mxu0
      %v2500 = vadd.f32 0.0, %v2499
      %2501 = vmatmul.f32.gmra.mxu0 %v2387
      %v2502 = vpop.f32.mrf.mxu0
      %v2503 = vadd.f32 0.0, %v2502
      %2504 = vmatmul.f32.gmra.mxu0 %v2390
      %v2505 = vpop.f32.mrf.mxu0
      %v2506 = vadd.f32 0.0, %v2505
      %2507 = vmatmul.f32.gmra.mxu0 %v2393
      %v2508 = vpop.f32.mrf.mxu0
      %v2509 = vadd.f32 0.0, %v2508
      %2510 = vmatmul.f32.gmra.mxu0 %v2396
      %v2511 = vpop.f32.mrf.mxu0
      %v2512 = vadd.f32 0.0, %v2511
      %2513 = vdwg.mxu0
      %v2515 = vsel %vm2301, %v2260, 0
      %v2518 = vsel %vm2301, %v2261, 0
      %v2521 = vsel %vm793, %v2297, 0
      %2523 = vmatpush.msra.mxu0 0.0
      %2524 = vmatpush.msra.mxu0 0.0
      %2525 = vmatpush.msra.mxu0 0.0
      %2526 = vmatpush.msra.mxu0 0.0
      %2527 = vmatpush.msra.mxu0 0.0
      %2528 = vmatpush.msra.mxu0 0.0
      %2529 = vmatpush.msra.mxu0 0.0
      %2530 = vmatpush.msra.mxu0 0.0
      %2531 = vmatpush.msra.mxu0 0.0
      %2532 = vmatpush.msra.mxu0 0.0
      %2533 = vmatpush.msra.mxu0 0.0
      %2534 = vmatpush.msra.mxu0 0.0
      %2535 = vmatpush.msra.mxu0 0.0
      %2536 = vmatpush.msra.mxu0 0.0
      %2537 = vmatpush.msra.mxu0 %v2521
      %2538 = vmatpush.msra.mxu0 %v2296
      %2539 = vmatmul.f32.gmra.mxu0 %v2515
      %v2540 = vpop.f32.mrf.mxu0
      %v2541 = vadd.f32 %v2419, %v2540
      %2542 = vmatmul.f32.gmra.mxu0 %v2518
      %v2543 = vpop.f32.mrf.mxu0
      %v2544 = vadd.f32 %v2422, %v2543
      %2545 = vmatmul.f32.gmra.mxu0 %v2303
      %v2546 = vpop.f32.mrf.mxu0
      %v2547 = vadd.f32 %v2425, %v2546
      %2548 = vmatmul.f32.gmra.mxu0 %v2306
      %v2549 = vpop.f32.mrf.mxu0
      %v2550 = vadd.f32 %v2428, %v2549
      %2551 = vmatmul.f32.gmra.mxu0 %v2309
      %v2552 = vpop.f32.mrf.mxu0
      %v2553 = vadd.f32 %v2431, %v2552
      %2554 = vmatmul.f32.gmra.mxu0 %v2312
      %v2555 = vpop.f32.mrf.mxu0
      %v2556 = vadd.f32 %v2434, %v2555
      %2557 = vmatmul.f32.gmra.mxu0 %v2315
      %v2558 = vpop.f32.mrf.mxu0
      %v2559 = vadd.f32 %v2437, %v2558
      %2560 = vmatmul.f32.gmra.mxu0 %v2318
      %v2561 = vpop.f32.mrf.mxu0
      %v2562 = vadd.f32 %v2440, %v2561
      %2563 = vmatmul.f32.gmra.mxu0 %v2321
      %v2564 = vpop.f32.mrf.mxu0
      %v2565 = vadd.f32 %v2443, %v2564
      %2566 = vmatmul.f32.gmra.mxu0 %v2324
      %v2567 = vpop.f32.mrf.mxu0
      %v2568 = vadd.f32 %v2446, %v2567
      %2569 = vmatmul.f32.gmra.mxu0 %v2327
      %v2570 = vpop.f32.mrf.mxu0
      %v2571 = vadd.f32 %v2449, %v2570
      %2572 = vmatmul.f32.gmra.mxu0 %v2330
      %v2573 = vpop.f32.mrf.mxu0
      %v2574 = vadd.f32 %v2452, %v2573
      %2575 = vmatmul.f32.gmra.mxu0 %v2333
      %v2576 = vpop.f32.mrf.mxu0
      %v2577 = vadd.f32 %v2455, %v2576
      %2578 = vmatmul.f32.gmra.mxu0 %v2336
      %v2579 = vpop.f32.mrf.mxu0
      %v2580 = vadd.f32 %v2458, %v2579
      %2581 = vmatmul.f32.gmra.mxu0 %v2339
      %v2582 = vpop.f32.mrf.mxu0
      %v2583 = vadd.f32 %v2461, %v2582
      %2584 = vmatmul.f32.gmra.mxu0 %v2342
      %v2585 = vpop.f32.mrf.mxu0
      %v2586 = vadd.f32 %v2464, %v2585
      %2587 = vmatmul.f32.gmra.mxu0 %v2345
      %v2588 = vpop.f32.mrf.mxu0
      %v2589 = vadd.f32 %v2467, %v2588
      %2590 = vmatmul.f32.gmra.mxu0 %v2348
      %v2591 = vpop.f32.mrf.mxu0
      %v2592 = vadd.f32 %v2470, %v2591
      %2593 = vmatmul.f32.gmra.mxu0 %v2351
      %v2594 = vpop.f32.mrf.mxu0
      %v2595 = vadd.f32 %v2473, %v2594
      %2596 = vmatmul.f32.gmra.mxu0 %v2354
      %v2597 = vpop.f32.mrf.mxu0
      %v2598 = vadd.f32 %v2476, %v2597
      %2599 = vmatmul.f32.gmra.mxu0 %v2357
      %v2600 = vpop.f32.mrf.mxu0
      %v2601 = vadd.f32 %v2479, %v2600
      %2602 = vmatmul.f32.gmra.mxu0 %v2360
      %v2603 = vpop.f32.mrf.mxu0
      %v2604 = vadd.f32 %v2482, %v2603
      %2605 = vmatmul.f32.gmra.mxu0 %v2363
      %v2606 = vpop.f32.mrf.mxu0
      %v2607 = vadd.f32 %v2485, %v2606
      %2608 = vmatmul.f32.gmra.mxu0 %v2366
      %v2609 = vpop.f32.mrf.mxu0
      %v2610 = vadd.f32 %v2488, %v2609
      %2611 = vmatmul.f32.gmra.mxu0 %v2369
      %v2612 = vpop.f32.mrf.mxu0
      %v2613 = vadd.f32 %v2491, %v2612
      %2614 = vmatmul.f32.gmra.mxu0 %v2372
      %v2615 = vpop.f32.mrf.mxu0
      %v2616 = vadd.f32 %v2494, %v2615
      %2617 = vmatmul.f32.gmra.mxu0 %v2375
      %v2618 = vpop.f32.mrf.mxu0
      %v2619 = vadd.f32 %v2497, %v2618
      %2620 = vmatmul.f32.gmra.mxu0 %v2378
      %v2621 = vpop.f32.mrf.mxu0
      %v2622 = vadd.f32 %v2500, %v2621
      %2623 = vmatmul.f32.gmra.mxu0 %v2381
      %v2624 = vpop.f32.mrf.mxu0
      %v2625 = vadd.f32 %v2503, %v2624
      %2626 = vmatmul.f32.gmra.mxu0 %v2384
      %v2627 = vpop.f32.mrf.mxu0
      %v2628 = vadd.f32 %v2506, %v2627
      %2629 = vmatmul.f32.gmra.mxu0 %v2387
      %v2630 = vpop.f32.mrf.mxu0
      %v2631 = vadd.f32 %v2509, %v2630
      %2632 = vmatmul.f32.gmra.mxu0 %v2390
      %v2633 = vpop.f32.mrf.mxu0
      %v2634 = vadd.f32 %v2512, %v2633
      %2635 = vdwg.mxu0
      %s2636 = scalar_lea.vmem %s7, 32
      %v2637 = vld [vmem:[%s2636] sm:$0xff]
      %v2638 = vld [vmem:[%s2636 + $0x8] sm:$0xf]
      %v2640 = vsel %vm2301, %v2294, 0
      %v2643 = vsel %vm2301, %v2295, 0
      %v2646 = vsel %vm793, %v2638, 0
      %2648 = vmatpush.msra.mxu0 0.0
      %2649 = vmatpush.msra.mxu0 0.0
      %2650 = vmatpush.msra.mxu0 0.0
      %2651 = vmatpush.msra.mxu0 0.0
      %2652 = vmatpush.msra.mxu0 0.0
      %2653 = vmatpush.msra.mxu0 0.0
      %2654 = vmatpush.msra.mxu0 0.0
      %2655 = vmatpush.msra.mxu0 0.0
      %2656 = vmatpush.msra.mxu0 0.0
      %2657 = vmatpush.msra.mxu0 0.0
      %2658 = vmatpush.msra.mxu0 0.0
      %2659 = vmatpush.msra.mxu0 0.0
      %2660 = vmatpush.msra.mxu0 0.0
      %2661 = vmatpush.msra.mxu0 0.0
      %2662 = vmatpush.msra.mxu0 %v2646
      %2663 = vmatpush.msra.mxu0 %v2637
      %2664 = vmatmul.f32.gmra.mxu0 %v2309
      %v2665 = vpop.f32.mrf.mxu0
      %v2666 = vadd.f32 0.0, %v2665
      %2667 = vmatmul.f32.gmra.mxu0 %v2312
      %v2668 = vpop.f32.mrf.mxu0
      %v2669 = vadd.f32 0.0, %v2668
      %2670 = vmatmul.f32.gmra.mxu0 %v2315
      %v2671 = vpop.f32.mrf.mxu0
      %v2672 = vadd.f32 0.0, %v2671
      %2673 = vmatmul.f32.gmra.mxu0 %v2318
      %v2674 = vpop.f32.mrf.mxu0
      %v2675 = vadd.f32 0.0, %v2674
      %2676 = vmatmul.f32.gmra.mxu0 %v2321
      %v2677 = vpop.f32.mrf.mxu0
      %v2678 = vadd.f32 0.0, %v2677
      %2679 = vmatmul.f32.gmra.mxu0 %v2324
      %v2680 = vpop.f32.mrf.mxu0
      %v2681 = vadd.f32 0.0, %v2680
      %2682 = vmatmul.f32.gmra.mxu0 %v2327
      %v2683 = vpop.f32.mrf.mxu0
      %v2684 = vadd.f32 0.0, %v2683
      %2685 = vmatmul.f32.gmra.mxu0 %v2330
      %v2686 = vpop.f32.mrf.mxu0
      %v2687 = vadd.f32 0.0, %v2686
      %2688 = vmatmul.f32.gmra.mxu0 %v2333
      %v2689 = vpop.f32.mrf.mxu0
      %v2690 = vadd.f32 0.0, %v2689
      %2691 = vmatmul.f32.gmra.mxu0 %v2336
      %v2692 = vpop.f32.mrf.mxu0
      %v2693 = vadd.f32 0.0, %v2692
      %2694 = vmatmul.f32.gmra.mxu0 %v2339
      %v2695 = vpop.f32.mrf.mxu0
      %v2696 = vadd.f32 0.0, %v2695
      %2697 = vmatmul.f32.gmra.mxu0 %v2342
      %v2698 = vpop.f32.mrf.mxu0
      %v2699 = vadd.f32 0.0, %v2698
      %2700 = vmatmul.f32.gmra.mxu0 %v2345
      %v2701 = vpop.f32.mrf.mxu0
      %v2702 = vadd.f32 0.0, %v2701
      %2703 = vmatmul.f32.gmra.mxu0 %v2348
      %v2704 = vpop.f32.mrf.mxu0
      %v2705 = vadd.f32 0.0, %v2704
      %2706 = vmatmul.f32.gmra.mxu0 %v2351
      %v2707 = vpop.f32.mrf.mxu0
      %v2708 = vadd.f32 0.0, %v2707
      %2709 = vmatmul.f32.gmra.mxu0 %v2354
      %v2710 = vpop.f32.mrf.mxu0
      %v2711 = vadd.f32 0.0, %v2710
      %2712 = vmatmul.f32.gmra.mxu0 %v2357
      %v2713 = vpop.f32.mrf.mxu0
      %v2714 = vadd.f32 0.0, %v2713
      %2715 = vmatmul.f32.gmra.mxu0 %v2360
      %v2716 = vpop.f32.mrf.mxu0
      %v2717 = vadd.f32 0.0, %v2716
      %2718 = vmatmul.f32.gmra.mxu0 %v2363
      %v2719 = vpop.f32.mrf.mxu0
      %v2720 = vadd.f32 0.0, %v2719
      %2721 = vmatmul.f32.gmra.mxu0 %v2366
      %v2722 = vpop.f32.mrf.mxu0
      %v2723 = vadd.f32 0.0, %v2722
      %2724 = vmatmul.f32.gmra.mxu0 %v2369
      %v2725 = vpop.f32.mrf.mxu0
      %v2726 = vadd.f32 0.0, %v2725
      %2727 = vmatmul.f32.gmra.mxu0 %v2372
      %v2728 = vpop.f32.mrf.mxu0
      %v2729 = vadd.f32 0.0, %v2728
      %2730 = vmatmul.f32.gmra.mxu0 %v2375
      %v2731 = vpop.f32.mrf.mxu0
      %v2732 = vadd.f32 0.0, %v2731
      %2733 = vmatmul.f32.gmra.mxu0 %v2378
      %v2734 = vpop.f32.mrf.mxu0
      %v2735 = vadd.f32 0.0, %v2734
      %2736 = vmatmul.f32.gmra.mxu0 %v2381
      %v2737 = vpop.f32.mrf.mxu0
      %v2738 = vadd.f32 0.0, %v2737
      %2739 = vmatmul.f32.gmra.mxu0 %v2384
      %v2740 = vpop.f32.mrf.mxu0
      %v2741 = vadd.f32 0.0, %v2740
      %2742 = vmatmul.f32.gmra.mxu0 %v2387
      %v2743 = vpop.f32.mrf.mxu0
      %v2744 = vadd.f32 0.0, %v2743
      %2745 = vmatmul.f32.gmra.mxu0 %v2390
      %v2746 = vpop.f32.mrf.mxu0
      %v2747 = vadd.f32 0.0, %v2746
      %2748 = vmatmul.f32.gmra.mxu0 %v2393
      %v2749 = vpop.f32.mrf.mxu0
      %v2750 = vadd.f32 0.0, %v2749
      %2751 = vmatmul.f32.gmra.mxu0 %v2396
      %v2752 = vpop.f32.mrf.mxu0
      %v2753 = vadd.f32 0.0, %v2752
      %2754 = vmatmul.f32.gmra.mxu0 %v2640
      %v2755 = vpop.f32.mrf.mxu0
      %v2756 = vadd.f32 0.0, %v2755
      %2757 = vmatmul.f32.gmra.mxu0 %v2643
      %v2758 = vpop.f32.mrf.mxu0
      %v2759 = vadd.f32 0.0, %v2758
      %2760 = vdwg.mxu0
      %v2761 = vadd.f32 %v2541, %v2666
      %v2762 = vadd.f32 %v2544, %v2669
      %v2763 = vadd.f32 %v2547, %v2672
      %v2764 = vadd.f32 %v2550, %v2675
      %v2765 = vadd.f32 %v2553, %v2678
      %v2766 = vadd.f32 %v2556, %v2681
      %v2767 = vadd.f32 %v2559, %v2684
      %v2768 = vadd.f32 %v2562, %v2687
      %v2769 = vadd.f32 %v2565, %v2690
      %v2770 = vadd.f32 %v2568, %v2693
      %v2771 = vadd.f32 %v2571, %v2696
      %v2772 = vadd.f32 %v2574, %v2699
      %v2773 = vadd.f32 %v2577, %v2702
      %v2774 = vadd.f32 %v2580, %v2705
      %v2775 = vadd.f32 %v2583, %v2708
      %v2776 = vadd.f32 %v2586, %v2711
      %v2777 = vadd.f32 %v2589, %v2714
      %v2778 = vadd.f32 %v2592, %v2717
      %v2779 = vadd.f32 %v2595, %v2720
      %v2780 = vadd.f32 %v2598, %v2723
      %v2781 = vadd.f32 %v2601, %v2726
      %v2782 = vadd.f32 %v2604, %v2729
      %v2783 = vadd.f32 %v2607, %v2732
      %v2784 = vadd.f32 %v2610, %v2735
      %v2785 = vadd.f32 %v2613, %v2738
      %v2786 = vadd.f32 %v2616, %v2741
      %v2787 = vadd.f32 %v2619, %v2744
      %v2788 = vadd.f32 %v2622, %v2747
      %v2789 = vadd.f32 %v2625, %v2750
      %v2790 = vadd.f32 %v2628, %v2753
      %v2791 = vadd.f32 %v2631, %v2756
      %v2792 = vadd.f32 %v2634, %v2759
      %v2793 = vld [vmem:[%s8] sm:$0x1]
      %v2795 = vperm.slane %v2793, 0
      %v2797 = vadd.f32 %v2761, %v2795
      %v2798 = vadd.f32 %v2762, %v2795
      %v2799 = vadd.f32 %v2763, %v2795
      %v2800 = vadd.f32 %v2764, %v2795
      %v2801 = vadd.f32 %v2765, %v2795
      %v2802 = vadd.f32 %v2766, %v2795
      %v2803 = vadd.f32 %v2767, %v2795
      %v2804 = vadd.f32 %v2768, %v2795
      %v2805 = vadd.f32 %v2769, %v2795
      %v2806 = vadd.f32 %v2770, %v2795
      %v2807 = vadd.f32 %v2771, %v2795
      %v2808 = vadd.f32 %v2772, %v2795
      %v2809 = vadd.f32 %v2773, %v2795
      %v2810 = vadd.f32 %v2774, %v2795
      %v2811 = vadd.f32 %v2775, %v2795
      %v2812 = vadd.f32 %v2776, %v2795
      %v2813 = vadd.f32 %v2777, %v2795
      %v2814 = vadd.f32 %v2778, %v2795
      %v2815 = vadd.f32 %v2779, %v2795
      %v2816 = vadd.f32 %v2780, %v2795
      %v2817 = vadd.f32 %v2781, %v2795
      %v2818 = vadd.f32 %v2782, %v2795
      %v2819 = vadd.f32 %v2783, %v2795
      %v2820 = vadd.f32 %v2784, %v2795
      %v2821 = vadd.f32 %v2785, %v2795
      %v2822 = vadd.f32 %v2786, %v2795
      %v2823 = vadd.f32 %v2787, %v2795
      %v2824 = vadd.f32 %v2788, %v2795
      %v2825 = vadd.f32 %v2789, %v2795
      %v2826 = vadd.f32 %v2790, %v2795
      %v2827 = vadd.f32 %v2791, %v2795
      %v2828 = vadd.f32 %v2792, %v2795
      %v2829 = vmax.f32 %v2797, 0.0
      %v2830 = vmax.f32 %v2798, 0.0
      %v2831 = vmax.f32 %v2799, 0.0
      %v2832 = vmax.f32 %v2800, 0.0
      %v2833 = vmax.f32 %v2801, 0.0
      %v2834 = vmax.f32 %v2802, 0.0
      %v2835 = vmax.f32 %v2803, 0.0
      %v2836 = vmax.f32 %v2804, 0.0
      %v2837 = vmax.f32 %v2805, 0.0
      %v2838 = vmax.f32 %v2806, 0.0
      %v2839 = vmax.f32 %v2807, 0.0
      %v2840 = vmax.f32 %v2808, 0.0
      %v2841 = vmax.f32 %v2809, 0.0
      %v2842 = vmax.f32 %v2810, 0.0
      %v2843 = vmax.f32 %v2811, 0.0
      %v2844 = vmax.f32 %v2812, 0.0
      %v2845 = vmax.f32 %v2813, 0.0
      %v2846 = vmax.f32 %v2814, 0.0
      %v2847 = vmax.f32 %v2815, 0.0
      %v2848 = vmax.f32 %v2816, 0.0
      %v2849 = vmax.f32 %v2817, 0.0
      %v2850 = vmax.f32 %v2818, 0.0
      %v2851 = vmax.f32 %v2819, 0.0
      %v2852 = vmax.f32 %v2820, 0.0
      %v2853 = vmax.f32 %v2821, 0.0
      %v2854 = vmax.f32 %v2822, 0.0
      %v2855 = vmax.f32 %v2823, 0.0
      %v2856 = vmax.f32 %v2824, 0.0
      %v2857 = vmax.f32 %v2825, 0.0
      %v2858 = vmax.f32 %v2826, 0.0
      %v2859 = vmax.f32 %v2827, 0.0
      %v2860 = vmax.f32 %v2828, 0.0
      %v2861 = vld [vmem:[%s9] sm:$0xf]
      %v2862 = vld [vmem:[%s10] sm:$0x1]
      %v2864 = vperm.slane %v2862, 0
      %v2867 = vsel %vm696, %v2829, 0
      %v2870 = vsel %vm696, %v2830, 0
      %v2873 = vsel %vm696, %v2831, 0
      %v2876 = vsel %vm696, %v2832, 0
      %v2879 = vsel %vm696, %v2833, 0
      %v2882 = vsel %vm696, %v2834, 0
      %v2885 = vsel %vm696, %v2835, 0
      %v2888 = vsel %vm696, %v2836, 0
      %v2891 = vsel %vm696, %v2837, 0
      %v2894 = vsel %vm696, %v2838, 0
      %v2897 = vsel %vm696, %v2839, 0
      %v2900 = vsel %vm696, %v2840, 0
      %v2903 = vsel %vm696, %v2841, 0
      %v2906 = vsel %vm696, %v2842, 0
      %v2909 = vsel %vm696, %v2843, 0
      %v2912 = vsel %vm696, %v2844, 0
      %v2915 = vsel %vm696, %v2845, 0
      %v2918 = vsel %vm696, %v2846, 0
      %v2921 = vsel %vm696, %v2847, 0
      %v2924 = vsel %vm696, %v2848, 0
      %v2927 = vsel %vm696, %v2849, 0
      %v2930 = vsel %vm696, %v2850, 0
      %v2933 = vsel %vm696, %v2851, 0
      %v2936 = vsel %vm696, %v2852, 0
      %v2939 = vsel %vm696, %v2853, 0
      %v2942 = vsel %vm696, %v2854, 0
      %v2945 = vsel %vm696, %v2855, 0
      %v2948 = vsel %vm696, %v2856, 0
      %v2951 = vsel %vm696, %v2857, 0
      %v2954 = vsel %vm696, %v2858, 0
      %v2957 = vsel %vm696, %v2859, 0
      %v2960 = vsel %vm696, %v2860, 0
      %v2963 = vsel %vm793, %v2861, 0
      %2965 = vmatpush.msra.mxu0 0.0
      %2966 = vmatpush.msra.mxu0 0.0
      %2967 = vmatpush.msra.mxu0 0.0
      %2968 = vmatpush.msra.mxu0 0.0
      %2969 = vmatpush.msra.mxu0 0.0
      %2970 = vmatpush.msra.mxu0 0.0
      %2971 = vmatpush.msra.mxu0 0.0
      %2972 = vmatpush.msra.mxu0 0.0
      %2973 = vmatpush.msra.mxu0 0.0
      %2974 = vmatpush.msra.mxu0 0.0
      %2975 = vmatpush.msra.mxu0 0.0
      %2976 = vmatpush.msra.mxu0 0.0
      %2977 = vmatpush.msra.mxu0 0.0
      %2978 = vmatpush.msra.mxu0 0.0
      %2979 = vmatpush.msra.mxu0 0.0
      %2980 = vmatpush.msra.mxu0 %v2963
      %2981 = vmatmul.f32.gmra.mxu0 %v2867
      %v2982 = vpop.f32.mrf.mxu0
      %v2983 = vadd.f32 %v2864, %v2982
      %2984 = vmatmul.f32.gmra.mxu0 %v2870
      %v2985 = vpop.f32.mrf.mxu0
      %v2986 = vadd.f32 %v2864, %v2985
      %2987 = vmatmul.f32.gmra.mxu0 %v2873
      %v2988 = vpop.f32.mrf.mxu0
      %v2989 = vadd.f32 %v2864, %v2988
      %2990 = vmatmul.f32.gmra.mxu0 %v2876
      %v2991 = vpop.f32.mrf.mxu0
      %v2992 = vadd.f32 %v2864, %v2991
      %2993 = vmatmul.f32.gmra.mxu0 %v2879
      %v2994 = vpop.f32.mrf.mxu0
      %v2995 = vadd.f32 %v2864, %v2994
      %2996 = vmatmul.f32.gmra.mxu0 %v2882
      %v2997 = vpop.f32.mrf.mxu0
      %v2998 = vadd.f32 %v2864, %v2997
      %2999 = vmatmul.f32.gmra.mxu0 %v2885
      %v3000 = vpop.f32.mrf.mxu0
      %v3001 = vadd.f32 %v2864, %v3000
      %3002 = vmatmul.f32.gmra.mxu0 %v2888
      %v3003 = vpop.f32.mrf.mxu0
      %v3004 = vadd.f32 %v2864, %v3003
      %3005 = vmatmul.f32.gmra.mxu0 %v2891
      %v3006 = vpop.f32.mrf.mxu0
      %v3007 = vadd.f32 %v2864, %v3006
      %3008 = vmatmul.f32.gmra.mxu0 %v2894
      %v3009 = vpop.f32.mrf.mxu0
      %v3010 = vadd.f32 %v2864, %v3009
      %3011 = vmatmul.f32.gmra.mxu0 %v2897
      %v3012 = vpop.f32.mrf.mxu0
      %v3013 = vadd.f32 %v2864, %v3012
      %3014 = vmatmul.f32.gmra.mxu0 %v2900
      %v3015 = vpop.f32.mrf.mxu0
      %v3016 = vadd.f32 %v2864, %v3015
      %3017 = vmatmul.f32.gmra.mxu0 %v2903
      %v3018 = vpop.f32.mrf.mxu0
      %v3019 = vadd.f32 %v2864, %v3018
      %3020 = vmatmul.f32.gmra.mxu0 %v2906
      %v3021 = vpop.f32.mrf.mxu0
      %v3022 = vadd.f32 %v2864, %v3021
      %3023 = vmatmul.f32.gmra.mxu0 %v2909
      %v3024 = vpop.f32.mrf.mxu0
      %v3025 = vadd.f32 %v2864, %v3024
      %3026 = vmatmul.f32.gmra.mxu0 %v2912
      %v3027 = vpop.f32.mrf.mxu0
      %v3028 = vadd.f32 %v2864, %v3027
      %3029 = vmatmul.f32.gmra.mxu0 %v2915
      %v3030 = vpop.f32.mrf.mxu0
      %v3031 = vadd.f32 %v2864, %v3030
      %3032 = vmatmul.f32.gmra.mxu0 %v2918
      %v3033 = vpop.f32.mrf.mxu0
      %v3034 = vadd.f32 %v2864, %v3033
      %3035 = vmatmul.f32.gmra.mxu0 %v2921
      %v3036 = vpop.f32.mrf.mxu0
      %v3037 = vadd.f32 %v2864, %v3036
      %3038 = vmatmul.f32.gmra.mxu0 %v2924
      %v3039 = vpop.f32.mrf.mxu0
      %v3040 = vadd.f32 %v2864, %v3039
      %3041 = vmatmul.f32.gmra.mxu0 %v2927
      %v3042 = vpop.f32.mrf.mxu0
      %v3043 = vadd.f32 %v2864, %v3042
      %3044 = vmatmul.f32.gmra.mxu0 %v2930
      %v3045 = vpop.f32.mrf.mxu0
      %v3046 = vadd.f32 %v2864, %v3045
      %3047 = vmatmul.f32.gmra.mxu0 %v2933
      %v3048 = vpop.f32.mrf.mxu0
      %v3049 = vadd.f32 %v2864, %v3048
      %3050 = vmatmul.f32.gmra.mxu0 %v2936
      %v3051 = vpop.f32.mrf.mxu0
      %v3052 = vadd.f32 %v2864, %v3051
      %3053 = vmatmul.f32.gmra.mxu0 %v2939
      %v3054 = vpop.f32.mrf.mxu0
      %v3055 = vadd.f32 %v2864, %v3054
      %3056 = vmatmul.f32.gmra.mxu0 %v2942
      %v3057 = vpop.f32.mrf.mxu0
      %v3058 = vadd.f32 %v2864, %v3057
      %3059 = vmatmul.f32.gmra.mxu0 %v2945
      %v3060 = vpop.f32.mrf.mxu0
      %v3061 = vadd.f32 %v2864, %v3060
      %3062 = vmatmul.f32.gmra.mxu0 %v2948
      %v3063 = vpop.f32.mrf.mxu0
      %v3064 = vadd.f32 %v2864, %v3063
      %3065 = vmatmul.f32.gmra.mxu0 %v2951
      %v3066 = vpop.f32.mrf.mxu0
      %v3067 = vadd.f32 %v2864, %v3066
      %3068 = vmatmul.f32.gmra.mxu0 %v2954
      %v3069 = vpop.f32.mrf.mxu0
      %v3070 = vadd.f32 %v2864, %v3069
      %3071 = vmatmul.f32.gmra.mxu0 %v2957
      %v3072 = vpop.f32.mrf.mxu0
      %v3073 = vadd.f32 %v2864, %v3072
      %3074 = vmatmul.f32.gmra.mxu0 %v2960
      %v3075 = vpop.f32.mrf.mxu0
      %v3076 = vadd.f32 %v2864, %v3075
      %3077 = vdwg.mxu0
      %3078 = vst.msk [vmem:[%s553] sm:$0xff] %vm2259, %v2983
      %3079 = vst.msk [vmem:[%s553 + $0x8] sm:$0xff] %vm2259, %v2986
      %3080 = vst.msk [vmem:[%s553 + $0x10] sm:$0xff] %vm2259, %v2989
      %3081 = vst.msk [vmem:[%s553 + $0x18] sm:$0xff] %vm2259, %v2992
      %3082 = vst.msk [vmem:[%s553 + $0x20] sm:$0xff] %vm2259, %v2995
      %3083 = vst.msk [vmem:[%s553 + $0x28] sm:$0xff] %vm2259, %v2998
      %3084 = vst.msk [vmem:[%s553 + $0x30] sm:$0xff] %vm2259, %v3001
      %3085 = vst.msk [vmem:[%s553 + $0x38] sm:$0xff] %vm2259, %v3004
      %3086 = vst.msk [vmem:[%s553 + $0x40] sm:$0xff] %vm2259, %v3007
      %3087 = vst.msk [vmem:[%s553 + $0x48] sm:$0xff] %vm2259, %v3010
      %3088 = vst.msk [vmem:[%s553 + $0x50] sm:$0xff] %vm2259, %v3013
      %3089 = vst.msk [vmem:[%s553 + $0x58] sm:$0xff] %vm2259, %v3016
      %3090 = vst.msk [vmem:[%s553 + $0x60] sm:$0xff] %vm2259, %v3019
      %3091 = vst.msk [vmem:[%s553 + $0x68] sm:$0xff] %vm2259, %v3022
      %3092 = vst.msk [vmem:[%s553 + $0x70] sm:$0xff] %vm2259, %v3025
      %3093 = vst.msk [vmem:[%s553 + $0x78] sm:$0xff] %vm2259, %v3028
      %3094 = vst.msk [vmem:[%s553 + $0x80] sm:$0xff] %vm2259, %v3031
      %3095 = vst.msk [vmem:[%s553 + $0x88] sm:$0xff] %vm2259, %v3034
      %3096 = vst.msk [vmem:[%s553 + $0x90] sm:$0xff] %vm2259, %v3037
      %3097 = vst.msk [vmem:[%s553 + $0x98] sm:$0xff] %vm2259, %v3040
      %3098 = vst.msk [vmem:[%s553 + $0xa0] sm:$0xff] %vm2259, %v3043
      %3099 = vst.msk [vmem:[%s553 + $0xa8] sm:$0xff] %vm2259, %v3046
      %3100 = vst.msk [vmem:[%s553 + $0xb0] sm:$0xff] %vm2259, %v3049
      %3101 = vst.msk [vmem:[%s553 + $0xb8] sm:$0xff] %vm2259, %v3052
      %3102 = vst.msk [vmem:[%s553 + $0xc0] sm:$0xff] %vm2259, %v3055
      %3103 = vst.msk [vmem:[%s553 + $0xc8] sm:$0xff] %vm2259, %v3058
      %3104 = vst.msk [vmem:[%s553 + $0xd0] sm:$0xff] %vm2259, %v3061
      %3105 = vst.msk [vmem:[%s553 + $0xd8] sm:$0xff] %vm2259, %v3064
      %3106 = vst.msk [vmem:[%s553 + $0xe0] sm:$0xff] %vm2259, %v3067
      %3107 = vst.msk [vmem:[%s553 + $0xe8] sm:$0xff] %vm2259, %v3070
      %3108 = vst.msk [vmem:[%s553 + $0xf0] sm:$0xff] %vm2259, %v3073
      %3109 = vst.msk [vmem:[%s553 + $0xf8] sm:$0xff] %vm2259, %v3076
      %s3110 = smul.u32 16, %s27
      %p3111 = scmp.lt.s32.totalorder %s26, 1
      %s3112 = scalar_select %p3111, %s26, 1
      %p3113 = scmp.lt.s32.totalorder %s3110, 15
      %s3114 = scalar_select %p3113, %s3110, 15
      %s3115 = smul.addr %s3114, 2
      %s3116 = smul.addr %s3112, 32
      %s3117 = sadd.s32 %s3115, %s3116
      %s3118 = smul.addr %s3117, 8
      %s3119 = scalar_lea.vmem %s11, %s3118
      // Predicated region
      $region65: #{conv_block.1} parent=63 // pred_check
        %p3120 = pneg %p322
      $region66: #{conv_block.1} parent=63 // pred_check_branch
        %3122 = sbr.rel (%p3120) target = $region68
      $region67: #{conv_block.1} parent=63 // pred_region
        %s3123 = smul.u32 16, %s27
      $region68: #{conv_block.1} parent=63 // pred_fallthru
        _
    $region64: #{conv_block.1} parent=5 // pred_fallthru
      _
    %p3124 = scmp.le.s32.totalorder 2, %s17
    // Predicated region
    $region69: #{conv_block.1} parent=5 // pred_check
      %p3125 = pneg %p3124
    $region70: #{conv_block.1} parent=5 // pred_check_branch
      %3127 = sbr.rel (%p3125) target = $region72
    $region71: #{conv_block.1} parent=5 // pred_region
      %s3128 = ssub.s32 %s17, 2
      // Predicated region
      $region73: #{conv_block.1} parent=71 // pred_check
        %p3129 = pneg %p328
      $region74: #{conv_block.1} parent=71 // pred_check_branch
        %3131 = sbr.rel (%p3129) target = $region76
      $region75: #{conv_block.1} parent=71 // pred_region
        %s3132 = smul.u32 16, %s29
        %p3133 = scmp.lt.s32.totalorder %s28, 1
        %s3134 = scalar_select %p3133, %s28, 1
        %p3135 = scmp.lt.s32.totalorder %s3132, 15
        %s3136 = scalar_select %p3135, %s3132, 15
        %s3137 = smul.addr %s3136, 2
        %s3138 = smul.addr %s3134, 32
        %s3139 = sadd.s32 %s3137, %s3138
        %s3140 = smul.addr %s3139, 8
        %s3141 = scalar_lea.vmem %s11, %s3140
      $region76: #{conv_block.1} parent=71 // pred_fallthru
        _
    $region72: #{conv_block.1} parent=5 // pred_fallthru
      _
  $region6: #{conv_block.1} parent=0 // loop_footer
    %s21 = sadd.s32 1, %s17
  $region7: #{conv_block.1} parent=0 // loop_footer_branch
    %16 = sbr.rel target = $region3
  $region8: #{conv_block.1} parent=0 // loop_exit
    _

</llo_original>
